<compile_context>
chip_gen: v7x
topology: tpu7x:2x2x1
jax: 0.10.0
libtpu: 0.0.40
codegen_flags: <defaults>
</compile_context>

<pallas_src>
import functools

import jax
import jax.numpy as jnp
from jax.experimental import pallas as pl
from jax.experimental.pallas import tpu as pltpu

# ----------------------------- config (small, consistent with FViT) -----------
B = 2             # batch
NUM_PATCHES = 8   # p  (multiple of 8 -> aligned patch blocks)
PATCH = 4         # patch_size
CHANNELS = 3
POS_DIM = 4
EMB = 32          # emb_dim
DEPTH = 2
HEADS = 4
DIM_HEAD = 8
MLP = 64          # mlp_dim
CODE = 16         # code_dim
PATCH_DIM = CHANNELS * PATCH * PATCH        # 48
INNER = HEADS * DIM_HEAD                    # 32
N_TOK = NUM_PATCHES + 1                     # 9 real tokens (patches + cls)
N_PAD = 16                                  # sublane-aligned per-batch segment
CLS_PAD = N_PAD - NUM_PATCHES               # 8-row [cls ; zeros] block
SCALE = DIM_HEAD ** (-0.5)

assert NUM_PATCHES % 8 == 0 and N_PAD % 8 == 0 and CLS_PAD >= 1 and N_PAD >= N_TOK


# ----------------------------- in-kernel helpers ------------------------------
def _layernorm(x, g, b, eps=1e-5):
    mu = jnp.mean(x, axis=-1, keepdims=True)
    var = jnp.mean((x - mu) ** 2, axis=-1, keepdims=True)
    return (x - mu) * jax.lax.rsqrt(var + eps) * g + b


def _erf(x):
    # Abramowitz & Stegun 7.1.26 rational approximation (|err| < 1.5e-7);
    # close to torch.erf at f32 tolerance; uses exp + reciprocal (EUP-friendly).
    a1, a2, a3, a4, a5 = 0.254829592, -0.284496736, 1.421413741, -1.453152027, 1.061405429
    pc = 0.3275911
    sgn = jnp.where(x >= 0.0, 1.0, -1.0)
    ax = jnp.abs(x)
    t = pl.reciprocal(1.0 + pc * ax, approx=False)
    poly = ((((a5 * t + a4) * t + a3) * t + a2) * t + a1) * t
    return sgn * (1.0 - poly * jnp.exp(-ax * ax))


def _gelu(x):
    # exact (erf-based) GELU, matching nn.GELU(approximate='none')
    return 0.5 * x * (1.0 + _erf(x * 0.7071067811865476))


# ----------------------------- the fused kernel --------------------------------
def _fvit_kernel(patch_ref, pos_ref, cls_ref,
                 pw_ref, pb_ref, ew_ref, eb_ref,
                 g1_ref, b1_ref, wqkv_ref, wo_ref, bo_ref,
                 g2_ref, b2_ref, w1_ref, bf1_ref, w2_ref, bf2_ref,
                 hg_ref, hb_ref, hw_ref, hbw_ref, psel_ref,
                 o_ref, *, batch):
    f32 = jnp.float32

    # additive key mask (built ONCE): valid keys are segment-local rows 0..N_TOK-1
    lane = jax.lax.broadcasted_iota(jnp.int32, (1, N_PAD), 1)
    key_bias = jnp.where(lane < N_TOK, jnp.float32(0.0), jnp.float32(-1e30))

    # ---- patch + positional embeddings, batch folded into rows: (B*P, EMB) ----
    pe = jnp.dot(patch_ref[...], pw_ref[...], preferred_element_type=f32) + pb_ref[...]
    po = jnp.dot(pos_ref[...], ew_ref[...], preferred_element_type=f32) + eb_ref[...]
    emb = pe + po                              # (B*P, EMB)
    cls_blk = cls_ref[...]                     # (CLS_PAD, EMB): row0 = cls+cls_pos, rest 0

    # ---- token slab kept as a pure register value; per-batch 16-row aligned
    #      segments: rows 0..P-1 = patches, row P = cls, rows P+1..15 = zero pad.
    pieces = []
    for b in range(batch):
        pieces.append(emb[b * NUM_PATCHES:(b + 1) * NUM_PATCHES, :])   # (8, EMB) aligned
        pieces.append(cls_blk)                                          # (8, EMB) aligned
    x = jnp.concatenate(pieces, axis=0)        # (B*N_PAD, EMB)
    # nn.Dropout(emb_dropout) / attention & MLP dropouts: identity (eval-mode inference).

    # ---- transformer layers (unrolled, weights VMEM-resident) ----
    for l in range(DEPTH):
        # PreNorm + multi-head self-attention + residual (whole slab, registers only)
        hn = _layernorm(x, g1_ref[l], b1_ref[l])
        # attention scale is pre-folded into the q columns of wqkv (pack_params)
        qkv = jnp.dot(hn, wqkv_ref[l], preferred_element_type=f32)   # (B*N_PAD, 3*INNER)

        # per-(batch, head) score blocks, stacked -> ONE masked softmax
        s_blocks = []
        for b in range(batch):
            r0 = b * N_PAD
            for h in range(HEADS):
                c0 = h * DIM_HEAD
                qbh = qkv[r0:r0 + N_PAD, c0:c0 + DIM_HEAD]
                kbh = qkv[r0:r0 + N_PAD, INNER + c0:INNER + c0 + DIM_HEAD]
                s_blocks.append(jax.lax.dot_general(
                    qbh, kbh, (((1,), (1,)), ((), ())),
                    preferred_element_type=f32))                      # (N_PAD, N_PAD)
        s = jnp.concatenate(s_blocks, axis=0) + key_bias              # (B*H*N_PAD, N_PAD)
        s = s - jnp.max(s, axis=-1, keepdims=True)
        p = jnp.exp(s)
        p = p * pl.reciprocal(jnp.sum(p, axis=-1, keepdims=True), approx=True)

        # attention-weighted values; lane-concat heads + row-concat batches,
        # then ONE output-projection matmul and ONE whole-slab residual add.
        o_rows = []
        for b in range(batch):
            r0 = b * N_PAD
            heads_o = []
            for h in range(HEADS):
                blk = (b * HEADS + h) * N_PAD
                vbh = qkv[r0:r0 + N_PAD,
                          2 * INNER + h * DIM_HEAD:2 * INNER + (h + 1) * DIM_HEAD]
                heads_o.append(jnp.dot(p[blk:blk + N_PAD, :], vbh,
                                       preferred_element_type=f32))   # (N_PAD, dh)
            o_rows.append(jnp.concatenate(heads_o, axis=1))            # (N_PAD, INNER)
        o_cat = jnp.concatenate(o_rows, axis=0)                        # (B*N_PAD, INNER)
        x = x + jnp.dot(o_cat, wo_ref[l], preferred_element_type=f32) + bo_ref[l]

        # PreNorm + MLP (exact erf GELU) + residual
        hn2 = _layernorm(x, g2_ref[l], b2_ref[l])
        f = jnp.dot(hn2, w1_ref[l], preferred_element_type=f32) + bf1_ref[l]
        f = _gelu(f)
        x = x + jnp.dot(f, w2_ref[l], preferred_element_type=f32) + bf2_ref[l]

    # ---- head for all batches at once: masked mean-pool (over the 9 real tokens,
    #      incl. cls) as ONE selector matmul, one LayerNorm, one Linear, one store.
    pooled = jnp.dot(psel_ref[...], x, preferred_element_type=f32)     # (B, EMB)
    hn = _layernorm(pooled, hg_ref[...], hb_ref[...])
    o_ref[...] = jnp.dot(hn, hw_ref[...], preferred_element_type=f32) + hbw_ref[...]


# ----------------------------- wrapper ------------------------------------------
def fvit_forward(packed, patch_img, pos_data):
    Bx, P, Hp, Wp, C = patch_img.shape
    patch2d = patch_img.reshape(Bx * P, Hp * Wp * C)   # Rearrange('b p h w c -> b p (h w c)')
    pos2d = pos_data.reshape(Bx * P, pos_data.shape[-1])

    # masked mean-pool selector: psel[b, b*N_PAD + t] = 1/N_TOK for t < N_TOK, else 0
    col = jnp.arange(Bx * N_PAD)[None, :]
    row = jnp.arange(Bx)[:, None]
    psel = jnp.where((col >= row * N_PAD) & (col < row * N_PAD + N_TOK),
                     jnp.float32(1.0 / N_TOK), jnp.float32(0.0))

    args = (patch2d, pos2d, packed['cls'],
            packed['patch_w'], packed['patch_b'], packed['pos_w'], packed['pos_b'],
            packed['g1'], packed['b1'], packed['wqkv'], packed['wo'], packed['bo'],
            packed['g2'], packed['b2'], packed['w1'], packed['bf1'],
            packed['w2'], packed['bf2'],
            packed['hg'], packed['hb'], packed['hw'], packed['hbw'], psel)

    vmem_spec = pl.BlockSpec(memory_space=pltpu.MemorySpace.VMEM)
    kern = functools.partial(_fvit_kernel, batch=Bx)
    return pl.pallas_call(
        kern,
        out_shape=jax.ShapeDtypeStruct((Bx, CODE), jnp.float32),
        in_specs=[vmem_spec for _ in args],
        out_specs=vmem_spec,
        cost_estimate=pl.CostEstimate(flops=1_500_000, transcendentals=10_000,
                                      bytes_accessed=200_000),
    )(*args)


# ----------------------------- parameters --------------------------------------
def init_params(key):
    keys = iter(jax.random.split(key, 64))

    def w(shape, scale):
        return (scale * jax.random.normal(next(keys), shape)).astype(jnp.float32)

    params = {
        'patch_w': w((PATCH_DIM, EMB), PATCH_DIM ** -0.5),
        'patch_b': w((1, EMB), 0.02),
        'pos_w': w((POS_DIM, EMB), POS_DIM ** -0.5),
        'pos_b': w((1, EMB), 0.02),
        'cls_token': w((1, 1, EMB), 1.0),       # ~ torch.randn
        'cls_pos_token': w((1, 1, EMB), 1.0),   # ~ torch.randn
        'layers': [],
        'head': {
            'g': jnp.ones((1, EMB), jnp.float32),
            'b': jnp.zeros((1, EMB), jnp.float32),
            'w': w((EMB, CODE), EMB ** -0.5),
            'bw': w((1, CODE), 0.02),
        },
    }
    for _ in range(DEPTH):
        params['layers'].append({
            'g1': jnp.ones((1, EMB), jnp.float32),
            'b1': jnp.zeros((1, EMB), jnp.float32),
            'wqkv': w((EMB, 3 * INNER), EMB ** -0.5),   # to_qkv (bias=False)
            'wo': w((INNER, EMB), INNER ** -0.5),
            'bo': w((1, EMB), 0.02),
            'g2': jnp.ones((1, EMB), jnp.float32),
            'b2': jnp.zeros((1, EMB), jnp.float32),
            'w1': w((EMB, MLP), EMB ** -0.5),
            'bf1': w((1, MLP), 0.02),
            'w2': w((MLP, EMB), MLP ** -0.5),
            'bf2': w((1, EMB), 0.02),
        })
    return params


def pack_params(params):
    """Stack per-layer params over DEPTH, fold attention scale into q columns of
    wqkv, and pre-build the sublane-aligned [cls_token+cls_pos_token ; zeros]
    block used to pad each batch segment to N_PAD rows."""
    layers = params['layers']

    def stack(name):
        return jnp.stack([ly[name] for ly in layers], axis=0)

    scale_cols = jnp.concatenate(
        [jnp.full((1, INNER), SCALE, jnp.float32),
         jnp.ones((1, 2 * INNER), jnp.float32)], axis=1)           # (1, 3*INNER)

    cls_row = (params['cls_token'] + params['cls_pos_token']).reshape(1, EMB)
    cls_blk = jnp.concatenate(
        [cls_row, jnp.zeros((CLS_PAD - 1, EMB), jnp.float32)], axis=0)  # (CLS_PAD, EMB)

    return {
        'cls': cls_blk,
        'patch_w': params['patch_w'], 'patch_b': params['patch_b'],
        'pos_w': params['pos_w'], 'pos_b': params['pos_b'],
        'g1': stack('g1'), 'b1': stack('b1'),
        'wqkv': stack('wqkv') * scale_cols,     # (DEPTH, EMB, 3*INNER), q pre-scaled
        'wo': stack('wo'), 'bo': stack('bo'),
        'g2': stack('g2'), 'b2': stack('b2'),
        'w1': stack('w1'), 'bf1': stack('bf1'),
        'w2': stack('w2'), 'bf2': stack('bf2'),
        'hg': params['head']['g'], 'hb': params['head']['b'],
        'hw': params['head']['w'], 'hbw': params['head']['bw'],
    }


# ----------------------------- main ----------------------------------------------
if __name__ == "__main__":
    key = jax.random.PRNGKey(0)
    kp, kimg, kpos = jax.random.split(key, 3)
    params = init_params(kp)
    packed = pack_params(params)

    patch_img = jax.random.normal(kimg, (B, NUM_PATCHES, PATCH, PATCH, CHANNELS),
                                  dtype=jnp.float32)
    pos_data = jax.random.normal(kpos, (B, NUM_PATCHES, POS_DIM), dtype=jnp.float32)

    out = jax.jit(fvit_forward)(packed, patch_img, pos_data)
    out = jax.block_until_ready(out)
    assert out.shape == (B, CODE) and out.dtype == jnp.float32
    assert bool(jnp.all(jnp.isfinite(out)))
    print("KERNEL_OK")
</pallas_src>

<mosaic_0001>
module attributes {stable_mosaic.version = 11 : i64} {
  func.func @_fvit_kernel(%arg0: memref<16x48xf32, #tpu.memory_space<vmem>>, %arg1: memref<16x4xf32, #tpu.memory_space<vmem>>, %arg2: memref<8x32xf32, #tpu.memory_space<vmem>>, %arg3: memref<48x32xf32, #tpu.memory_space<vmem>>, %arg4: memref<1x32xf32, #tpu.memory_space<vmem>>, %arg5: memref<4x32xf32, #tpu.memory_space<vmem>>, %arg6: memref<1x32xf32, #tpu.memory_space<vmem>>, %arg7: memref<2x1x32xf32, #tpu.memory_space<vmem>>, %arg8: memref<2x1x32xf32, #tpu.memory_space<vmem>>, %arg9: memref<2x32x96xf32, #tpu.memory_space<vmem>>, %arg10: memref<2x32x32xf32, #tpu.memory_space<vmem>>, %arg11: memref<2x1x32xf32, #tpu.memory_space<vmem>>, %arg12: memref<2x1x32xf32, #tpu.memory_space<vmem>>, %arg13: memref<2x1x32xf32, #tpu.memory_space<vmem>>, %arg14: memref<2x32x64xf32, #tpu.memory_space<vmem>>, %arg15: memref<2x1x64xf32, #tpu.memory_space<vmem>>, %arg16: memref<2x64x32xf32, #tpu.memory_space<vmem>>, %arg17: memref<2x1x32xf32, #tpu.memory_space<vmem>>, %arg18: memref<1x32xf32, #tpu.memory_space<vmem>>, %arg19: memref<1x32xf32, #tpu.memory_space<vmem>>, %arg20: memref<32x16xf32, #tpu.memory_space<vmem>>, %arg21: memref<1x16xf32, #tpu.memory_space<vmem>>, %arg22: memref<2x32xf32, #tpu.memory_space<vmem>>, %arg23: memref<2x16xf32, #tpu.memory_space<vmem>>) attributes {dimension_semantics = [], scalar_prefetch = 0 : i64, scratch_operands = 0 : i64, tpu.core_type = #tpu.core_type<tc>} {
    %0 = tpu.iota {dimensions = array<i32: 1>} : vector<1x16xi32>
    %c9_i32 = arith.constant 9 : i32
    %1 = vector.broadcast %c9_i32 : i32 to vector<1x16xi32>
    %2 = arith.cmpi slt, %0, %1 : vector<1x16xi32>
    %cst = arith.constant 0.000000e+00 : f32
    %cst_0 = arith.constant -1.000000e+30 : f32
    %3 = vector.broadcast %cst : f32 to vector<1x16xf32>
    %4 = vector.broadcast %cst_0 : f32 to vector<1x16xf32>
    %5 = arith.select %2, %3, %4 : vector<1x16xi1>, vector<1x16xf32>
    %c0 = arith.constant 0 : index
    %c0_1 = arith.constant 0 : index
    %6 = vector.load %arg0[%c0, %c0_1] : memref<16x48xf32, #tpu.memory_space<vmem>>, vector<16x48xf32>
    %c0_2 = arith.constant 0 : index
    %c0_3 = arith.constant 0 : index
    %7 = vector.load %arg3[%c0_2, %c0_3] : memref<48x32xf32, #tpu.memory_space<vmem>>, vector<48x32xf32>
    %cst_4 = arith.constant dense<0.000000e+00> : vector<16x32xf32>
    %8 = tpu.matmul %6, %7, %cst_4 {dimension_numbers = #tpu.dot_dimension_numbers<[1], [0], [0], [1], [0, 0, 1, 1], [], []>} : vector<16x48xf32>, vector<48x32xf32>, vector<16x32xf32> -> vector<16x32xf32>
    %c0_5 = arith.constant 0 : index
    %c0_6 = arith.constant 0 : index
    %9 = vector.load %arg4[%c0_5, %c0_6] : memref<1x32xf32, #tpu.memory_space<vmem>>, vector<1x32xf32>
    %10 = vector.broadcast %9 : vector<1x32xf32> to vector<16x32xf32>
    %11 = arith.addf %8, %10 : vector<16x32xf32>
    %c0_7 = arith.constant 0 : index
    %c0_8 = arith.constant 0 : index
    %12 = vector.load %arg1[%c0_7, %c0_8] : memref<16x4xf32, #tpu.memory_space<vmem>>, vector<16x4xf32>
    %c0_9 = arith.constant 0 : index
    %c0_10 = arith.constant 0 : index
    %13 = vector.load %arg5[%c0_9, %c0_10] : memref<4x32xf32, #tpu.memory_space<vmem>>, vector<4x32xf32>
    %cst_11 = arith.constant dense<0.000000e+00> : vector<16x32xf32>
    %14 = tpu.matmul %12, %13, %cst_11 {dimension_numbers = #tpu.dot_dimension_numbers<[1], [0], [0], [1], [0, 0, 1, 1], [], []>} : vector<16x4xf32>, vector<4x32xf32>, vector<16x32xf32> -> vector<16x32xf32>
    %c0_12 = arith.constant 0 : index
    %c0_13 = arith.constant 0 : index
    %15 = vector.load %arg6[%c0_12, %c0_13] : memref<1x32xf32, #tpu.memory_space<vmem>>, vector<1x32xf32>
    %16 = vector.broadcast %15 : vector<1x32xf32> to vector<16x32xf32>
    %17 = arith.addf %14, %16 : vector<16x32xf32>
    %18 = arith.addf %11, %17 : vector<16x32xf32>
    %c0_14 = arith.constant 0 : index
    %c0_15 = arith.constant 0 : index
    %19 = vector.load %arg2[%c0_14, %c0_15] : memref<8x32xf32, #tpu.memory_space<vmem>>, vector<8x32xf32>
    %20 = vector.extract_strided_slice %18 {offsets = [0, 0], sizes = [8, 32], strides = [1, 1]} : vector<16x32xf32> to vector<8x32xf32>
    %21 = vector.extract_strided_slice %18 {offsets = [8, 0], sizes = [8, 32], strides = [1, 1]} : vector<16x32xf32> to vector<8x32xf32>
    %22 = tpu.concatenate %20, %19, %21, %19 in 0 : vector<8x32xf32>, vector<8x32xf32>, vector<8x32xf32>, vector<8x32xf32> -> vector<32x32xf32>
    %c0_16 = arith.constant 0 : index
    %c0_17 = arith.constant 0 : index
    %c0_18 = arith.constant 0 : index
    %23 = vector.load %arg7[%c0_16, %c0_17, %c0_18] : memref<2x1x32xf32, #tpu.memory_space<vmem>>, vector<1x1x32xf32>
    %24 = vector.shape_cast %23 : vector<1x1x32xf32> to vector<1x32xf32>
    %c0_19 = arith.constant 0 : index
    %c0_20 = arith.constant 0 : index
    %c0_21 = arith.constant 0 : index
    %25 = vector.load %arg8[%c0_19, %c0_20, %c0_21] : memref<2x1x32xf32, #tpu.memory_space<vmem>>, vector<1x1x32xf32>
    %26 = vector.shape_cast %25 : vector<1x1x32xf32> to vector<1x32xf32>
    %cst_22 = arith.constant dense<0.000000e+00> : vector<32xf32>
    %27 = vector.multi_reduction <add>, %22, %cst_22 [1] : vector<32x32xf32> to vector<32xf32>
    %28 = vector.shape_cast %27 : vector<32xf32> to vector<32x1xf32>
    %cst_23 = arith.constant 3.200000e+01 : f32
    %29 = vector.broadcast %cst_23 : f32 to vector<32x1xf32>
    %30 = arith.divf %28, %29 : vector<32x1xf32>
    %31 = vector.broadcast %30 : vector<32x1xf32> to vector<32x32xf32>
    %32 = arith.subf %22, %31 : vector<32x32xf32>
    %33 = arith.mulf %32, %32 : vector<32x32xf32>
    %cst_24 = arith.constant dense<0.000000e+00> : vector<32xf32>
    %34 = vector.multi_reduction <add>, %33, %cst_24 [1] : vector<32x32xf32> to vector<32xf32>
    %35 = vector.shape_cast %34 : vector<32xf32> to vector<32x1xf32>
    %cst_25 = arith.constant 3.200000e+01 : f32
    %36 = vector.broadcast %cst_25 : f32 to vector<32x1xf32>
    %37 = arith.divf %35, %36 : vector<32x1xf32>
    %38 = vector.broadcast %30 : vector<32x1xf32> to vector<32x32xf32>
    %39 = arith.subf %22, %38 : vector<32x32xf32>
    %cst_26 = arith.constant 9.99999974E-6 : f32
    %40 = vector.broadcast %cst_26 : f32 to vector<32x1xf32>
    %41 = arith.addf %37, %40 : vector<32x1xf32>
    %42 = math.rsqrt %41 : vector<32x1xf32>
    %43 = vector.broadcast %42 : vector<32x1xf32> to vector<32x32xf32>
    %44 = arith.mulf %39, %43 : vector<32x32xf32>
    %45 = vector.broadcast %24 : vector<1x32xf32> to vector<32x32xf32>
    %46 = arith.mulf %44, %45 : vector<32x32xf32>
    %47 = vector.broadcast %26 : vector<1x32xf32> to vector<32x32xf32>
    %48 = arith.addf %46, %47 : vector<32x32xf32>
    %c0_27 = arith.constant 0 : index
    %c0_28 = arith.constant 0 : index
    %c0_29 = arith.constant 0 : index
    %49 = vector.load %arg9[%c0_27, %c0_28, %c0_29] : memref<2x32x96xf32, #tpu.memory_space<vmem>>, vector<1x32x96xf32>
    %50 = vector.shape_cast %49 : vector<1x32x96xf32> to vector<32x96xf32>
    %cst_30 = arith.constant dense<0.000000e+00> : vector<32x96xf32>
    %51 = tpu.matmul %48, %50, %cst_30 {dimension_numbers = #tpu.dot_dimension_numbers<[1], [0], [0], [1], [0, 0, 1, 1], [], []>} : vector<32x32xf32>, vector<32x96xf32>, vector<32x96xf32> -> vector<32x96xf32>
    %52 = vector.extract_strided_slice %51 {offsets = [0, 0], sizes = [16, 8], strides = [1, 1]} : vector<32x96xf32> to vector<16x8xf32>
    %53 = vector.extract_strided_slice %51 {offsets = [0, 32], sizes = [16, 8], strides = [1, 1]} : vector<32x96xf32> to vector<16x8xf32>
    %cst_31 = arith.constant dense<0.000000e+00> : vector<16x16xf32>
    %54 = tpu.matmul %52, %53, %cst_31 {dimension_numbers = #tpu.dot_dimension_numbers<[1], [1], [0], [0], [0, 0, 1, 0], [], []>} : vector<16x8xf32>, vector<16x8xf32>, vector<16x16xf32> -> vector<16x16xf32>
    %55 = vector.extract_strided_slice %51 {offsets = [0, 8], sizes = [16, 8], strides = [1, 1]} : vector<32x96xf32> to vector<16x8xf32>
    %56 = vector.extract_strided_slice %51 {offsets = [0, 40], sizes = [16, 8], strides = [1, 1]} : vector<32x96xf32> to vector<16x8xf32>
    %cst_32 = arith.constant dense<0.000000e+00> : vector<16x16xf32>
    %57 = tpu.matmul %55, %56, %cst_32 {dimension_numbers = #tpu.dot_dimension_numbers<[1], [1], [0], [0], [0, 0, 1, 0], [], []>} : vector<16x8xf32>, vector<16x8xf32>, vector<16x16xf32> -> vector<16x16xf32>
    %58 = vector.extract_strided_slice %51 {offsets = [0, 16], sizes = [16, 8], strides = [1, 1]} : vector<32x96xf32> to vector<16x8xf32>
    %59 = vector.extract_strided_slice %51 {offsets = [0, 48], sizes = [16, 8], strides = [1, 1]} : vector<32x96xf32> to vector<16x8xf32>
    %cst_33 = arith.constant dense<0.000000e+00> : vector<16x16xf32>
    %60 = tpu.matmul %58, %59, %cst_33 {dimension_numbers = #tpu.dot_dimension_numbers<[1], [1], [0], [0], [0, 0, 1, 0], [], []>} : vector<16x8xf32>, vector<16x8xf32>, vector<16x16xf32> -> vector<16x16xf32>
    %61 = vector.extract_strided_slice %51 {offsets = [0, 24], sizes = [16, 8], strides = [1, 1]} : vector<32x96xf32> to vector<16x8xf32>
    %62 = vector.extract_strided_slice %51 {offsets = [0, 56], sizes = [16, 8], strides = [1, 1]} : vector<32x96xf32> to vector<16x8xf32>
    %cst_34 = arith.constant dense<0.000000e+00> : vector<16x16xf32>
    %63 = tpu.matmul %61, %62, %cst_34 {dimension_numbers = #tpu.dot_dimension_numbers<[1], [1], [0], [0], [0, 0, 1, 0], [], []>} : vector<16x8xf32>, vector<16x8xf32>, vector<16x16xf32> -> vector<16x16xf32>
    %64 = vector.extract_strided_slice %51 {offsets = [16, 0], sizes = [16, 8], strides = [1, 1]} : vector<32x96xf32> to vector<16x8xf32>
    %65 = vector.extract_strided_slice %51 {offsets = [16, 32], sizes = [16, 8], strides = [1, 1]} : vector<32x96xf32> to vector<16x8xf32>
    %cst_35 = arith.constant dense<0.000000e+00> : vector<16x16xf32>
    %66 = tpu.matmul %64, %65, %cst_35 {dimension_numbers = #tpu.dot_dimension_numbers<[1], [1], [0], [0], [0, 0, 1, 0], [], []>} : vector<16x8xf32>, vector<16x8xf32>, vector<16x16xf32> -> vector<16x16xf32>
    %67 = vector.extract_strided_slice %51 {offsets = [16, 8], sizes = [16, 8], strides = [1, 1]} : vector<32x96xf32> to vector<16x8xf32>
    %68 = vector.extract_strided_slice %51 {offsets = [16, 40], sizes = [16, 8], strides = [1, 1]} : vector<32x96xf32> to vector<16x8xf32>
    %cst_36 = arith.constant dense<0.000000e+00> : vector<16x16xf32>
    %69 = tpu.matmul %67, %68, %cst_36 {dimension_numbers = #tpu.dot_dimension_numbers<[1], [1], [0], [0], [0, 0, 1, 0], [], []>} : vector<16x8xf32>, vector<16x8xf32>, vector<16x16xf32> -> vector<16x16xf32>
    %70 = vector.extract_strided_slice %51 {offsets = [16, 16], sizes = [16, 8], strides = [1, 1]} : vector<32x96xf32> to vector<16x8xf32>
    %71 = vector.extract_strided_slice %51 {offsets = [16, 48], sizes = [16, 8], strides = [1, 1]} : vector<32x96xf32> to vector<16x8xf32>
    %cst_37 = arith.constant dense<0.000000e+00> : vector<16x16xf32>
    %72 = tpu.matmul %70, %71, %cst_37 {dimension_numbers = #tpu.dot_dimension_numbers<[1], [1], [0], [0], [0, 0, 1, 0], [], []>} : vector<16x8xf32>, vector<16x8xf32>, vector<16x16xf32> -> vector<16x16xf32>
    %73 = vector.extract_strided_slice %51 {offsets = [16, 24], sizes = [16, 8], strides = [1, 1]} : vector<32x96xf32> to vector<16x8xf32>
    %74 = vector.extract_strided_slice %51 {offsets = [16, 56], sizes = [16, 8], strides = [1, 1]} : vector<32x96xf32> to vector<16x8xf32>
    %cst_38 = arith.constant dense<0.000000e+00> : vector<16x16xf32>
    %75 = tpu.matmul %73, %74, %cst_38 {dimension_numbers = #tpu.dot_dimension_numbers<[1], [1], [0], [0], [0, 0, 1, 0], [], []>} : vector<16x8xf32>, vector<16x8xf32>, vector<16x16xf32> -> vector<16x16xf32>
    %76 = tpu.concatenate %54, %57, %60, %63, %66, %69, %72, %75 in 0 : vector<16x16xf32>, vector<16x16xf32>, vector<16x16xf32>, vector<16x16xf32>, vector<16x16xf32>, vector<16x16xf32>, vector<16x16xf32>, vector<16x16xf32> -> vector<128x16xf32>
    %77 = vector.broadcast %5 : vector<1x16xf32> to vector<128x16xf32>
    %78 = arith.addf %76, %77 : vector<128x16xf32>
    %cst_39 = arith.constant dense<0xFF800000> : vector<128xf32>
    %79 = vector.multi_reduction <maximumf>, %78, %cst_39 [1] : vector<128x16xf32> to vector<128xf32>
    %80 = vector.shape_cast %79 : vector<128xf32> to vector<128x1xf32>
    %81 = vector.broadcast %80 : vector<128x1xf32> to vector<128x16xf32>
    %82 = arith.subf %78, %81 : vector<128x16xf32>
    %83 = math.exp %82 : vector<128x16xf32>
    %cst_40 = arith.constant dense<0.000000e+00> : vector<128xf32>
    %84 = vector.multi_reduction <add>, %83, %cst_40 [1] : vector<128x16xf32> to vector<128xf32>
    %85 = vector.shape_cast %84 : vector<128xf32> to vector<128x1xf32>
    %86 = tpu.reciprocal %85 {approx = true} : vector<128x1xf32> -> vector<128x1xf32>
    %87 = vector.broadcast %86 : vector<128x1xf32> to vector<128x16xf32>
    %88 = arith.mulf %83, %87 : vector<128x16xf32>
    %89 = vector.extract_strided_slice %51 {offsets = [0, 64], sizes = [16, 8], strides = [1, 1]} : vector<32x96xf32> to vector<16x8xf32>
    %90 = vector.extract_strided_slice %88 {offsets = [0, 0], sizes = [16, 16], strides = [1, 1]} : vector<128x16xf32> to vector<16x16xf32>
    %cst_41 = arith.constant dense<0.000000e+00> : vector<16x8xf32>
    %91 = tpu.matmul %90, %89, %cst_41 {dimension_numbers = #tpu.dot_dimension_numbers<[1], [0], [0], [1], [0, 0, 1, 1], [], []>} : vector<16x16xf32>, vector<16x8xf32>, vector<16x8xf32> -> vector<16x8xf32>
    %92 = vector.extract_strided_slice %51 {offsets = [0, 72], sizes = [16, 8], strides = [1, 1]} : vector<32x96xf32> to vector<16x8xf32>
    %93 = vector.extract_strided_slice %88 {offsets = [16, 0], sizes = [16, 16], strides = [1, 1]} : vector<128x16xf32> to vector<16x16xf32>
    %cst_42 = arith.constant dense<0.000000e+00> : vector<16x8xf32>
    %94 = tpu.matmul %93, %92, %cst_42 {dimension_numbers = #tpu.dot_dimension_numbers<[1], [0], [0], [1], [0, 0, 1, 1], [], []>} : vector<16x16xf32>, vector<16x8xf32>, vector<16x8xf32> -> vector<16x8xf32>
    %95 = vector.extract_strided_slice %51 {offsets = [0, 80], sizes = [16, 8], strides = [1, 1]} : vector<32x96xf32> to vector<16x8xf32>
    %96 = vector.extract_strided_slice %88 {offsets = [32, 0], sizes = [16, 16], strides = [1, 1]} : vector<128x16xf32> to vector<16x16xf32>
    %cst_43 = arith.constant dense<0.000000e+00> : vector<16x8xf32>
    %97 = tpu.matmul %96, %95, %cst_43 {dimension_numbers = #tpu.dot_dimension_numbers<[1], [0], [0], [1], [0, 0, 1, 1], [], []>} : vector<16x16xf32>, vector<16x8xf32>, vector<16x8xf32> -> vector<16x8xf32>
    %98 = vector.extract_strided_slice %51 {offsets = [0, 88], sizes = [16, 8], strides = [1, 1]} : vector<32x96xf32> to vector<16x8xf32>
    %99 = vector.extract_strided_slice %88 {offsets = [48, 0], sizes = [16, 16], strides = [1, 1]} : vector<128x16xf32> to vector<16x16xf32>
    %cst_44 = arith.constant dense<0.000000e+00> : vector<16x8xf32>
    %100 = tpu.matmul %99, %98, %cst_44 {dimension_numbers = #tpu.dot_dimension_numbers<[1], [0], [0], [1], [0, 0, 1, 1], [], []>} : vector<16x16xf32>, vector<16x8xf32>, vector<16x8xf32> -> vector<16x8xf32>
    %101 = tpu.concatenate %91, %94, %97, %100 in 1 : vector<16x8xf32>, vector<16x8xf32>, vector<16x8xf32>, vector<16x8xf32> -> vector<16x32xf32>
    %102 = vector.extract_strided_slice %51 {offsets = [16, 64], sizes = [16, 8], strides = [1, 1]} : vector<32x96xf32> to vector<16x8xf32>
    %103 = vector.extract_strided_slice %88 {offsets = [64, 0], sizes = [16, 16], strides = [1, 1]} : vector<128x16xf32> to vector<16x16xf32>
    %cst_45 = arith.constant dense<0.000000e+00> : vector<16x8xf32>
    %104 = tpu.matmul %103, %102, %cst_45 {dimension_numbers = #tpu.dot_dimension_numbers<[1], [0], [0], [1], [0, 0, 1, 1], [], []>} : vector<16x16xf32>, vector<16x8xf32>, vector<16x8xf32> -> vector<16x8xf32>
    %105 = vector.extract_strided_slice %51 {offsets = [16, 72], sizes = [16, 8], strides = [1, 1]} : vector<32x96xf32> to vector<16x8xf32>
    %106 = vector.extract_strided_slice %88 {offsets = [80, 0], sizes = [16, 16], strides = [1, 1]} : vector<128x16xf32> to vector<16x16xf32>
    %cst_46 = arith.constant dense<0.000000e+00> : vector<16x8xf32>
    %107 = tpu.matmul %106, %105, %cst_46 {dimension_numbers = #tpu.dot_dimension_numbers<[1], [0], [0], [1], [0, 0, 1, 1], [], []>} : vector<16x16xf32>, vector<16x8xf32>, vector<16x8xf32> -> vector<16x8xf32>
    %108 = vector.extract_strided_slice %51 {offsets = [16, 80], sizes = [16, 8], strides = [1, 1]} : vector<32x96xf32> to vector<16x8xf32>
    %109 = vector.extract_strided_slice %88 {offsets = [96, 0], sizes = [16, 16], strides = [1, 1]} : vector<128x16xf32> to vector<16x16xf32>
    %cst_47 = arith.constant dense<0.000000e+00> : vector<16x8xf32>
    %110 = tpu.matmul %109, %108, %cst_47 {dimension_numbers = #tpu.dot_dimension_numbers<[1], [0], [0], [1], [0, 0, 1, 1], [], []>} : vector<16x16xf32>, vector<16x8xf32>, vector<16x8xf32> -> vector<16x8xf32>
    %111 = vector.extract_strided_slice %51 {offsets = [16, 88], sizes = [16, 8], strides = [1, 1]} : vector<32x96xf32> to vector<16x8xf32>
    %112 = vector.extract_strided_slice %88 {offsets = [112, 0], sizes = [16, 16], strides = [1, 1]} : vector<128x16xf32> to vector<16x16xf32>
    %cst_48 = arith.constant dense<0.000000e+00> : vector<16x8xf32>
    %113 = tpu.matmul %112, %111, %cst_48 {dimension_numbers = #tpu.dot_dimension_numbers<[1], [0], [0], [1], [0, 0, 1, 1], [], []>} : vector<16x16xf32>, vector<16x8xf32>, vector<16x8xf32> -> vector<16x8xf32>
    %114 = tpu.concatenate %104, %107, %110, %113 in 1 : vector<16x8xf32>, vector<16x8xf32>, vector<16x8xf32>, vector<16x8xf32> -> vector<16x32xf32>
    %115 = tpu.concatenate %101, %114 in 0 : vector<16x32xf32>, vector<16x32xf32> -> vector<32x32xf32>
    %c0_49 = arith.constant 0 : index
    %c0_50 = arith.constant 0 : index
    %c0_51 = arith.constant 0 : index
    %116 = vector.load %arg10[%c0_49, %c0_50, %c0_51] : memref<2x32x32xf32, #tpu.memory_space<vmem>>, vector<1x32x32xf32>
    %117 = vector.shape_cast %116 : vector<1x32x32xf32> to vector<32x32xf32>
    %cst_52 = arith.constant dense<0.000000e+00> : vector<32x32xf32>
    %118 = tpu.matmul %115, %117, %cst_52 {dimension_numbers = #tpu.dot_dimension_numbers<[1], [0], [0], [1], [0, 0, 1, 1], [], []>} : vector<32x32xf32>, vector<32x32xf32>, vector<32x32xf32> -> vector<32x32xf32>
    %119 = arith.addf %22, %118 : vector<32x32xf32>
    %c0_53 = arith.constant 0 : index
    %c0_54 = arith.constant 0 : index
    %c0_55 = arith.constant 0 : index
    %120 = vector.load %arg11[%c0_53, %c0_54, %c0_55] : memref<2x1x32xf32, #tpu.memory_space<vmem>>, vector<1x1x32xf32>
    %121 = vector.shape_cast %120 : vector<1x1x32xf32> to vector<1x32xf32>
    %122 = vector.broadcast %121 : vector<1x32xf32> to vector<32x32xf32>
    %123 = arith.addf %119, %122 : vector<32x32xf32>
    %c0_56 = arith.constant 0 : index
    %c0_57 = arith.constant 0 : index
    %c0_58 = arith.constant 0 : index
    %124 = vector.load %arg12[%c0_56, %c0_57, %c0_58] : memref<2x1x32xf32, #tpu.memory_space<vmem>>, vector<1x1x32xf32>
    %125 = vector.shape_cast %124 : vector<1x1x32xf32> to vector<1x32xf32>
    %c0_59 = arith.constant 0 : index
    %c0_60 = arith.constant 0 : index
    %c0_61 = arith.constant 0 : index
    %126 = vector.load %arg13[%c0_59, %c0_60, %c0_61] : memref<2x1x32xf32, #tpu.memory_space<vmem>>, vector<1x1x32xf32>
    %127 = vector.shape_cast %126 : vector<1x1x32xf32> to vector<1x32xf32>
    %cst_62 = arith.constant dense<0.000000e+00> : vector<32xf32>
    %128 = vector.multi_reduction <add>, %123, %cst_62 [1] : vector<32x32xf32> to vector<32xf32>
    %129 = vector.shape_cast %128 : vector<32xf32> to vector<32x1xf32>
    %cst_63 = arith.constant 3.200000e+01 : f32
    %130 = vector.broadcast %cst_63 : f32 to vector<32x1xf32>
    %131 = arith.divf %129, %130 : vector<32x1xf32>
    %132 = vector.broadcast %131 : vector<32x1xf32> to vector<32x32xf32>
    %133 = arith.subf %123, %132 : vector<32x32xf32>
    %134 = arith.mulf %133, %133 : vector<32x32xf32>
    %cst_64 = arith.constant dense<0.000000e+00> : vector<32xf32>
    %135 = vector.multi_reduction <add>, %134, %cst_64 [1] : vector<32x32xf32> to vector<32xf32>
    %136 = vector.shape_cast %135 : vector<32xf32> to vector<32x1xf32>
    %cst_65 = arith.constant 3.200000e+01 : f32
    %137 = vector.broadcast %cst_65 : f32 to vector<32x1xf32>
    %138 = arith.divf %136, %137 : vector<32x1xf32>
    %139 = vector.broadcast %131 : vector<32x1xf32> to vector<32x32xf32>
    %140 = arith.subf %123, %139 : vector<32x32xf32>
    %cst_66 = arith.constant 9.99999974E-6 : f32
    %141 = vector.broadcast %cst_66 : f32 to vector<32x1xf32>
    %142 = arith.addf %138, %141 : vector<32x1xf32>
    %143 = math.rsqrt %142 : vector<32x1xf32>
    %144 = vector.broadcast %143 : vector<32x1xf32> to vector<32x32xf32>
    %145 = arith.mulf %140, %144 : vector<32x32xf32>
    %146 = vector.broadcast %125 : vector<1x32xf32> to vector<32x32xf32>
    %147 = arith.mulf %145, %146 : vector<32x32xf32>
    %148 = vector.broadcast %127 : vector<1x32xf32> to vector<32x32xf32>
    %149 = arith.addf %147, %148 : vector<32x32xf32>
    %c0_67 = arith.constant 0 : index
    %c0_68 = arith.constant 0 : index
    %c0_69 = arith.constant 0 : index
    %150 = vector.load %arg14[%c0_67, %c0_68, %c0_69] : memref<2x32x64xf32, #tpu.memory_space<vmem>>, vector<1x32x64xf32>
    %151 = vector.shape_cast %150 : vector<1x32x64xf32> to vector<32x64xf32>
    %cst_70 = arith.constant dense<0.000000e+00> : vector<32x64xf32>
    %152 = tpu.matmul %149, %151, %cst_70 {dimension_numbers = #tpu.dot_dimension_numbers<[1], [0], [0], [1], [0, 0, 1, 1], [], []>} : vector<32x32xf32>, vector<32x64xf32>, vector<32x64xf32> -> vector<32x64xf32>
    %c0_71 = arith.constant 0 : index
    %c0_72 = arith.constant 0 : index
    %c0_73 = arith.constant 0 : index
    %153 = vector.load %arg15[%c0_71, %c0_72, %c0_73] : memref<2x1x64xf32, #tpu.memory_space<vmem>>, vector<1x1x64xf32>
    %154 = vector.shape_cast %153 : vector<1x1x64xf32> to vector<1x64xf32>
    %155 = vector.broadcast %154 : vector<1x64xf32> to vector<32x64xf32>
    %156 = arith.addf %152, %155 : vector<32x64xf32>
    %cst_74 = arith.constant 5.000000e-01 : f32
    %157 = vector.broadcast %cst_74 : f32 to vector<32x64xf32>
    %158 = arith.mulf %157, %156 : vector<32x64xf32>
    %cst_75 = arith.constant 0.707106769 : f32
    %159 = vector.broadcast %cst_75 : f32 to vector<32x64xf32>
    %160 = arith.mulf %156, %159 : vector<32x64xf32>
    %cst_76 = arith.constant 0.000000e+00 : f32
    %161 = vector.broadcast %cst_76 : f32 to vector<32x64xf32>
    %162 = arith.cmpf oge, %160, %161 : vector<32x64xf32>
    %cst_77 = arith.constant 1.000000e+00 : f32
    %cst_78 = arith.constant -1.000000e+00 : f32
    %163 = vector.broadcast %cst_77 : f32 to vector<32x64xf32>
    %164 = vector.broadcast %cst_78 : f32 to vector<32x64xf32>
    %165 = arith.select %162, %163, %164 : vector<32x64xi1>, vector<32x64xf32>
    %166 = math.absf %160 : vector<32x64xf32>
    %cst_79 = arith.constant 0.327591091 : f32
    %167 = vector.broadcast %cst_79 : f32 to vector<32x64xf32>
    %168 = arith.mulf %167, %166 : vector<32x64xf32>
    %cst_80 = arith.constant 1.000000e+00 : f32
    %169 = vector.broadcast %cst_80 : f32 to vector<32x64xf32>
    %170 = arith.addf %169, %168 : vector<32x64xf32>
    %171 = tpu.reciprocal %170 : vector<32x64xf32> -> vector<32x64xf32>
    %cst_81 = arith.constant 1.06140542 : f32
    %172 = vector.broadcast %cst_81 : f32 to vector<32x64xf32>
    %173 = arith.mulf %172, %171 : vector<32x64xf32>
    %cst_82 = arith.constant -1.45315206 : f32
    %174 = vector.broadcast %cst_82 : f32 to vector<32x64xf32>
    %175 = arith.addf %173, %174 : vector<32x64xf32>
    %176 = arith.mulf %175, %171 : vector<32x64xf32>
    %cst_83 = arith.constant 1.42141378 : f32
    %177 = vector.broadcast %cst_83 : f32 to vector<32x64xf32>
    %178 = arith.addf %176, %177 : vector<32x64xf32>
    %179 = arith.mulf %178, %171 : vector<32x64xf32>
    %cst_84 = arith.constant -0.284496725 : f32
    %180 = vector.broadcast %cst_84 : f32 to vector<32x64xf32>
    %181 = arith.addf %179, %180 : vector<32x64xf32>
    %182 = arith.mulf %181, %171 : vector<32x64xf32>
    %cst_85 = arith.constant 0.254829586 : f32
    %183 = vector.broadcast %cst_85 : f32 to vector<32x64xf32>
    %184 = arith.addf %182, %183 : vector<32x64xf32>
    %185 = arith.mulf %184, %171 : vector<32x64xf32>
    %cst_86 = arith.constant 0.000000e+00 : f32
    %186 = vector.broadcast %cst_86 : f32 to vector<32x64xf32>
    %187 = arith.subf %186, %166 : vector<32x64xf32>
    %188 = arith.mulf %187, %166 : vector<32x64xf32>
    %189 = math.exp %188 : vector<32x64xf32>
    %190 = arith.mulf %185, %189 : vector<32x64xf32>
    %cst_87 = arith.constant 1.000000e+00 : f32
    %191 = vector.broadcast %cst_87 : f32 to vector<32x64xf32>
    %192 = arith.subf %191, %190 : vector<32x64xf32>
    %193 = arith.mulf %165, %192 : vector<32x64xf32>
    %cst_88 = arith.constant 1.000000e+00 : f32
    %194 = vector.broadcast %cst_88 : f32 to vector<32x64xf32>
    %195 = arith.addf %194, %193 : vector<32x64xf32>
    %196 = arith.mulf %158, %195 : vector<32x64xf32>
    %c0_89 = arith.constant 0 : index
    %c0_90 = arith.constant 0 : index
    %c0_91 = arith.constant 0 : index
    %197 = vector.load %arg16[%c0_89, %c0_90, %c0_91] : memref<2x64x32xf32, #tpu.memory_space<vmem>>, vector<1x64x32xf32>
    %198 = vector.shape_cast %197 : vector<1x64x32xf32> to vector<64x32xf32>
    %cst_92 = arith.constant dense<0.000000e+00> : vector<32x32xf32>
    %199 = tpu.matmul %196, %198, %cst_92 {dimension_numbers = #tpu.dot_dimension_numbers<[1], [0], [0], [1], [0, 0, 1, 1], [], []>} : vector<32x64xf32>, vector<64x32xf32>, vector<32x32xf32> -> vector<32x32xf32>
    %200 = arith.addf %123, %199 : vector<32x32xf32>
    %c0_93 = arith.constant 0 : index
    %c0_94 = arith.constant 0 : index
    %c0_95 = arith.constant 0 : index
    %201 = vector.load %arg17[%c0_93, %c0_94, %c0_95] : memref<2x1x32xf32, #tpu.memory_space<vmem>>, vector<1x1x32xf32>
    %202 = vector.shape_cast %201 : vector<1x1x32xf32> to vector<1x32xf32>
    %203 = vector.broadcast %202 : vector<1x32xf32> to vector<32x32xf32>
    %204 = arith.addf %200, %203 : vector<32x32xf32>
    %c1 = arith.constant 1 : index
    %c0_96 = arith.constant 0 : index
    %c0_97 = arith.constant 0 : index
    %205 = vector.load %arg7[%c1, %c0_96, %c0_97] : memref<2x1x32xf32, #tpu.memory_space<vmem>>, vector<1x1x32xf32>
    %206 = vector.shape_cast %205 : vector<1x1x32xf32> to vector<1x32xf32>
    %c1_98 = arith.constant 1 : index
    %c0_99 = arith.constant 0 : index
    %c0_100 = arith.constant 0 : index
    %207 = vector.load %arg8[%c1_98, %c0_99, %c0_100] : memref<2x1x32xf32, #tpu.memory_space<vmem>>, vector<1x1x32xf32>
    %208 = vector.shape_cast %207 : vector<1x1x32xf32> to vector<1x32xf32>
    %cst_101 = arith.constant dense<0.000000e+00> : vector<32xf32>
    %209 = vector.multi_reduction <add>, %204, %cst_101 [1] : vector<32x32xf32> to vector<32xf32>
    %210 = vector.shape_cast %209 : vector<32xf32> to vector<32x1xf32>
    %cst_102 = arith.constant 3.200000e+01 : f32
    %211 = vector.broadcast %cst_102 : f32 to vector<32x1xf32>
    %212 = arith.divf %210, %211 : vector<32x1xf32>
    %213 = vector.broadcast %212 : vector<32x1xf32> to vector<32x32xf32>
    %214 = arith.subf %204, %213 : vector<32x32xf32>
    %215 = arith.mulf %214, %214 : vector<32x32xf32>
    %cst_103 = arith.constant dense<0.000000e+00> : vector<32xf32>
    %216 = vector.multi_reduction <add>, %215, %cst_103 [1] : vector<32x32xf32> to vector<32xf32>
    %217 = vector.shape_cast %216 : vector<32xf32> to vector<32x1xf32>
    %cst_104 = arith.constant 3.200000e+01 : f32
    %218 = vector.broadcast %cst_104 : f32 to vector<32x1xf32>
    %219 = arith.divf %217, %218 : vector<32x1xf32>
    %220 = vector.broadcast %212 : vector<32x1xf32> to vector<32x32xf32>
    %221 = arith.subf %204, %220 : vector<32x32xf32>
    %cst_105 = arith.constant 9.99999974E-6 : f32
    %222 = vector.broadcast %cst_105 : f32 to vector<32x1xf32>
    %223 = arith.addf %219, %222 : vector<32x1xf32>
    %224 = math.rsqrt %223 : vector<32x1xf32>
    %225 = vector.broadcast %224 : vector<32x1xf32> to vector<32x32xf32>
    %226 = arith.mulf %221, %225 : vector<32x32xf32>
    %227 = vector.broadcast %206 : vector<1x32xf32> to vector<32x32xf32>
    %228 = arith.mulf %226, %227 : vector<32x32xf32>
    %229 = vector.broadcast %208 : vector<1x32xf32> to vector<32x32xf32>
    %230 = arith.addf %228, %229 : vector<32x32xf32>
    %c1_106 = arith.constant 1 : index
    %c0_107 = arith.constant 0 : index
    %c0_108 = arith.constant 0 : index
    %231 = vector.load %arg9[%c1_106, %c0_107, %c0_108] : memref<2x32x96xf32, #tpu.memory_space<vmem>>, vector<1x32x96xf32>
    %232 = vector.shape_cast %231 : vector<1x32x96xf32> to vector<32x96xf32>
    %cst_109 = arith.constant dense<0.000000e+00> : vector<32x96xf32>
    %233 = tpu.matmul %230, %232, %cst_109 {dimension_numbers = #tpu.dot_dimension_numbers<[1], [0], [0], [1], [0, 0, 1, 1], [], []>} : vector<32x32xf32>, vector<32x96xf32>, vector<32x96xf32> -> vector<32x96xf32>
    %234 = vector.extract_strided_slice %233 {offsets = [0, 0], sizes = [16, 8], strides = [1, 1]} : vector<32x96xf32> to vector<16x8xf32>
    %235 = vector.extract_strided_slice %233 {offsets = [0, 32], sizes = [16, 8], strides = [1, 1]} : vector<32x96xf32> to vector<16x8xf32>
    %cst_110 = arith.constant dense<0.000000e+00> : vector<16x16xf32>
    %236 = tpu.matmul %234, %235, %cst_110 {dimension_numbers = #tpu.dot_dimension_numbers<[1], [1], [0], [0], [0, 0, 1, 0], [], []>} : vector<16x8xf32>, vector<16x8xf32>, vector<16x16xf32> -> vector<16x16xf32>
    %237 = vector.extract_strided_slice %233 {offsets = [0, 8], sizes = [16, 8], strides = [1, 1]} : vector<32x96xf32> to vector<16x8xf32>
    %238 = vector.extract_strided_slice %233 {offsets = [0, 40], sizes = [16, 8], strides = [1, 1]} : vector<32x96xf32> to vector<16x8xf32>
    %cst_111 = arith.constant dense<0.000000e+00> : vector<16x16xf32>
    %239 = tpu.matmul %237, %238, %cst_111 {dimension_numbers = #tpu.dot_dimension_numbers<[1], [1], [0], [0], [0, 0, 1, 0], [], []>} : vector<16x8xf32>, vector<16x8xf32>, vector<16x16xf32> -> vector<16x16xf32>
    %240 = vector.extract_strided_slice %233 {offsets = [0, 16], sizes = [16, 8], strides = [1, 1]} : vector<32x96xf32> to vector<16x8xf32>
    %241 = vector.extract_strided_slice %233 {offsets = [0, 48], sizes = [16, 8], strides = [1, 1]} : vector<32x96xf32> to vector<16x8xf32>
    %cst_112 = arith.constant dense<0.000000e+00> : vector<16x16xf32>
    %242 = tpu.matmul %240, %241, %cst_112 {dimension_numbers = #tpu.dot_dimension_numbers<[1], [1], [0], [0], [0, 0, 1, 0], [], []>} : vector<16x8xf32>, vector<16x8xf32>, vector<16x16xf32> -> vector<16x16xf32>
    %243 = vector.extract_strided_slice %233 {offsets = [0, 24], sizes = [16, 8], strides = [1, 1]} : vector<32x96xf32> to vector<16x8xf32>
    %244 = vector.extract_strided_slice %233 {offsets = [0, 56], sizes = [16, 8], strides = [1, 1]} : vector<32x96xf32> to vector<16x8xf32>
    %cst_113 = arith.constant dense<0.000000e+00> : vector<16x16xf32>
    %245 = tpu.matmul %243, %244, %cst_113 {dimension_numbers = #tpu.dot_dimension_numbers<[1], [1], [0], [0], [0, 0, 1, 0], [], []>} : vector<16x8xf32>, vector<16x8xf32>, vector<16x16xf32> -> vector<16x16xf32>
    %246 = vector.extract_strided_slice %233 {offsets = [16, 0], sizes = [16, 8], strides = [1, 1]} : vector<32x96xf32> to vector<16x8xf32>
    %247 = vector.extract_strided_slice %233 {offsets = [16, 32], sizes = [16, 8], strides = [1, 1]} : vector<32x96xf32> to vector<16x8xf32>
    %cst_114 = arith.constant dense<0.000000e+00> : vector<16x16xf32>
    %248 = tpu.matmul %246, %247, %cst_114 {dimension_numbers = #tpu.dot_dimension_numbers<[1], [1], [0], [0], [0, 0, 1, 0], [], []>} : vector<16x8xf32>, vector<16x8xf32>, vector<16x16xf32> -> vector<16x16xf32>
    %249 = vector.extract_strided_slice %233 {offsets = [16, 8], sizes = [16, 8], strides = [1, 1]} : vector<32x96xf32> to vector<16x8xf32>
    %250 = vector.extract_strided_slice %233 {offsets = [16, 40], sizes = [16, 8], strides = [1, 1]} : vector<32x96xf32> to vector<16x8xf32>
    %cst_115 = arith.constant dense<0.000000e+00> : vector<16x16xf32>
    %251 = tpu.matmul %249, %250, %cst_115 {dimension_numbers = #tpu.dot_dimension_numbers<[1], [1], [0], [0], [0, 0, 1, 0], [], []>} : vector<16x8xf32>, vector<16x8xf32>, vector<16x16xf32> -> vector<16x16xf32>
    %252 = vector.extract_strided_slice %233 {offsets = [16, 16], sizes = [16, 8], strides = [1, 1]} : vector<32x96xf32> to vector<16x8xf32>
    %253 = vector.extract_strided_slice %233 {offsets = [16, 48], sizes = [16, 8], strides = [1, 1]} : vector<32x96xf32> to vector<16x8xf32>
    %cst_116 = arith.constant dense<0.000000e+00> : vector<16x16xf32>
    %254 = tpu.matmul %252, %253, %cst_116 {dimension_numbers = #tpu.dot_dimension_numbers<[1], [1], [0], [0], [0, 0, 1, 0], [], []>} : vector<16x8xf32>, vector<16x8xf32>, vector<16x16xf32> -> vector<16x16xf32>
    %255 = vector.extract_strided_slice %233 {offsets = [16, 24], sizes = [16, 8], strides = [1, 1]} : vector<32x96xf32> to vector<16x8xf32>
    %256 = vector.extract_strided_slice %233 {offsets = [16, 56], sizes = [16, 8], strides = [1, 1]} : vector<32x96xf32> to vector<16x8xf32>
    %cst_117 = arith.constant dense<0.000000e+00> : vector<16x16xf32>
    %257 = tpu.matmul %255, %256, %cst_117 {dimension_numbers = #tpu.dot_dimension_numbers<[1], [1], [0], [0], [0, 0, 1, 0], [], []>} : vector<16x8xf32>, vector<16x8xf32>, vector<16x16xf32> -> vector<16x16xf32>
    %258 = tpu.concatenate %236, %239, %242, %245, %248, %251, %254, %257 in 0 : vector<16x16xf32>, vector<16x16xf32>, vector<16x16xf32>, vector<16x16xf32>, vector<16x16xf32>, vector<16x16xf32>, vector<16x16xf32>, vector<16x16xf32> -> vector<128x16xf32>
    %259 = vector.broadcast %5 : vector<1x16xf32> to vector<128x16xf32>
    %260 = arith.addf %258, %259 : vector<128x16xf32>
    %cst_118 = arith.constant dense<0xFF800000> : vector<128xf32>
    %261 = vector.multi_reduction <maximumf>, %260, %cst_118 [1] : vector<128x16xf32> to vector<128xf32>
    %262 = vector.shape_cast %261 : vector<128xf32> to vector<128x1xf32>
    %263 = vector.broadcast %262 : vector<128x1xf32> to vector<128x16xf32>
    %264 = arith.subf %260, %263 : vector<128x16xf32>
    %265 = math.exp %264 : vector<128x16xf32>
    %cst_119 = arith.constant dense<0.000000e+00> : vector<128xf32>
    %266 = vector.multi_reduction <add>, %265, %cst_119 [1] : vector<128x16xf32> to vector<128xf32>
    %267 = vector.shape_cast %266 : vector<128xf32> to vector<128x1xf32>
    %268 = tpu.reciprocal %267 {approx = true} : vector<128x1xf32> -> vector<128x1xf32>
    %269 = vector.broadcast %268 : vector<128x1xf32> to vector<128x16xf32>
    %270 = arith.mulf %265, %269 : vector<128x16xf32>
    %271 = vector.extract_strided_slice %233 {offsets = [0, 64], sizes = [16, 8], strides = [1, 1]} : vector<32x96xf32> to vector<16x8xf32>
    %272 = vector.extract_strided_slice %270 {offsets = [0, 0], sizes = [16, 16], strides = [1, 1]} : vector<128x16xf32> to vector<16x16xf32>
    %cst_120 = arith.constant dense<0.000000e+00> : vector<16x8xf32>
    %273 = tpu.matmul %272, %271, %cst_120 {dimension_numbers = #tpu.dot_dimension_numbers<[1], [0], [0], [1], [0, 0, 1, 1], [], []>} : vector<16x16xf32>, vector<16x8xf32>, vector<16x8xf32> -> vector<16x8xf32>
    %274 = vector.extract_strided_slice %233 {offsets = [0, 72], sizes = [16, 8], strides = [1, 1]} : vector<32x96xf32> to vector<16x8xf32>
    %275 = vector.extract_strided_slice %270 {offsets = [16, 0], sizes = [16, 16], strides = [1, 1]} : vector<128x16xf32> to vector<16x16xf32>
    %cst_121 = arith.constant dense<0.000000e+00> : vector<16x8xf32>
    %276 = tpu.matmul %275, %274, %cst_121 {dimension_numbers = #tpu.dot_dimension_numbers<[1], [0], [0], [1], [0, 0, 1, 1], [], []>} : vector<16x16xf32>, vector<16x8xf32>, vector<16x8xf32> -> vector<16x8xf32>
    %277 = vector.extract_strided_slice %233 {offsets = [0, 80], sizes = [16, 8], strides = [1, 1]} : vector<32x96xf32> to vector<16x8xf32>
    %278 = vector.extract_strided_slice %270 {offsets = [32, 0], sizes = [16, 16], strides = [1, 1]} : vector<128x16xf32> to vector<16x16xf32>
    %cst_122 = arith.constant dense<0.000000e+00> : vector<16x8xf32>
    %279 = tpu.matmul %278, %277, %cst_122 {dimension_numbers = #tpu.dot_dimension_numbers<[1], [0], [0], [1], [0, 0, 1, 1], [], []>} : vector<16x16xf32>, vector<16x8xf32>, vector<16x8xf32> -> vector<16x8xf32>
    %280 = vector.extract_strided_slice %233 {offsets = [0, 88], sizes = [16, 8], strides = [1, 1]} : vector<32x96xf32> to vector<16x8xf32>
    %281 = vector.extract_strided_slice %270 {offsets = [48, 0], sizes = [16, 16], strides = [1, 1]} : vector<128x16xf32> to vector<16x16xf32>
    %cst_123 = arith.constant dense<0.000000e+00> : vector<16x8xf32>
    %282 = tpu.matmul %281, %280, %cst_123 {dimension_numbers = #tpu.dot_dimension_numbers<[1], [0], [0], [1], [0, 0, 1, 1], [], []>} : vector<16x16xf32>, vector<16x8xf32>, vector<16x8xf32> -> vector<16x8xf32>
    %283 = tpu.concatenate %273, %276, %279, %282 in 1 : vector<16x8xf32>, vector<16x8xf32>, vector<16x8xf32>, vector<16x8xf32> -> vector<16x32xf32>
    %284 = vector.extract_strided_slice %233 {offsets = [16, 64], sizes = [16, 8], strides = [1, 1]} : vector<32x96xf32> to vector<16x8xf32>
    %285 = vector.extract_strided_slice %270 {offsets = [64, 0], sizes = [16, 16], strides = [1, 1]} : vector<128x16xf32> to vector<16x16xf32>
    %cst_124 = arith.constant dense<0.000000e+00> : vector<16x8xf32>
    %286 = tpu.matmul %285, %284, %cst_124 {dimension_numbers = #tpu.dot_dimension_numbers<[1], [0], [0], [1], [0, 0, 1, 1], [], []>} : vector<16x16xf32>, vector<16x8xf32>, vector<16x8xf32> -> vector<16x8xf32>
    %287 = vector.extract_strided_slice %233 {offsets = [16, 72], sizes = [16, 8], strides = [1, 1]} : vector<32x96xf32> to vector<16x8xf32>
    %288 = vector.extract_strided_slice %270 {offsets = [80, 0], sizes = [16, 16], strides = [1, 1]} : vector<128x16xf32> to vector<16x16xf32>
    %cst_125 = arith.constant dense<0.000000e+00> : vector<16x8xf32>
    %289 = tpu.matmul %288, %287, %cst_125 {dimension_numbers = #tpu.dot_dimension_numbers<[1], [0], [0], [1], [0, 0, 1, 1], [], []>} : vector<16x16xf32>, vector<16x8xf32>, vector<16x8xf32> -> vector<16x8xf32>
    %290 = vector.extract_strided_slice %233 {offsets = [16, 80], sizes = [16, 8], strides = [1, 1]} : vector<32x96xf32> to vector<16x8xf32>
    %291 = vector.extract_strided_slice %270 {offsets = [96, 0], sizes = [16, 16], strides = [1, 1]} : vector<128x16xf32> to vector<16x16xf32>
    %cst_126 = arith.constant dense<0.000000e+00> : vector<16x8xf32>
    %292 = tpu.matmul %291, %290, %cst_126 {dimension_numbers = #tpu.dot_dimension_numbers<[1], [0], [0], [1], [0, 0, 1, 1], [], []>} : vector<16x16xf32>, vector<16x8xf32>, vector<16x8xf32> -> vector<16x8xf32>
    %293 = vector.extract_strided_slice %233 {offsets = [16, 88], sizes = [16, 8], strides = [1, 1]} : vector<32x96xf32> to vector<16x8xf32>
    %294 = vector.extract_strided_slice %270 {offsets = [112, 0], sizes = [16, 16], strides = [1, 1]} : vector<128x16xf32> to vector<16x16xf32>
    %cst_127 = arith.constant dense<0.000000e+00> : vector<16x8xf32>
    %295 = tpu.matmul %294, %293, %cst_127 {dimension_numbers = #tpu.dot_dimension_numbers<[1], [0], [0], [1], [0, 0, 1, 1], [], []>} : vector<16x16xf32>, vector<16x8xf32>, vector<16x8xf32> -> vector<16x8xf32>
    %296 = tpu.concatenate %286, %289, %292, %295 in 1 : vector<16x8xf32>, vector<16x8xf32>, vector<16x8xf32>, vector<16x8xf32> -> vector<16x32xf32>
    %297 = tpu.concatenate %283, %296 in 0 : vector<16x32xf32>, vector<16x32xf32> -> vector<32x32xf32>
    %c1_128 = arith.constant 1 : index
    %c0_129 = arith.constant 0 : index
    %c0_130 = arith.constant 0 : index
    %298 = vector.load %arg10[%c1_128, %c0_129, %c0_130] : memref<2x32x32xf32, #tpu.memory_space<vmem>>, vector<1x32x32xf32>
    %299 = vector.shape_cast %298 : vector<1x32x32xf32> to vector<32x32xf32>
    %cst_131 = arith.constant dense<0.000000e+00> : vector<32x32xf32>
    %300 = tpu.matmul %297, %299, %cst_131 {dimension_numbers = #tpu.dot_dimension_numbers<[1], [0], [0], [1], [0, 0, 1, 1], [], []>} : vector<32x32xf32>, vector<32x32xf32>, vector<32x32xf32> -> vector<32x32xf32>
    %301 = arith.addf %204, %300 : vector<32x32xf32>
    %c1_132 = arith.constant 1 : index
    %c0_133 = arith.constant 0 : index
    %c0_134 = arith.constant 0 : index
    %302 = vector.load %arg11[%c1_132, %c0_133, %c0_134] : memref<2x1x32xf32, #tpu.memory_space<vmem>>, vector<1x1x32xf32>
    %303 = vector.shape_cast %302 : vector<1x1x32xf32> to vector<1x32xf32>
    %304 = vector.broadcast %303 : vector<1x32xf32> to vector<32x32xf32>
    %305 = arith.addf %301, %304 : vector<32x32xf32>
    %c1_135 = arith.constant 1 : index
    %c0_136 = arith.constant 0 : index
    %c0_137 = arith.constant 0 : index
    %306 = vector.load %arg12[%c1_135, %c0_136, %c0_137] : memref<2x1x32xf32, #tpu.memory_space<vmem>>, vector<1x1x32xf32>
    %307 = vector.shape_cast %306 : vector<1x1x32xf32> to vector<1x32xf32>
    %c1_138 = arith.constant 1 : index
    %c0_139 = arith.constant 0 : index
    %c0_140 = arith.constant 0 : index
    %308 = vector.load %arg13[%c1_138, %c0_139, %c0_140] : memref<2x1x32xf32, #tpu.memory_space<vmem>>, vector<1x1x32xf32>
    %309 = vector.shape_cast %308 : vector<1x1x32xf32> to vector<1x32xf32>
    %cst_141 = arith.constant dense<0.000000e+00> : vector<32xf32>
    %310 = vector.multi_reduction <add>, %305, %cst_141 [1] : vector<32x32xf32> to vector<32xf32>
    %311 = vector.shape_cast %310 : vector<32xf32> to vector<32x1xf32>
    %cst_142 = arith.constant 3.200000e+01 : f32
    %312 = vector.broadcast %cst_142 : f32 to vector<32x1xf32>
    %313 = arith.divf %311, %312 : vector<32x1xf32>
    %314 = vector.broadcast %313 : vector<32x1xf32> to vector<32x32xf32>
    %315 = arith.subf %305, %314 : vector<32x32xf32>
    %316 = arith.mulf %315, %315 : vector<32x32xf32>
    %cst_143 = arith.constant dense<0.000000e+00> : vector<32xf32>
    %317 = vector.multi_reduction <add>, %316, %cst_143 [1] : vector<32x32xf32> to vector<32xf32>
    %318 = vector.shape_cast %317 : vector<32xf32> to vector<32x1xf32>
    %cst_144 = arith.constant 3.200000e+01 : f32
    %319 = vector.broadcast %cst_144 : f32 to vector<32x1xf32>
    %320 = arith.divf %318, %319 : vector<32x1xf32>
    %321 = vector.broadcast %313 : vector<32x1xf32> to vector<32x32xf32>
    %322 = arith.subf %305, %321 : vector<32x32xf32>
    %cst_145 = arith.constant 9.99999974E-6 : f32
    %323 = vector.broadcast %cst_145 : f32 to vector<32x1xf32>
    %324 = arith.addf %320, %323 : vector<32x1xf32>
    %325 = math.rsqrt %324 : vector<32x1xf32>
    %326 = vector.broadcast %325 : vector<32x1xf32> to vector<32x32xf32>
    %327 = arith.mulf %322, %326 : vector<32x32xf32>
    %328 = vector.broadcast %307 : vector<1x32xf32> to vector<32x32xf32>
    %329 = arith.mulf %327, %328 : vector<32x32xf32>
    %330 = vector.broadcast %309 : vector<1x32xf32> to vector<32x32xf32>
    %331 = arith.addf %329, %330 : vector<32x32xf32>
    %c1_146 = arith.constant 1 : index
    %c0_147 = arith.constant 0 : index
    %c0_148 = arith.constant 0 : index
    %332 = vector.load %arg14[%c1_146, %c0_147, %c0_148] : memref<2x32x64xf32, #tpu.memory_space<vmem>>, vector<1x32x64xf32>
    %333 = vector.shape_cast %332 : vector<1x32x64xf32> to vector<32x64xf32>
    %cst_149 = arith.constant dense<0.000000e+00> : vector<32x64xf32>
    %334 = tpu.matmul %331, %333, %cst_149 {dimension_numbers = #tpu.dot_dimension_numbers<[1], [0], [0], [1], [0, 0, 1, 1], [], []>} : vector<32x32xf32>, vector<32x64xf32>, vector<32x64xf32> -> vector<32x64xf32>
    %c1_150 = arith.constant 1 : index
    %c0_151 = arith.constant 0 : index
    %c0_152 = arith.constant 0 : index
    %335 = vector.load %arg15[%c1_150, %c0_151, %c0_152] : memref<2x1x64xf32, #tpu.memory_space<vmem>>, vector<1x1x64xf32>
    %336 = vector.shape_cast %335 : vector<1x1x64xf32> to vector<1x64xf32>
    %337 = vector.broadcast %336 : vector<1x64xf32> to vector<32x64xf32>
    %338 = arith.addf %334, %337 : vector<32x64xf32>
    %cst_153 = arith.constant 5.000000e-01 : f32
    %339 = vector.broadcast %cst_153 : f32 to vector<32x64xf32>
    %340 = arith.mulf %339, %338 : vector<32x64xf32>
    %cst_154 = arith.constant 0.707106769 : f32
    %341 = vector.broadcast %cst_154 : f32 to vector<32x64xf32>
    %342 = arith.mulf %338, %341 : vector<32x64xf32>
    %cst_155 = arith.constant 0.000000e+00 : f32
    %343 = vector.broadcast %cst_155 : f32 to vector<32x64xf32>
    %344 = arith.cmpf oge, %342, %343 : vector<32x64xf32>
    %cst_156 = arith.constant 1.000000e+00 : f32
    %cst_157 = arith.constant -1.000000e+00 : f32
    %345 = vector.broadcast %cst_156 : f32 to vector<32x64xf32>
    %346 = vector.broadcast %cst_157 : f32 to vector<32x64xf32>
    %347 = arith.select %344, %345, %346 : vector<32x64xi1>, vector<32x64xf32>
    %348 = math.absf %342 : vector<32x64xf32>
    %cst_158 = arith.constant 0.327591091 : f32
    %349 = vector.broadcast %cst_158 : f32 to vector<32x64xf32>
    %350 = arith.mulf %349, %348 : vector<32x64xf32>
    %cst_159 = arith.constant 1.000000e+00 : f32
    %351 = vector.broadcast %cst_159 : f32 to vector<32x64xf32>
    %352 = arith.addf %351, %350 : vector<32x64xf32>
    %353 = tpu.reciprocal %352 : vector<32x64xf32> -> vector<32x64xf32>
    %cst_160 = arith.constant 1.06140542 : f32
    %354 = vector.broadcast %cst_160 : f32 to vector<32x64xf32>
    %355 = arith.mulf %354, %353 : vector<32x64xf32>
    %cst_161 = arith.constant -1.45315206 : f32
    %356 = vector.broadcast %cst_161 : f32 to vector<32x64xf32>
    %357 = arith.addf %355, %356 : vector<32x64xf32>
    %358 = arith.mulf %357, %353 : vector<32x64xf32>
    %cst_162 = arith.constant 1.42141378 : f32
    %359 = vector.broadcast %cst_162 : f32 to vector<32x64xf32>
    %360 = arith.addf %358, %359 : vector<32x64xf32>
    %361 = arith.mulf %360, %353 : vector<32x64xf32>
    %cst_163 = arith.constant -0.284496725 : f32
    %362 = vector.broadcast %cst_163 : f32 to vector<32x64xf32>
    %363 = arith.addf %361, %362 : vector<32x64xf32>
    %364 = arith.mulf %363, %353 : vector<32x64xf32>
    %cst_164 = arith.constant 0.254829586 : f32
    %365 = vector.broadcast %cst_164 : f32 to vector<32x64xf32>
    %366 = arith.addf %364, %365 : vector<32x64xf32>
    %367 = arith.mulf %366, %353 : vector<32x64xf32>
    %cst_165 = arith.constant 0.000000e+00 : f32
    %368 = vector.broadcast %cst_165 : f32 to vector<32x64xf32>
    %369 = arith.subf %368, %348 : vector<32x64xf32>
    %370 = arith.mulf %369, %348 : vector<32x64xf32>
    %371 = math.exp %370 : vector<32x64xf32>
    %372 = arith.mulf %367, %371 : vector<32x64xf32>
    %cst_166 = arith.constant 1.000000e+00 : f32
    %373 = vector.broadcast %cst_166 : f32 to vector<32x64xf32>
    %374 = arith.subf %373, %372 : vector<32x64xf32>
    %375 = arith.mulf %347, %374 : vector<32x64xf32>
    %cst_167 = arith.constant 1.000000e+00 : f32
    %376 = vector.broadcast %cst_167 : f32 to vector<32x64xf32>
    %377 = arith.addf %376, %375 : vector<32x64xf32>
    %378 = arith.mulf %340, %377 : vector<32x64xf32>
    %c1_168 = arith.constant 1 : index
    %c0_169 = arith.constant 0 : index
    %c0_170 = arith.constant 0 : index
    %379 = vector.load %arg16[%c1_168, %c0_169, %c0_170] : memref<2x64x32xf32, #tpu.memory_space<vmem>>, vector<1x64x32xf32>
    %380 = vector.shape_cast %379 : vector<1x64x32xf32> to vector<64x32xf32>
    %cst_171 = arith.constant dense<0.000000e+00> : vector<32x32xf32>
    %381 = tpu.matmul %378, %380, %cst_171 {dimension_numbers = #tpu.dot_dimension_numbers<[1], [0], [0], [1], [0, 0, 1, 1], [], []>} : vector<32x64xf32>, vector<64x32xf32>, vector<32x32xf32> -> vector<32x32xf32>
    %382 = arith.addf %305, %381 : vector<32x32xf32>
    %c1_172 = arith.constant 1 : index
    %c0_173 = arith.constant 0 : index
    %c0_174 = arith.constant 0 : index
    %383 = vector.load %arg17[%c1_172, %c0_173, %c0_174] : memref<2x1x32xf32, #tpu.memory_space<vmem>>, vector<1x1x32xf32>
    %384 = vector.shape_cast %383 : vector<1x1x32xf32> to vector<1x32xf32>
    %385 = vector.broadcast %384 : vector<1x32xf32> to vector<32x32xf32>
    %386 = arith.addf %382, %385 : vector<32x32xf32>
    %c0_175 = arith.constant 0 : index
    %c0_176 = arith.constant 0 : index
    %387 = vector.load %arg22[%c0_175, %c0_176] : memref<2x32xf32, #tpu.memory_space<vmem>>, vector<2x32xf32>
    %cst_177 = arith.constant dense<0.000000e+00> : vector<2x32xf32>
    %388 = tpu.matmul %387, %386, %cst_177 {dimension_numbers = #tpu.dot_dimension_numbers<[1], [0], [0], [1], [0, 0, 1, 1], [], []>} : vector<2x32xf32>, vector<32x32xf32>, vector<2x32xf32> -> vector<2x32xf32>
    %c0_178 = arith.constant 0 : index
    %c0_179 = arith.constant 0 : index
    %389 = vector.load %arg18[%c0_178, %c0_179] : memref<1x32xf32, #tpu.memory_space<vmem>>, vector<1x32xf32>
    %c0_180 = arith.constant 0 : index
    %c0_181 = arith.constant 0 : index
    %390 = vector.load %arg19[%c0_180, %c0_181] : memref<1x32xf32, #tpu.memory_space<vmem>>, vector<1x32xf32>
    %cst_182 = arith.constant dense<0.000000e+00> : vector<2xf32>
    %391 = vector.multi_reduction <add>, %388, %cst_182 [1] : vector<2x32xf32> to vector<2xf32>
    %392 = vector.shape_cast %391 : vector<2xf32> to vector<2x1xf32>
    %cst_183 = arith.constant 3.200000e+01 : f32
    %393 = vector.broadcast %cst_183 : f32 to vector<2x1xf32>
    %394 = arith.divf %392, %393 : vector<2x1xf32>
    %395 = vector.broadcast %394 : vector<2x1xf32> to vector<2x32xf32>
    %396 = arith.subf %388, %395 : vector<2x32xf32>
    %397 = arith.mulf %396, %396 : vector<2x32xf32>
    %cst_184 = arith.constant dense<0.000000e+00> : vector<2xf32>
    %398 = vector.multi_reduction <add>, %397, %cst_184 [1] : vector<2x32xf32> to vector<2xf32>
    %399 = vector.shape_cast %398 : vector<2xf32> to vector<2x1xf32>
    %cst_185 = arith.constant 3.200000e+01 : f32
    %400 = vector.broadcast %cst_185 : f32 to vector<2x1xf32>
    %401 = arith.divf %399, %400 : vector<2x1xf32>
    %402 = vector.broadcast %394 : vector<2x1xf32> to vector<2x32xf32>
    %403 = arith.subf %388, %402 : vector<2x32xf32>
    %cst_186 = arith.constant 9.99999974E-6 : f32
    %404 = vector.broadcast %cst_186 : f32 to vector<2x1xf32>
    %405 = arith.addf %401, %404 : vector<2x1xf32>
    %406 = math.rsqrt %405 : vector<2x1xf32>
    %407 = vector.broadcast %406 : vector<2x1xf32> to vector<2x32xf32>
    %408 = arith.mulf %403, %407 : vector<2x32xf32>
    %409 = vector.broadcast %389 : vector<1x32xf32> to vector<2x32xf32>
    %410 = arith.mulf %408, %409 : vector<2x32xf32>
    %411 = vector.broadcast %390 : vector<1x32xf32> to vector<2x32xf32>
    %412 = arith.addf %410, %411 : vector<2x32xf32>
    %c0_187 = arith.constant 0 : index
    %c0_188 = arith.constant 0 : index
    %413 = vector.load %arg20[%c0_187, %c0_188] : memref<32x16xf32, #tpu.memory_space<vmem>>, vector<32x16xf32>
    %cst_189 = arith.constant dense<0.000000e+00> : vector<2x16xf32>
    %414 = tpu.matmul %412, %413, %cst_189 {dimension_numbers = #tpu.dot_dimension_numbers<[1], [0], [0], [1], [0, 0, 1, 1], [], []>} : vector<2x32xf32>, vector<32x16xf32>, vector<2x16xf32> -> vector<2x16xf32>
    %c0_190 = arith.constant 0 : index
    %c0_191 = arith.constant 0 : index
    %415 = vector.load %arg21[%c0_190, %c0_191] : memref<1x16xf32, #tpu.memory_space<vmem>>, vector<1x16xf32>
    %416 = vector.broadcast %415 : vector<1x16xf32> to vector<2x16xf32>
    %417 = arith.addf %414, %416 : vector<2x16xf32>
    %c0_192 = arith.constant 0 : index
    %c0_193 = arith.constant 0 : index
    %418 = vector.load %arg23[%c0_192, %c0_193] : memref<2x16xf32, #tpu.memory_space<vmem>>, vector<2x16xf32>
    tpu.vector_store %arg23[%c0_192, %c0_193], %417 {strides = array<i32>} : memref<2x16xf32, #tpu.memory_space<vmem>>, vector<2x16xf32>,
    return
  }
}

</mosaic_0001>

<llo_original>
// kernel: fvit_forward.1
$region0: #{fvit_forward.1}
  #allocation0 [shape = 'u32[]', space=smem, size = 0x4, offset = 0x4, fixed_abs, tag = 'smem constant byte address 0x4 - core index']
  #allocation1 [shape = 'u32[144,128]{1,0:T(1,128)}', space=vmem, size = 0x12000, scoped, tag = 'internal scratch']
  %s0 = inlined_call_operand.vmem [shape: f32[16,48], index: 0, kind: input, shape index: {}]
  %s1 = inlined_call_operand.vmem [shape: f32[16,4], index: 1, kind: input, shape index: {}]
  %s2 = inlined_call_operand.vmem [shape: f32[8,32], index: 2, kind: input, shape index: {}]
  %s3 = inlined_call_operand.vmem [shape: f32[48,32], index: 3, kind: input, shape index: {}]
  %s4 = inlined_call_operand.vmem [shape: f32[1,32], index: 4, kind: input, shape index: {}]
  %s5 = inlined_call_operand.vmem [shape: f32[4,32], index: 5, kind: input, shape index: {}]
  %s6 = inlined_call_operand.vmem [shape: f32[1,32], index: 6, kind: input, shape index: {}]
  %s7 = inlined_call_operand.vmem [shape: f32[2,1,32], index: 7, kind: input, shape index: {}]
  %s8 = inlined_call_operand.vmem [shape: f32[2,1,32], index: 8, kind: input, shape index: {}]
  %s9 = inlined_call_operand.vmem [shape: f32[2,32,96], index: 9, kind: input, shape index: {}]
  %s10 = inlined_call_operand.vmem [shape: f32[2,32,32], index: 10, kind: input, shape index: {}]
  %s11 = inlined_call_operand.vmem [shape: f32[2,1,32], index: 11, kind: input, shape index: {}]
  %s12 = inlined_call_operand.vmem [shape: f32[2,1,32], index: 12, kind: input, shape index: {}]
  %s13 = inlined_call_operand.vmem [shape: f32[2,1,32], index: 13, kind: input, shape index: {}]
  %s14 = inlined_call_operand.vmem [shape: f32[2,32,64], index: 14, kind: input, shape index: {}]
  %s15 = inlined_call_operand.vmem [shape: f32[2,1,64], index: 15, kind: input, shape index: {}]
  %s16 = inlined_call_operand.vmem [shape: f32[2,64,32], index: 16, kind: input, shape index: {}]
  %s17 = inlined_call_operand.vmem [shape: f32[2,1,32], index: 17, kind: input, shape index: {}]
  %s18 = inlined_call_operand.vmem [shape: f32[1,32], index: 18, kind: input, shape index: {}]
  %s19 = inlined_call_operand.vmem [shape: f32[1,32], index: 19, kind: input, shape index: {}]
  %s20 = inlined_call_operand.vmem [shape: f32[32,16], index: 20, kind: input, shape index: {}]
  %s21 = inlined_call_operand.vmem [shape: f32[1,16], index: 21, kind: input, shape index: {}]
  %s22 = inlined_call_operand.vmem [shape: f32[2,32], index: 22, kind: input, shape index: {}]
  %s23 = inlined_call_operand.hbm [shape: f32[2,16], index: 23, kind: output, shape index: {}]
  %s24 = sld [smem:[#allocation0]]
  $region102: #{fvit_forward.1} parent=0
    _
  %s26 = ssub.s32 1, %s24
  %s27 = scalar_select 0, %s26, %s24
  $region1: #{fvit_forward.1} parent=0
    #allocation2 [shape = 'u8[1024]{0}', space=vmem, size = 0x400, scoped, tag = 'output window, operand 0, single buffered']
    #allocation3 [shape = 's32[1]{0}', space=sflag, size = 0x4, scoped, tag = 'scoped memory for fvit_forward.1']
    %28 = vsyncpa [#allocation3], 0
    // Predicated region
    $region2: #{fvit_forward.1} parent=1 // pred_check
      _
    $region3: #{fvit_forward.1} parent=1 // pred_check_branch
      %30 = sbr.rel (0) target = $region5
    $region4: #{fvit_forward.1} parent=1 // pred_region
      _
    $region5: #{fvit_forward.1} parent=1 // pred_fallthru
      _
    // Predicated region
    $region6: #{fvit_forward.1} parent=1 // pred_check
      _
    $region7: #{fvit_forward.1} parent=1 // pred_check_branch
      %32 = sbr.rel (0) target = $region9
    $region8: #{fvit_forward.1} parent=1 // pred_region
      _
    $region9: #{fvit_forward.1} parent=1 // pred_fallthru
      _
    // Predicated region
    $region10: #{fvit_forward.1} parent=1 // pred_check
      _
    $region11: #{fvit_forward.1} parent=1 // pred_check_branch
      %34 = sbr.rel (0) target = $region13
    $region12: #{fvit_forward.1} parent=1 // pred_region
      _
    $region13: #{fvit_forward.1} parent=1 // pred_fallthru
      _
    // Predicated region
    $region14: #{fvit_forward.1} parent=1 // pred_check
      _
    $region15: #{fvit_forward.1} parent=1 // pred_check_branch
      %36 = sbr.rel (0) target = $region17
    $region16: #{fvit_forward.1} parent=1 // pred_region
      _
    $region17: #{fvit_forward.1} parent=1 // pred_fallthru
      _
    // Predicated region
    $region18: #{fvit_forward.1} parent=1 // pred_check
      _
    $region19: #{fvit_forward.1} parent=1 // pred_check_branch
      %38 = sbr.rel (0) target = $region21
    $region20: #{fvit_forward.1} parent=1 // pred_region
      _
    $region21: #{fvit_forward.1} parent=1 // pred_fallthru
      _
    // Predicated region
    $region22: #{fvit_forward.1} parent=1 // pred_check
      _
    $region23: #{fvit_forward.1} parent=1 // pred_check_branch
      %40 = sbr.rel (0) target = $region25
    $region24: #{fvit_forward.1} parent=1 // pred_region
      _
    $region25: #{fvit_forward.1} parent=1 // pred_fallthru
      _
    // Predicated region
    $region26: #{fvit_forward.1} parent=1 // pred_check
      _
    $region27: #{fvit_forward.1} parent=1 // pred_check_branch
      %42 = sbr.rel (0) target = $region29
    $region28: #{fvit_forward.1} parent=1 // pred_region
      _
    $region29: #{fvit_forward.1} parent=1 // pred_fallthru
      _
    // Predicated region
    $region30: #{fvit_forward.1} parent=1 // pred_check
      _
    $region31: #{fvit_forward.1} parent=1 // pred_check_branch
      %44 = sbr.rel (0) target = $region33
    $region32: #{fvit_forward.1} parent=1 // pred_region
      _
    $region33: #{fvit_forward.1} parent=1 // pred_fallthru
      _
    // Predicated region
    $region34: #{fvit_forward.1} parent=1 // pred_check
      _
    $region35: #{fvit_forward.1} parent=1 // pred_check_branch
      %46 = sbr.rel (0) target = $region37
    $region36: #{fvit_forward.1} parent=1 // pred_region
      _
    $region37: #{fvit_forward.1} parent=1 // pred_fallthru
      _
    // Predicated region
    $region38: #{fvit_forward.1} parent=1 // pred_check
      _
    $region39: #{fvit_forward.1} parent=1 // pred_check_branch
      %48 = sbr.rel (0) target = $region41
    $region40: #{fvit_forward.1} parent=1 // pred_region
      _
    $region41: #{fvit_forward.1} parent=1 // pred_fallthru
      _
    // Predicated region
    $region42: #{fvit_forward.1} parent=1 // pred_check
      _
    $region43: #{fvit_forward.1} parent=1 // pred_check_branch
      %50 = sbr.rel (0) target = $region45
    $region44: #{fvit_forward.1} parent=1 // pred_region
      _
    $region45: #{fvit_forward.1} parent=1 // pred_fallthru
      _
    // Predicated region
    $region46: #{fvit_forward.1} parent=1 // pred_check
      _
    $region47: #{fvit_forward.1} parent=1 // pred_check_branch
      %52 = sbr.rel (0) target = $region49
    $region48: #{fvit_forward.1} parent=1 // pred_region
      _
    $region49: #{fvit_forward.1} parent=1 // pred_fallthru
      _
    // Predicated region
    $region50: #{fvit_forward.1} parent=1 // pred_check
      _
    $region51: #{fvit_forward.1} parent=1 // pred_check_branch
      %54 = sbr.rel (0) target = $region53
    $region52: #{fvit_forward.1} parent=1 // pred_region
      _
    $region53: #{fvit_forward.1} parent=1 // pred_fallthru
      _
    // Predicated region
    $region54: #{fvit_forward.1} parent=1 // pred_check
      _
    $region55: #{fvit_forward.1} parent=1 // pred_check_branch
      %56 = sbr.rel (0) target = $region57
    $region56: #{fvit_forward.1} parent=1 // pred_region
      _
    $region57: #{fvit_forward.1} parent=1 // pred_fallthru
      _
    // Predicated region
    $region58: #{fvit_forward.1} parent=1 // pred_check
      _
    $region59: #{fvit_forward.1} parent=1 // pred_check_branch
      %58 = sbr.rel (0) target = $region61
    $region60: #{fvit_forward.1} parent=1 // pred_region
      _
    $region61: #{fvit_forward.1} parent=1 // pred_fallthru
      _
    // Predicated region
    $region62: #{fvit_forward.1} parent=1 // pred_check
      _
    $region63: #{fvit_forward.1} parent=1 // pred_check_branch
      %60 = sbr.rel (0) target = $region65
    $region64: #{fvit_forward.1} parent=1 // pred_region
      _
    $region65: #{fvit_forward.1} parent=1 // pred_fallthru
      _
    // Predicated region
    $region66: #{fvit_forward.1} parent=1 // pred_check
      _
    $region67: #{fvit_forward.1} parent=1 // pred_check_branch
      %62 = sbr.rel (0) target = $region69
    $region68: #{fvit_forward.1} parent=1 // pred_region
      _
    $region69: #{fvit_forward.1} parent=1 // pred_fallthru
      _
    // Predicated region
    $region70: #{fvit_forward.1} parent=1 // pred_check
      _
    $region71: #{fvit_forward.1} parent=1 // pred_check_branch
      %64 = sbr.rel (0) target = $region73
    $region72: #{fvit_forward.1} parent=1 // pred_region
      _
    $region73: #{fvit_forward.1} parent=1 // pred_fallthru
      _
    // Predicated region
    $region74: #{fvit_forward.1} parent=1 // pred_check
      _
    $region75: #{fvit_forward.1} parent=1 // pred_check_branch
      %66 = sbr.rel (0) target = $region77
    $region76: #{fvit_forward.1} parent=1 // pred_region
      _
    $region77: #{fvit_forward.1} parent=1 // pred_fallthru
      _
    // Predicated region
    $region78: #{fvit_forward.1} parent=1 // pred_check
      _
    $region79: #{fvit_forward.1} parent=1 // pred_check_branch
      %68 = sbr.rel (0) target = $region81
    $region80: #{fvit_forward.1} parent=1 // pred_region
      _
    $region81: #{fvit_forward.1} parent=1 // pred_fallthru
      _
    // Predicated region
    $region82: #{fvit_forward.1} parent=1 // pred_check
      _
    $region83: #{fvit_forward.1} parent=1 // pred_check_branch
      %70 = sbr.rel (0) target = $region85
    $region84: #{fvit_forward.1} parent=1 // pred_region
      _
    $region85: #{fvit_forward.1} parent=1 // pred_fallthru
      _
    // Predicated region
    $region86: #{fvit_forward.1} parent=1 // pred_check
      _
    $region87: #{fvit_forward.1} parent=1 // pred_check_branch
      %72 = sbr.rel (0) target = $region89
    $region88: #{fvit_forward.1} parent=1 // pred_region
      _
    $region89: #{fvit_forward.1} parent=1 // pred_fallthru
      _
    // Predicated region
    $region90: #{fvit_forward.1} parent=1 // pred_check
      _
    $region91: #{fvit_forward.1} parent=1 // pred_check_branch
      %74 = sbr.rel (0) target = $region93
    $region92: #{fvit_forward.1} parent=1 // pred_region
      _
    $region93: #{fvit_forward.1} parent=1 // pred_fallthru
      _
    %v75 = vlaneseq
    %v76 = vand.u32 %v75, 127
    %vm77 = vcmp.lt.s32.totalorder %v76, 9
    %v78 = vsel %vm77, 0.0, -1e+30
    %v79 = vld [vmem:[%s0] sm:$0xff]
    %v80 = vld [vmem:[%s0 + $0x8] sm:$0xff]
    %v81 = vld [vmem:[%s3] sm:$0xff]
    %v82 = vld [vmem:[%s3 + $0x8] sm:$0xff]
    %v83 = vld [vmem:[%s3 + $0x10] sm:$0xff]
    %v84 = vld [vmem:[%s3 + $0x18] sm:$0xff]
    %v85 = vld [vmem:[%s3 + $0x20] sm:$0xff]
    %v86 = vld [vmem:[%s3 + $0x28] sm:$0xff]
    %v87 = vld [vmem:[%s4] sm:$0x1]
    %v89 = vlaneseq
    %v90 = vshrl.u32 %v89, 7
    %v91 = vsub.s32 0, %v90
    %v92 = vrot.slane %v87, %v91
    %vm94 = vcmask 392192
    %v96 = vsel %vm94, %v79, 0
    %v99 = vsel %vm94, %v80, 0
    %101 = vmatprep.subr.mxu0 0.0
    %102 = vmatpush1.msra.mxu0 %v81
    %103 = vmatprep.subr.mxu0 0.0
    %104 = vmatpush1.msra.mxu0 %v82
    %105 = vmatprep.subr.mxu0 0.0
    %106 = vmatpush1.msra.mxu0 %v83
    %107 = vmatprep.subr.mxu0 0.0
    %108 = vmatpush1.msra.mxu0 %v84
    %109 = vmatprep.subr.mxu0 0.0
    %110 = vmatpush1.msra.mxu0 %v85
    %111 = vmatprep.subr.mxu0 0.0
    %112 = vmatpush1.msra.mxu0 %v86
    %113 = vmatprep.subr.mxu0 0.0
    %114 = vmatpush1.msra.mxu0 0.0
    %115 = vmatprep.subr.mxu0 0.0
    %116 = vmatpush1.msra.mxu0 0.0
    %117 = vmatprep.subr.mxu0 0.0
    %118 = vmatpush1.msra.mxu0 0.0
    %119 = vmatprep.subr.mxu0 0.0
    %120 = vmatpush1.msra.mxu0 0.0
    %121 = vmatprep.subr.mxu0 0.0
    %122 = vmatpush1.msra.mxu0 0.0
    %123 = vmatprep.subr.mxu0 0.0
    %124 = vmatpush1.msra.mxu0 0.0
    %125 = vmatprep.subr.mxu0 0.0
    %126 = vmatpush1.msra.mxu0 0.0
    %127 = vmatprep.subr.mxu0 0.0
    %128 = vmatpush1.msra.mxu0 0.0
    %129 = vmatprep.subr.mxu0 0.0
    %130 = vmatpush1.msra.mxu0 0.0
    %131 = vmatprep.subr.mxu0 0.0
    %132 = vmatpush1.msra.mxu0 0.0
    %133 = vmatprep.subr.mxu0 0.0
    %134 = vmatpush1.msra.mxu0 0.0
    %135 = vmatprep.subr.mxu0 0.0
    %136 = vmatpush1.msra.mxu0 0.0
    %137 = vmatprep.subr.mxu0 0.0
    %138 = vmatpush1.msra.mxu0 0.0
    %139 = vmatprep.subr.mxu0 0.0
    %140 = vmatpush1.msra.mxu0 0.0
    %141 = vmatprep.subr.mxu0 0.0
    %142 = vmatpush1.msra.mxu0 0.0
    %143 = vmatprep.subr.mxu0 0.0
    %144 = vmatpush1.msra.mxu0 0.0
    %145 = vmatprep.subr.mxu0 0.0
    %146 = vmatpush1.msra.mxu0 0.0
    %147 = vmatprep.subr.mxu0 0.0
    %148 = vmatpush1.msra.mxu0 0.0
    %149 = vmatprep.subr.mxu0 0.0
    %150 = vmatpush1.msra.mxu0 0.0
    %151 = vmatprep.subr.mxu0 0.0
    %152 = vmatpush1.msra.mxu0 0.0
    %153 = vmatprep.subr.mxu0 0.0
    %154 = vmatpush1.msra.mxu0 0.0
    %155 = vmatprep.subr.mxu0 0.0
    %156 = vmatpush1.msra.mxu0 0.0
    %157 = vmatprep.subr.mxu0 0.0
    %158 = vmatpush1.msra.mxu0 0.0
    %159 = vmatprep.subr.mxu0 0.0
    %160 = vmatpush1.msra.mxu0 0.0
    %161 = vmatprep.subr.mxu0 0.0
    %162 = vmatpush1.msra.mxu0 0.0
    %163 = vmatprep.subr.mxu0 0.0
    %164 = vmatpush1.msra.mxu0 0.0
    %165 = vmatprep.mubr.f32.mxu0 0.0
    %166 = vmatmul.mubr.f32.gmra.mrb[0].mxu0 %v96
    %v167 = vpop.f32.mrb[0].mxu0
    %v168 = vadd.f32 %v92, %v167
    %v169 = vpop.f32.mrb[0].mxu0
    %170 = vmatprep.mubr.f32.mxu0 0.0
    %171 = vmatmul.mubr.f32.gmra.mrb[0].mxu0 %v99
    %v172 = vpop.f32.mrb[0].mxu0
    %v173 = vadd.f32 %v92, %v172
    %v174 = vpop.f32.mrb[0].mxu0
    %175 = vdwg.mxu0
    %v176 = vld [vmem:[%s1] sm:$0xff]
    %v177 = vld [vmem:[%s1 + $0x8] sm:$0xff]
    %v178 = vld [vmem:[%s5] sm:$0xf]
    %v179 = vld [vmem:[%s6] sm:$0x1]
    %v181 = vlaneseq
    %v182 = vshrl.u32 %v181, 7
    %v183 = vsub.s32 0, %v182
    %v184 = vrot.slane %v179, %v183
    %vm186 = vcmask 31744
    %v188 = vsel %vm186, %v176, 0
    %v191 = vsel %vm186, %v177, 0
    %vm193 = vcmask 1043456
    %v195 = vsel %vm193, %v178, 0
    %197 = vmatprep.subr.mxu0 0.0
    %198 = vmatpush1.msra.mxu0 %v195
    %199 = vmatprep.subr.mxu0 0.0
    %200 = vmatpush1.msra.mxu0 0.0
    %201 = vmatprep.subr.mxu0 0.0
    %202 = vmatpush1.msra.mxu0 0.0
    %203 = vmatprep.subr.mxu0 0.0
    %204 = vmatpush1.msra.mxu0 0.0
    %205 = vmatprep.subr.mxu0 0.0
    %206 = vmatpush1.msra.mxu0 0.0
    %207 = vmatprep.subr.mxu0 0.0
    %208 = vmatpush1.msra.mxu0 0.0
    %209 = vmatprep.subr.mxu0 0.0
    %210 = vmatpush1.msra.mxu0 0.0
    %211 = vmatprep.subr.mxu0 0.0
    %212 = vmatpush1.msra.mxu0 0.0
    %213 = vmatprep.subr.mxu0 0.0
    %214 = vmatpush1.msra.mxu0 0.0
    %215 = vmatprep.subr.mxu0 0.0
    %216 = vmatpush1.msra.mxu0 0.0
    %217 = vmatprep.subr.mxu0 0.0
    %218 = vmatpush1.msra.mxu0 0.0
    %219 = vmatprep.subr.mxu0 0.0
    %220 = vmatpush1.msra.mxu0 0.0
    %221 = vmatprep.subr.mxu0 0.0
    %222 = vmatpush1.msra.mxu0 0.0
    %223 = vmatprep.subr.mxu0 0.0
    %224 = vmatpush1.msra.mxu0 0.0
    %225 = vmatprep.subr.mxu0 0.0
    %226 = vmatpush1.msra.mxu0 0.0
    %227 = vmatprep.subr.mxu0 0.0
    %228 = vmatpush1.msra.mxu0 0.0
    %229 = vmatprep.subr.mxu0 0.0
    %230 = vmatpush1.msra.mxu0 0.0
    %231 = vmatprep.subr.mxu0 0.0
    %232 = vmatpush1.msra.mxu0 0.0
    %233 = vmatprep.subr.mxu0 0.0
    %234 = vmatpush1.msra.mxu0 0.0
    %235 = vmatprep.subr.mxu0 0.0
    %236 = vmatpush1.msra.mxu0 0.0
    %237 = vmatprep.subr.mxu0 0.0
    %238 = vmatpush1.msra.mxu0 0.0
    %239 = vmatprep.subr.mxu0 0.0
    %240 = vmatpush1.msra.mxu0 0.0
    %241 = vmatprep.subr.mxu0 0.0
    %242 = vmatpush1.msra.mxu0 0.0
    %243 = vmatprep.subr.mxu0 0.0
    %244 = vmatpush1.msra.mxu0 0.0
    %245 = vmatprep.subr.mxu0 0.0
    %246 = vmatpush1.msra.mxu0 0.0
    %247 = vmatprep.subr.mxu0 0.0
    %248 = vmatpush1.msra.mxu0 0.0
    %249 = vmatprep.subr.mxu0 0.0
    %250 = vmatpush1.msra.mxu0 0.0
    %251 = vmatprep.subr.mxu0 0.0
    %252 = vmatpush1.msra.mxu0 0.0
    %253 = vmatprep.subr.mxu0 0.0
    %254 = vmatpush1.msra.mxu0 0.0
    %255 = vmatprep.subr.mxu0 0.0
    %256 = vmatpush1.msra.mxu0 0.0
    %257 = vmatprep.subr.mxu0 0.0
    %258 = vmatpush1.msra.mxu0 0.0
    %259 = vmatprep.subr.mxu0 0.0
    %260 = vmatpush1.msra.mxu0 0.0
    %261 = vmatprep.mubr.f32.mxu0 0.0
    %262 = vmatmul.mubr.f32.gmra.mrb[0].mxu0 %v188
    %v263 = vpop.f32.mrb[0].mxu0
    %v264 = vadd.f32 %v184, %v263
    %v265 = vpop.f32.mrb[0].mxu0
    %266 = vmatprep.mubr.f32.mxu0 0.0
    %267 = vmatmul.mubr.f32.gmra.mrb[0].mxu0 %v191
    %v268 = vpop.f32.mrb[0].mxu0
    %v269 = vadd.f32 %v184, %v268
    %v270 = vpop.f32.mrb[0].mxu0
    %271 = vdwg.mxu0
    %v272 = vadd.f32 %v168, %v264
    %v273 = vadd.f32 %v173, %v269
    %v274 = vld [vmem:[%s2] sm:$0xff]
    %v275 = vld [vmem:[%s7] sm:$0x1]
    %v276 = vld [vmem:[%s8] sm:$0x1]
    %vm277 = vcmask 261120
    %v278 = vsel %vm277, %v272, 0.0
    %279 = vadd.xlane.f32.xlu0 %v278
    %v280 = vpop.xlane.xlu0 %279
    %v281 = vsel %vm277, %v274, 0.0
    %282 = vadd.xlane.f32.xlu0 %v281
    %v283 = vpop.xlane.xlu0 %282
    %v284 = vsel %vm277, %v273, 0.0
    %285 = vadd.xlane.f32.xlu0 %v284
    %v286 = vpop.xlane.xlu0 %285
    %v287 = vrcp.pop 32.0
    %v288 = vmul.f32 %v280, %v287
    %v289 = vmul.f32 %v283, %v287
    %v290 = vmul.f32 %v286, %v287
    %v291 = vsub.f32 %v272, %v288
    %v292 = vsub.f32 %v274, %v289
    %v293 = vsub.f32 %v273, %v290
    %v294 = vmul.f32 %v291, %v291
    %v295 = vmul.f32 %v292, %v292
    %v296 = vmul.f32 %v293, %v293
    %v297 = vsel %vm277, %v294, 0.0
    %298 = vadd.xlane.f32.xlu0 %v297
    %v299 = vpop.xlane.xlu0 %298
    %v300 = vsel %vm277, %v295, 0.0
    %301 = vadd.xlane.f32.xlu0 %v300
    %v302 = vpop.xlane.xlu0 %301
    %v303 = vsel %vm277, %v296, 0.0
    %304 = vadd.xlane.f32.xlu0 %v303
    %v305 = vpop.xlane.xlu0 %304
    %v306 = vmul.f32 %v299, %v287
    %v307 = vmul.f32 %v302, %v287
    %v308 = vmul.f32 %v305, %v287
    %v309 = vadd.f32 %v306, 1e-05
    %v310 = vadd.f32 %v307, 1e-05
    %v311 = vadd.f32 %v308, 1e-05
    %v312 = vrsqrt.pop %v309
    %v313 = vrsqrt.pop %v310
    %v314 = vrsqrt.pop %v311
    %v315 = vmul.f32 %v291, %v312
    %v316 = vmul.f32 %v292, %v313
    %v317 = vmul.f32 %v293, %v314
    %v319 = vlaneseq
    %v320 = vshrl.u32 %v319, 7
    %v321 = vsub.s32 0, %v320
    %v322 = vrot.slane %v275, %v321
    %v324 = vmul.f32 %v315, %v322
    %v325 = vmul.f32 %v316, %v322
    %v326 = vmul.f32 %v317, %v322
    %v328 = vlaneseq
    %v329 = vshrl.u32 %v328, 7
    %v330 = vsub.s32 0, %v329
    %v331 = vrot.slane %v276, %v330
    %v333 = vadd.f32 %v324, %v331
    %v334 = vadd.f32 %v325, %v331
    %v335 = vadd.f32 %v326, %v331
    %v336 = vld [vmem:[%s9] sm:$0xff]
    %v337 = vld [vmem:[%s9 + $0x8] sm:$0xff]
    %v338 = vld [vmem:[%s9 + $0x10] sm:$0xff]
    %v339 = vld [vmem:[%s9 + $0x18] sm:$0xff]
    %v341 = vsel %vm277, %v333, 0
    %v344 = vsel %vm277, %v334, 0
    %v347 = vsel %vm277, %v335, 0
    %349 = vmatprep.subr.mxu0 0.0
    %350 = vmatpush1.msra.mxu0 %v336
    %351 = vmatprep.subr.mxu0 0.0
    %352 = vmatpush1.msra.mxu0 %v337
    %353 = vmatprep.subr.mxu0 0.0
    %354 = vmatpush1.msra.mxu0 %v338
    %355 = vmatprep.subr.mxu0 0.0
    %356 = vmatpush1.msra.mxu0 %v339
    %357 = vmatprep.subr.mxu0 0.0
    %358 = vmatpush1.msra.mxu0 0.0
    %359 = vmatprep.subr.mxu0 0.0
    %360 = vmatpush1.msra.mxu0 0.0
    %361 = vmatprep.subr.mxu0 0.0
    %362 = vmatpush1.msra.mxu0 0.0
    %363 = vmatprep.subr.mxu0 0.0
    %364 = vmatpush1.msra.mxu0 0.0
    %365 = vmatprep.subr.mxu0 0.0
    %366 = vmatpush1.msra.mxu0 0.0
    %367 = vmatprep.subr.mxu0 0.0
    %368 = vmatpush1.msra.mxu0 0.0
    %369 = vmatprep.subr.mxu0 0.0
    %370 = vmatpush1.msra.mxu0 0.0
    %371 = vmatprep.subr.mxu0 0.0
    %372 = vmatpush1.msra.mxu0 0.0
    %373 = vmatprep.subr.mxu0 0.0
    %374 = vmatpush1.msra.mxu0 0.0
    %375 = vmatprep.subr.mxu0 0.0
    %376 = vmatpush1.msra.mxu0 0.0
    %377 = vmatprep.subr.mxu0 0.0
    %378 = vmatpush1.msra.mxu0 0.0
    %379 = vmatprep.subr.mxu0 0.0
    %380 = vmatpush1.msra.mxu0 0.0
    %381 = vmatprep.subr.mxu0 0.0
    %382 = vmatpush1.msra.mxu0 0.0
    %383 = vmatprep.subr.mxu0 0.0
    %384 = vmatpush1.msra.mxu0 0.0
    %385 = vmatprep.subr.mxu0 0.0
    %386 = vmatpush1.msra.mxu0 0.0
    %387 = vmatprep.subr.mxu0 0.0
    %388 = vmatpush1.msra.mxu0 0.0
    %389 = vmatprep.subr.mxu0 0.0
    %390 = vmatpush1.msra.mxu0 0.0
    %391 = vmatprep.subr.mxu0 0.0
    %392 = vmatpush1.msra.mxu0 0.0
    %393 = vmatprep.subr.mxu0 0.0
    %394 = vmatpush1.msra.mxu0 0.0
    %395 = vmatprep.subr.mxu0 0.0
    %396 = vmatpush1.msra.mxu0 0.0
    %397 = vmatprep.subr.mxu0 0.0
    %398 = vmatpush1.msra.mxu0 0.0
    %399 = vmatprep.subr.mxu0 0.0
    %400 = vmatpush1.msra.mxu0 0.0
    %401 = vmatprep.subr.mxu0 0.0
    %402 = vmatpush1.msra.mxu0 0.0
    %403 = vmatprep.subr.mxu0 0.0
    %404 = vmatpush1.msra.mxu0 0.0
    %405 = vmatprep.subr.mxu0 0.0
    %406 = vmatpush1.msra.mxu0 0.0
    %407 = vmatprep.subr.mxu0 0.0
    %408 = vmatpush1.msra.mxu0 0.0
    %409 = vmatprep.subr.mxu0 0.0
    %410 = vmatpush1.msra.mxu0 0.0
    %411 = vmatprep.subr.mxu0 0.0
    %412 = vmatpush1.msra.mxu0 0.0
    %413 = vmatprep.mubr.f32.mxu0 0.0
    %414 = vmatmul.mubr.f32.gmra.mrb[0].mxu0 %v341
    %v415 = vpop.f32.mrb[0].mxu0
    %v416 = vadd.f32 0.0, %v415
    %v417 = vpop.f32.mrb[0].mxu0
    %418 = vmatprep.mubr.f32.mxu0 0.0
    %419 = vmatmul.mubr.f32.gmra.mrb[0].mxu0 %v344
    %v420 = vpop.f32.mrb[0].mxu0
    %v421 = vadd.f32 0.0, %v420
    %v422 = vpop.f32.mrb[0].mxu0
    %423 = vmatprep.mubr.f32.mxu0 0.0
    %424 = vmatmul.mubr.f32.gmra.mrb[0].mxu0 %v347
    %v425 = vpop.f32.mrb[0].mxu0
    %v426 = vadd.f32 0.0, %v425
    %v427 = vpop.f32.mrb[0].mxu0
    %428 = vmatprep.mubr.f32.mxu0 0.0
    %429 = vmatmul.mubr.f32.gmra.mrb[0].mxu0 %v344
    %v430 = vpop.f32.mrb[0].mxu0
    %v431 = vadd.f32 0.0, %v430
    %v432 = vpop.f32.mrb[0].mxu0
    %433 = vdwg.mxu0
    %436 = vrot.lane.b32.xlu0 %v416, 96
    %v437 = vpop.permute.xlu0 %436
    %438 = vrot.lane.b32.xlu0 %v421, 96
    %v439 = vpop.permute.xlu0 %438
    %vm440 = vcmask 64512
    %v441 = vsel %vm440, %v416, 0
    %v443 = vsel %vm440, %v421, 0
    %v445 = vsel %vm440, %v437, 0
    %v447 = vsel %vm440, %v439, 0
    %449 = vmatprep.subr.mxu0 0.0
    %450 = vmatpush1.xpose.msra.mxu0 %v445
    %451 = vmatprep.subr.mxu0 0.0
    %452 = vmatpush1.xpose.msra.mxu0 %v447
    %453 = vmatprep.subr.mxu0 0.0
    %454 = vmatpush1.xpose.msra.mxu0 0.0
    %455 = vmatprep.subr.mxu0 0.0
    %456 = vmatpush1.xpose.msra.mxu0 0.0
    %457 = vmatprep.subr.mxu0 0.0
    %458 = vmatpush1.xpose.msra.mxu0 0.0
    %459 = vmatprep.subr.mxu0 0.0
    %460 = vmatpush1.xpose.msra.mxu0 0.0
    %461 = vmatprep.subr.mxu0 0.0
    %462 = vmatpush1.xpose.msra.mxu0 0.0
    %463 = vmatprep.subr.mxu0 0.0
    %464 = vmatpush1.xpose.msra.mxu0 0.0
    %465 = vmatprep.subr.mxu0 0.0
    %466 = vmatpush1.xpose.msra.mxu0 0.0
    %467 = vmatprep.subr.mxu0 0.0
    %468 = vmatpush1.xpose.msra.mxu0 0.0
    %469 = vmatprep.subr.mxu0 0.0
    %470 = vmatpush1.xpose.msra.mxu0 0.0
    %471 = vmatprep.subr.mxu0 0.0
    %472 = vmatpush1.xpose.msra.mxu0 0.0
    %473 = vmatprep.subr.mxu0 0.0
    %474 = vmatpush1.xpose.msra.mxu0 0.0
    %475 = vmatprep.subr.mxu0 0.0
    %476 = vmatpush1.xpose.msra.mxu0 0.0
    %477 = vmatprep.subr.mxu0 0.0
    %478 = vmatpush1.xpose.msra.mxu0 0.0
    %479 = vmatprep.subr.mxu0 0.0
    %480 = vmatpush1.xpose.msra.mxu0 0.0
    %481 = vmatprep.subr.mxu0 0.0
    %482 = vmatpush1.xpose.msra.mxu0 0.0
    %483 = vmatprep.subr.mxu0 0.0
    %484 = vmatpush1.xpose.msra.mxu0 0.0
    %485 = vmatprep.subr.mxu0 0.0
    %486 = vmatpush1.xpose.msra.mxu0 0.0
    %487 = vmatprep.subr.mxu0 0.0
    %488 = vmatpush1.xpose.msra.mxu0 0.0
    %489 = vmatprep.subr.mxu0 0.0
    %490 = vmatpush1.xpose.msra.mxu0 0.0
    %491 = vmatprep.subr.mxu0 0.0
    %492 = vmatpush1.xpose.msra.mxu0 0.0
    %493 = vmatprep.subr.mxu0 0.0
    %494 = vmatpush1.xpose.msra.mxu0 0.0
    %495 = vmatprep.subr.mxu0 0.0
    %496 = vmatpush1.xpose.msra.mxu0 0.0
    %497 = vmatprep.subr.mxu0 0.0
    %498 = vmatpush1.xpose.msra.mxu0 0.0
    %499 = vmatprep.subr.mxu0 0.0
    %500 = vmatpush1.xpose.msra.mxu0 0.0
    %501 = vmatprep.subr.mxu0 0.0
    %502 = vmatpush1.xpose.msra.mxu0 0.0
    %503 = vmatprep.subr.mxu0 0.0
    %504 = vmatpush1.xpose.msra.mxu0 0.0
    %505 = vmatprep.subr.mxu0 0.0
    %506 = vmatpush1.xpose.msra.mxu0 0.0
    %507 = vmatprep.subr.mxu0 0.0
    %508 = vmatpush1.xpose.msra.mxu0 0.0
    %509 = vmatprep.subr.mxu0 0.0
    %510 = vmatpush1.xpose.msra.mxu0 0.0
    %511 = vmatprep.subr.mxu0 0.0
    %512 = vmatpush1.xpose.msra.mxu0 0.0
    %513 = vmatprep.mubr.f32.mxu0 0.0
    %514 = vmatmul.mubr.f32.gmra.mrb[0].mxu0 %v441
    %v515 = vpop.f32.mrb[0].mxu0
    %v516 = vadd.f32 0.0, %v515
    %v517 = vpop.f32.mrb[0].mxu0
    %518 = vmatprep.mubr.f32.mxu0 0.0
    %519 = vmatmul.mubr.f32.gmra.mrb[0].mxu0 %v443
    %v520 = vpop.f32.mrb[0].mxu0
    %v521 = vadd.f32 0.0, %v520
    %v522 = vpop.f32.mrb[0].mxu0
    %523 = vdwg.mxu0
    %524 = vrot.lane.b32.xlu0 %v416, 120
    %v525 = vpop.permute.xlu0 %524
    %526 = vrot.lane.b32.xlu0 %v421, 120
    %v527 = vpop.permute.xlu0 %526
    %528 = vrot.lane.b32.xlu0 %v416, 88
    %v529 = vpop.permute.xlu0 %528
    %530 = vrot.lane.b32.xlu0 %v421, 88
    %v531 = vpop.permute.xlu0 %530
    %v532 = vsel %vm440, %v525, 0
    %v534 = vsel %vm440, %v527, 0
    %v536 = vsel %vm440, %v529, 0
    %v538 = vsel %vm440, %v531, 0
    %540 = vmatprep.subr.mxu0 0.0
    %541 = vmatpush1.xpose.msra.mxu0 %v536
    %542 = vmatprep.subr.mxu0 0.0
    %543 = vmatpush1.xpose.msra.mxu0 %v538
    %544 = vmatprep.subr.mxu0 0.0
    %545 = vmatpush1.xpose.msra.mxu0 0.0
    %546 = vmatprep.subr.mxu0 0.0
    %547 = vmatpush1.xpose.msra.mxu0 0.0
    %548 = vmatprep.subr.mxu0 0.0
    %549 = vmatpush1.xpose.msra.mxu0 0.0
    %550 = vmatprep.subr.mxu0 0.0
    %551 = vmatpush1.xpose.msra.mxu0 0.0
    %552 = vmatprep.subr.mxu0 0.0
    %553 = vmatpush1.xpose.msra.mxu0 0.0
    %554 = vmatprep.subr.mxu0 0.0
    %555 = vmatpush1.xpose.msra.mxu0 0.0
    %556 = vmatprep.subr.mxu0 0.0
    %557 = vmatpush1.xpose.msra.mxu0 0.0
    %558 = vmatprep.subr.mxu0 0.0
    %559 = vmatpush1.xpose.msra.mxu0 0.0
    %560 = vmatprep.subr.mxu0 0.0
    %561 = vmatpush1.xpose.msra.mxu0 0.0
    %562 = vmatprep.subr.mxu0 0.0
    %563 = vmatpush1.xpose.msra.mxu0 0.0
    %564 = vmatprep.subr.mxu0 0.0
    %565 = vmatpush1.xpose.msra.mxu0 0.0
    %566 = vmatprep.subr.mxu0 0.0
    %567 = vmatpush1.xpose.msra.mxu0 0.0
    %568 = vmatprep.subr.mxu0 0.0
    %569 = vmatpush1.xpose.msra.mxu0 0.0
    %570 = vmatprep.subr.mxu0 0.0
    %571 = vmatpush1.xpose.msra.mxu0 0.0
    %572 = vmatprep.subr.mxu0 0.0
    %573 = vmatpush1.xpose.msra.mxu0 0.0
    %574 = vmatprep.subr.mxu0 0.0
    %575 = vmatpush1.xpose.msra.mxu0 0.0
    %576 = vmatprep.subr.mxu0 0.0
    %577 = vmatpush1.xpose.msra.mxu0 0.0
    %578 = vmatprep.subr.mxu0 0.0
    %579 = vmatpush1.xpose.msra.mxu0 0.0
    %580 = vmatprep.subr.mxu0 0.0
    %581 = vmatpush1.xpose.msra.mxu0 0.0
    %582 = vmatprep.subr.mxu0 0.0
    %583 = vmatpush1.xpose.msra.mxu0 0.0
    %584 = vmatprep.subr.mxu0 0.0
    %585 = vmatpush1.xpose.msra.mxu0 0.0
    %586 = vmatprep.subr.mxu0 0.0
    %587 = vmatpush1.xpose.msra.mxu0 0.0
    %588 = vmatprep.subr.mxu0 0.0
    %589 = vmatpush1.xpose.msra.mxu0 0.0
    %590 = vmatprep.subr.mxu0 0.0
    %591 = vmatpush1.xpose.msra.mxu0 0.0
    %592 = vmatprep.subr.mxu0 0.0
    %593 = vmatpush1.xpose.msra.mxu0 0.0
    %594 = vmatprep.subr.mxu0 0.0
    %595 = vmatpush1.xpose.msra.mxu0 0.0
    %596 = vmatprep.subr.mxu0 0.0
    %597 = vmatpush1.xpose.msra.mxu0 0.0
    %598 = vmatprep.subr.mxu0 0.0
    %599 = vmatpush1.xpose.msra.mxu0 0.0
    %600 = vmatprep.subr.mxu0 0.0
    %601 = vmatpush1.xpose.msra.mxu0 0.0
    %602 = vmatprep.subr.mxu0 0.0
    %603 = vmatpush1.xpose.msra.mxu0 0.0
    %604 = vmatprep.mubr.f32.mxu0 0.0
    %605 = vmatmul.mubr.f32.gmra.mrb[0].mxu0 %v532
    %v606 = vpop.f32.mrb[0].mxu0
    %v607 = vadd.f32 0.0, %v606
    %v608 = vpop.f32.mrb[0].mxu0
    %609 = vmatprep.mubr.f32.mxu0 0.0
    %610 = vmatmul.mubr.f32.gmra.mrb[0].mxu0 %v534
    %v611 = vpop.f32.mrb[0].mxu0
    %v612 = vadd.f32 0.0, %v611
    %v613 = vpop.f32.mrb[0].mxu0
    %614 = vdwg.mxu0
    %615 = vrot.lane.b32.xlu0 %v416, 112
    %v616 = vpop.permute.xlu0 %615
    %617 = vrot.lane.b32.xlu0 %v421, 112
    %v618 = vpop.permute.xlu0 %617
    %619 = vrot.lane.b32.xlu0 %v416, 80
    %v620 = vpop.permute.xlu0 %619
    %621 = vrot.lane.b32.xlu0 %v421, 80
    %v622 = vpop.permute.xlu0 %621
    %v623 = vsel %vm440, %v616, 0
    %v625 = vsel %vm440, %v618, 0
    %v627 = vsel %vm440, %v620, 0
    %v629 = vsel %vm440, %v622, 0
    %631 = vmatprep.subr.mxu0 0.0
    %632 = vmatpush1.xpose.msra.mxu0 %v627
    %633 = vmatprep.subr.mxu0 0.0
    %634 = vmatpush1.xpose.msra.mxu0 %v629
    %635 = vmatprep.subr.mxu0 0.0
    %636 = vmatpush1.xpose.msra.mxu0 0.0
    %637 = vmatprep.subr.mxu0 0.0
    %638 = vmatpush1.xpose.msra.mxu0 0.0
    %639 = vmatprep.subr.mxu0 0.0
    %640 = vmatpush1.xpose.msra.mxu0 0.0
    %641 = vmatprep.subr.mxu0 0.0
    %642 = vmatpush1.xpose.msra.mxu0 0.0
    %643 = vmatprep.subr.mxu0 0.0
    %644 = vmatpush1.xpose.msra.mxu0 0.0
    %645 = vmatprep.subr.mxu0 0.0
    %646 = vmatpush1.xpose.msra.mxu0 0.0
    %647 = vmatprep.subr.mxu0 0.0
    %648 = vmatpush1.xpose.msra.mxu0 0.0
    %649 = vmatprep.subr.mxu0 0.0
    %650 = vmatpush1.xpose.msra.mxu0 0.0
    %651 = vmatprep.subr.mxu0 0.0
    %652 = vmatpush1.xpose.msra.mxu0 0.0
    %653 = vmatprep.subr.mxu0 0.0
    %654 = vmatpush1.xpose.msra.mxu0 0.0
    %655 = vmatprep.subr.mxu0 0.0
    %656 = vmatpush1.xpose.msra.mxu0 0.0
    %657 = vmatprep.subr.mxu0 0.0
    %658 = vmatpush1.xpose.msra.mxu0 0.0
    %659 = vmatprep.subr.mxu0 0.0
    %660 = vmatpush1.xpose.msra.mxu0 0.0
    %661 = vmatprep.subr.mxu0 0.0
    %662 = vmatpush1.xpose.msra.mxu0 0.0
    %663 = vmatprep.subr.mxu0 0.0
    %664 = vmatpush1.xpose.msra.mxu0 0.0
    %665 = vmatprep.subr.mxu0 0.0
    %666 = vmatpush1.xpose.msra.mxu0 0.0
    %667 = vmatprep.subr.mxu0 0.0
    %668 = vmatpush1.xpose.msra.mxu0 0.0
    %669 = vmatprep.subr.mxu0 0.0
    %670 = vmatpush1.xpose.msra.mxu0 0.0
    %671 = vmatprep.subr.mxu0 0.0
    %672 = vmatpush1.xpose.msra.mxu0 0.0
    %673 = vmatprep.subr.mxu0 0.0
    %674 = vmatpush1.xpose.msra.mxu0 0.0
    %675 = vmatprep.subr.mxu0 0.0
    %676 = vmatpush1.xpose.msra.mxu0 0.0
    %677 = vmatprep.subr.mxu0 0.0
    %678 = vmatpush1.xpose.msra.mxu0 0.0
    %679 = vmatprep.subr.mxu0 0.0
    %680 = vmatpush1.xpose.msra.mxu0 0.0
    %681 = vmatprep.subr.mxu0 0.0
    %682 = vmatpush1.xpose.msra.mxu0 0.0
    %683 = vmatprep.subr.mxu0 0.0
    %684 = vmatpush1.xpose.msra.mxu0 0.0
    %685 = vmatprep.subr.mxu0 0.0
    %686 = vmatpush1.xpose.msra.mxu0 0.0
    %687 = vmatprep.subr.mxu0 0.0
    %688 = vmatpush1.xpose.msra.mxu0 0.0
    %689 = vmatprep.subr.mxu0 0.0
    %690 = vmatpush1.xpose.msra.mxu0 0.0
    %691 = vmatprep.subr.mxu0 0.0
    %692 = vmatpush1.xpose.msra.mxu0 0.0
    %693 = vmatprep.subr.mxu0 0.0
    %694 = vmatpush1.xpose.msra.mxu0 0.0
    %695 = vmatprep.mubr.f32.mxu0 0.0
    %696 = vmatmul.mubr.f32.gmra.mrb[0].mxu0 %v623
    %v697 = vpop.f32.mrb[0].mxu0
    %v698 = vadd.f32 0.0, %v697
    %v699 = vpop.f32.mrb[0].mxu0
    %700 = vmatprep.mubr.f32.mxu0 0.0
    %701 = vmatmul.mubr.f32.gmra.mrb[0].mxu0 %v625
    %v702 = vpop.f32.mrb[0].mxu0
    %v703 = vadd.f32 0.0, %v702
    %v704 = vpop.f32.mrb[0].mxu0
    %705 = vdwg.mxu0
    %706 = vrot.lane.b32.xlu0 %v416, 104
    %v707 = vpop.permute.xlu0 %706
    %708 = vrot.lane.b32.xlu0 %v421, 104
    %v709 = vpop.permute.xlu0 %708
    %710 = vrot.lane.b32.xlu0 %v416, 72
    %v711 = vpop.permute.xlu0 %710
    %712 = vrot.lane.b32.xlu0 %v421, 72
    %v713 = vpop.permute.xlu0 %712
    %v714 = vsel %vm440, %v707, 0
    %v716 = vsel %vm440, %v709, 0
    %v718 = vsel %vm440, %v711, 0
    %v720 = vsel %vm440, %v713, 0
    %722 = vmatprep.subr.mxu0 0.0
    %723 = vmatpush1.xpose.msra.mxu0 %v718
    %724 = vmatprep.subr.mxu0 0.0
    %725 = vmatpush1.xpose.msra.mxu0 %v720
    %726 = vmatprep.subr.mxu0 0.0
    %727 = vmatpush1.xpose.msra.mxu0 0.0
    %728 = vmatprep.subr.mxu0 0.0
    %729 = vmatpush1.xpose.msra.mxu0 0.0
    %730 = vmatprep.subr.mxu0 0.0
    %731 = vmatpush1.xpose.msra.mxu0 0.0
    %732 = vmatprep.subr.mxu0 0.0
    %733 = vmatpush1.xpose.msra.mxu0 0.0
    %734 = vmatprep.subr.mxu0 0.0
    %735 = vmatpush1.xpose.msra.mxu0 0.0
    %736 = vmatprep.subr.mxu0 0.0
    %737 = vmatpush1.xpose.msra.mxu0 0.0
    %738 = vmatprep.subr.mxu0 0.0
    %739 = vmatpush1.xpose.msra.mxu0 0.0
    %740 = vmatprep.subr.mxu0 0.0
    %741 = vmatpush1.xpose.msra.mxu0 0.0
    %742 = vmatprep.subr.mxu0 0.0
    %743 = vmatpush1.xpose.msra.mxu0 0.0
    %744 = vmatprep.subr.mxu0 0.0
    %745 = vmatpush1.xpose.msra.mxu0 0.0
    %746 = vmatprep.subr.mxu0 0.0
    %747 = vmatpush1.xpose.msra.mxu0 0.0
    %748 = vmatprep.subr.mxu0 0.0
    %749 = vmatpush1.xpose.msra.mxu0 0.0
    %750 = vmatprep.subr.mxu0 0.0
    %751 = vmatpush1.xpose.msra.mxu0 0.0
    %752 = vmatprep.subr.mxu0 0.0
    %753 = vmatpush1.xpose.msra.mxu0 0.0
    %754 = vmatprep.subr.mxu0 0.0
    %755 = vmatpush1.xpose.msra.mxu0 0.0
    %756 = vmatprep.subr.mxu0 0.0
    %757 = vmatpush1.xpose.msra.mxu0 0.0
    %758 = vmatprep.subr.mxu0 0.0
    %759 = vmatpush1.xpose.msra.mxu0 0.0
    %760 = vmatprep.subr.mxu0 0.0
    %761 = vmatpush1.xpose.msra.mxu0 0.0
    %762 = vmatprep.subr.mxu0 0.0
    %763 = vmatpush1.xpose.msra.mxu0 0.0
    %764 = vmatprep.subr.mxu0 0.0
    %765 = vmatpush1.xpose.msra.mxu0 0.0
    %766 = vmatprep.subr.mxu0 0.0
    %767 = vmatpush1.xpose.msra.mxu0 0.0
    %768 = vmatprep.subr.mxu0 0.0
    %769 = vmatpush1.xpose.msra.mxu0 0.0
    %770 = vmatprep.subr.mxu0 0.0
    %771 = vmatpush1.xpose.msra.mxu0 0.0
    %772 = vmatprep.subr.mxu0 0.0
    %773 = vmatpush1.xpose.msra.mxu0 0.0
    %774 = vmatprep.subr.mxu0 0.0
    %775 = vmatpush1.xpose.msra.mxu0 0.0
    %776 = vmatprep.subr.mxu0 0.0
    %777 = vmatpush1.xpose.msra.mxu0 0.0
    %778 = vmatprep.subr.mxu0 0.0
    %779 = vmatpush1.xpose.msra.mxu0 0.0
    %780 = vmatprep.subr.mxu0 0.0
    %781 = vmatpush1.xpose.msra.mxu0 0.0
    %782 = vmatprep.subr.mxu0 0.0
    %783 = vmatpush1.xpose.msra.mxu0 0.0
    %784 = vmatprep.subr.mxu0 0.0
    %785 = vmatpush1.xpose.msra.mxu0 0.0
    %786 = vmatprep.mubr.f32.mxu0 0.0
    %787 = vmatmul.mubr.f32.gmra.mrb[0].mxu0 %v714
    %v788 = vpop.f32.mrb[0].mxu0
    %v789 = vadd.f32 0.0, %v788
    %v790 = vpop.f32.mrb[0].mxu0
    %791 = vmatprep.mubr.f32.mxu0 0.0
    %792 = vmatmul.mubr.f32.gmra.mrb[0].mxu0 %v716
    %v793 = vpop.f32.mrb[0].mxu0
    %v794 = vadd.f32 0.0, %v793
    %v795 = vpop.f32.mrb[0].mxu0
    %796 = vdwg.mxu0
    %799 = vrot.lane.b32.xlu0 %v426, 96
    %v800 = vpop.permute.xlu0 %799
    %801 = vrot.lane.b32.xlu0 %v431, 96
    %v802 = vpop.permute.xlu0 %801
    %v803 = vsel %vm440, %v426, 0
    %v805 = vsel %vm440, %v431, 0
    %v807 = vsel %vm440, %v800, 0
    %v809 = vsel %vm440, %v802, 0
    %811 = vmatprep.subr.mxu0 0.0
    %812 = vmatpush1.xpose.msra.mxu0 %v807
    %813 = vmatprep.subr.mxu0 0.0
    %814 = vmatpush1.xpose.msra.mxu0 %v809
    %815 = vmatprep.subr.mxu0 0.0
    %816 = vmatpush1.xpose.msra.mxu0 0.0
    %817 = vmatprep.subr.mxu0 0.0
    %818 = vmatpush1.xpose.msra.mxu0 0.0
    %819 = vmatprep.subr.mxu0 0.0
    %820 = vmatpush1.xpose.msra.mxu0 0.0
    %821 = vmatprep.subr.mxu0 0.0
    %822 = vmatpush1.xpose.msra.mxu0 0.0
    %823 = vmatprep.subr.mxu0 0.0
    %824 = vmatpush1.xpose.msra.mxu0 0.0
    %825 = vmatprep.subr.mxu0 0.0
    %826 = vmatpush1.xpose.msra.mxu0 0.0
    %827 = vmatprep.subr.mxu0 0.0
    %828 = vmatpush1.xpose.msra.mxu0 0.0
    %829 = vmatprep.subr.mxu0 0.0
    %830 = vmatpush1.xpose.msra.mxu0 0.0
    %831 = vmatprep.subr.mxu0 0.0
    %832 = vmatpush1.xpose.msra.mxu0 0.0
    %833 = vmatprep.subr.mxu0 0.0
    %834 = vmatpush1.xpose.msra.mxu0 0.0
    %835 = vmatprep.subr.mxu0 0.0
    %836 = vmatpush1.xpose.msra.mxu0 0.0
    %837 = vmatprep.subr.mxu0 0.0
    %838 = vmatpush1.xpose.msra.mxu0 0.0
    %839 = vmatprep.subr.mxu0 0.0
    %840 = vmatpush1.xpose.msra.mxu0 0.0
    %841 = vmatprep.subr.mxu0 0.0
    %842 = vmatpush1.xpose.msra.mxu0 0.0
    %843 = vmatprep.subr.mxu0 0.0
    %844 = vmatpush1.xpose.msra.mxu0 0.0
    %845 = vmatprep.subr.mxu0 0.0
    %846 = vmatpush1.xpose.msra.mxu0 0.0
    %847 = vmatprep.subr.mxu0 0.0
    %848 = vmatpush1.xpose.msra.mxu0 0.0
    %849 = vmatprep.subr.mxu0 0.0
    %850 = vmatpush1.xpose.msra.mxu0 0.0
    %851 = vmatprep.subr.mxu0 0.0
    %852 = vmatpush1.xpose.msra.mxu0 0.0
    %853 = vmatprep.subr.mxu0 0.0
    %854 = vmatpush1.xpose.msra.mxu0 0.0
    %855 = vmatprep.subr.mxu0 0.0
    %856 = vmatpush1.xpose.msra.mxu0 0.0
    %857 = vmatprep.subr.mxu0 0.0
    %858 = vmatpush1.xpose.msra.mxu0 0.0
    %859 = vmatprep.subr.mxu0 0.0
    %860 = vmatpush1.xpose.msra.mxu0 0.0
    %861 = vmatprep.subr.mxu0 0.0
    %862 = vmatpush1.xpose.msra.mxu0 0.0
    %863 = vmatprep.subr.mxu0 0.0
    %864 = vmatpush1.xpose.msra.mxu0 0.0
    %865 = vmatprep.subr.mxu0 0.0
    %866 = vmatpush1.xpose.msra.mxu0 0.0
    %867 = vmatprep.subr.mxu0 0.0
    %868 = vmatpush1.xpose.msra.mxu0 0.0
    %869 = vmatprep.subr.mxu0 0.0
    %870 = vmatpush1.xpose.msra.mxu0 0.0
    %871 = vmatprep.subr.mxu0 0.0
    %872 = vmatpush1.xpose.msra.mxu0 0.0
    %873 = vmatprep.subr.mxu0 0.0
    %874 = vmatpush1.xpose.msra.mxu0 0.0
    %875 = vmatprep.mubr.f32.mxu0 0.0
    %876 = vmatmul.mubr.f32.gmra.mrb[0].mxu0 %v803
    %v877 = vpop.f32.mrb[0].mxu0
    %v878 = vadd.f32 0.0, %v877
    %v879 = vpop.f32.mrb[0].mxu0
    %880 = vmatprep.mubr.f32.mxu0 0.0
    %881 = vmatmul.mubr.f32.gmra.mrb[0].mxu0 %v805
    %v882 = vpop.f32.mrb[0].mxu0
    %v883 = vadd.f32 0.0, %v882
    %v884 = vpop.f32.mrb[0].mxu0
    %885 = vdwg.mxu0
    %886 = vrot.lane.b32.xlu0 %v426, 120
    %v887 = vpop.permute.xlu0 %886
    %888 = vrot.lane.b32.xlu0 %v431, 120
    %v889 = vpop.permute.xlu0 %888
    %890 = vrot.lane.b32.xlu0 %v426, 88
    %v891 = vpop.permute.xlu0 %890
    %892 = vrot.lane.b32.xlu0 %v431, 88
    %v893 = vpop.permute.xlu0 %892
    %v894 = vsel %vm440, %v887, 0
    %v896 = vsel %vm440, %v889, 0
    %v898 = vsel %vm440, %v891, 0
    %v900 = vsel %vm440, %v893, 0
    %902 = vmatprep.subr.mxu0 0.0
    %903 = vmatpush1.xpose.msra.mxu0 %v898
    %904 = vmatprep.subr.mxu0 0.0
    %905 = vmatpush1.xpose.msra.mxu0 %v900
    %906 = vmatprep.subr.mxu0 0.0
    %907 = vmatpush1.xpose.msra.mxu0 0.0
    %908 = vmatprep.subr.mxu0 0.0
    %909 = vmatpush1.xpose.msra.mxu0 0.0
    %910 = vmatprep.subr.mxu0 0.0
    %911 = vmatpush1.xpose.msra.mxu0 0.0
    %912 = vmatprep.subr.mxu0 0.0
    %913 = vmatpush1.xpose.msra.mxu0 0.0
    %914 = vmatprep.subr.mxu0 0.0
    %915 = vmatpush1.xpose.msra.mxu0 0.0
    %916 = vmatprep.subr.mxu0 0.0
    %917 = vmatpush1.xpose.msra.mxu0 0.0
    %918 = vmatprep.subr.mxu0 0.0
    %919 = vmatpush1.xpose.msra.mxu0 0.0
    %920 = vmatprep.subr.mxu0 0.0
    %921 = vmatpush1.xpose.msra.mxu0 0.0
    %922 = vmatprep.subr.mxu0 0.0
    %923 = vmatpush1.xpose.msra.mxu0 0.0
    %924 = vmatprep.subr.mxu0 0.0
    %925 = vmatpush1.xpose.msra.mxu0 0.0
    %926 = vmatprep.subr.mxu0 0.0
    %927 = vmatpush1.xpose.msra.mxu0 0.0
    %928 = vmatprep.subr.mxu0 0.0
    %929 = vmatpush1.xpose.msra.mxu0 0.0
    %930 = vmatprep.subr.mxu0 0.0
    %931 = vmatpush1.xpose.msra.mxu0 0.0
    %932 = vmatprep.subr.mxu0 0.0
    %933 = vmatpush1.xpose.msra.mxu0 0.0
    %934 = vmatprep.subr.mxu0 0.0
    %935 = vmatpush1.xpose.msra.mxu0 0.0
    %936 = vmatprep.subr.mxu0 0.0
    %937 = vmatpush1.xpose.msra.mxu0 0.0
    %938 = vmatprep.subr.mxu0 0.0
    %939 = vmatpush1.xpose.msra.mxu0 0.0
    %940 = vmatprep.subr.mxu0 0.0
    %941 = vmatpush1.xpose.msra.mxu0 0.0
    %942 = vmatprep.subr.mxu0 0.0
    %943 = vmatpush1.xpose.msra.mxu0 0.0
    %944 = vmatprep.subr.mxu0 0.0
    %945 = vmatpush1.xpose.msra.mxu0 0.0
    %946 = vmatprep.subr.mxu0 0.0
    %947 = vmatpush1.xpose.msra.mxu0 0.0
    %948 = vmatprep.subr.mxu0 0.0
    %949 = vmatpush1.xpose.msra.mxu0 0.0
    %950 = vmatprep.subr.mxu0 0.0
    %951 = vmatpush1.xpose.msra.mxu0 0.0
    %952 = vmatprep.subr.mxu0 0.0
    %953 = vmatpush1.xpose.msra.mxu0 0.0
    %954 = vmatprep.subr.mxu0 0.0
    %955 = vmatpush1.xpose.msra.mxu0 0.0
    %956 = vmatprep.subr.mxu0 0.0
    %957 = vmatpush1.xpose.msra.mxu0 0.0
    %958 = vmatprep.subr.mxu0 0.0
    %959 = vmatpush1.xpose.msra.mxu0 0.0
    %960 = vmatprep.subr.mxu0 0.0
    %961 = vmatpush1.xpose.msra.mxu0 0.0
    %962 = vmatprep.subr.mxu0 0.0
    %963 = vmatpush1.xpose.msra.mxu0 0.0
    %964 = vmatprep.subr.mxu0 0.0
    %965 = vmatpush1.xpose.msra.mxu0 0.0
    %966 = vmatprep.mubr.f32.mxu0 0.0
    %967 = vmatmul.mubr.f32.gmra.mrb[0].mxu0 %v894
    %v968 = vpop.f32.mrb[0].mxu0
    %v969 = vadd.f32 0.0, %v968
    %v970 = vpop.f32.mrb[0].mxu0
    %971 = vmatprep.mubr.f32.mxu0 0.0
    %972 = vmatmul.mubr.f32.gmra.mrb[0].mxu0 %v896
    %v973 = vpop.f32.mrb[0].mxu0
    %v974 = vadd.f32 0.0, %v973
    %v975 = vpop.f32.mrb[0].mxu0
    %976 = vdwg.mxu0
    %977 = vrot.lane.b32.xlu0 %v426, 112
    %v978 = vpop.permute.xlu0 %977
    %979 = vrot.lane.b32.xlu0 %v431, 112
    %v980 = vpop.permute.xlu0 %979
    %981 = vrot.lane.b32.xlu0 %v426, 80
    %v982 = vpop.permute.xlu0 %981
    %983 = vrot.lane.b32.xlu0 %v431, 80
    %v984 = vpop.permute.xlu0 %983
    %v985 = vsel %vm440, %v978, 0
    %v987 = vsel %vm440, %v980, 0
    %v989 = vsel %vm440, %v982, 0
    %v991 = vsel %vm440, %v984, 0
    %993 = vmatprep.subr.mxu0 0.0
    %994 = vmatpush1.xpose.msra.mxu0 %v989
    %995 = vmatprep.subr.mxu0 0.0
    %996 = vmatpush1.xpose.msra.mxu0 %v991
    %997 = vmatprep.subr.mxu0 0.0
    %998 = vmatpush1.xpose.msra.mxu0 0.0
    %999 = vmatprep.subr.mxu0 0.0
    %1000 = vmatpush1.xpose.msra.mxu0 0.0
    %1001 = vmatprep.subr.mxu0 0.0
    %1002 = vmatpush1.xpose.msra.mxu0 0.0
    %1003 = vmatprep.subr.mxu0 0.0
    %1004 = vmatpush1.xpose.msra.mxu0 0.0
    %1005 = vmatprep.subr.mxu0 0.0
    %1006 = vmatpush1.xpose.msra.mxu0 0.0
    %1007 = vmatprep.subr.mxu0 0.0
    %1008 = vmatpush1.xpose.msra.mxu0 0.0
    %1009 = vmatprep.subr.mxu0 0.0
    %1010 = vmatpush1.xpose.msra.mxu0 0.0
    %1011 = vmatprep.subr.mxu0 0.0
    %1012 = vmatpush1.xpose.msra.mxu0 0.0
    %1013 = vmatprep.subr.mxu0 0.0
    %1014 = vmatpush1.xpose.msra.mxu0 0.0
    %1015 = vmatprep.subr.mxu0 0.0
    %1016 = vmatpush1.xpose.msra.mxu0 0.0
    %1017 = vmatprep.subr.mxu0 0.0
    %1018 = vmatpush1.xpose.msra.mxu0 0.0
    %1019 = vmatprep.subr.mxu0 0.0
    %1020 = vmatpush1.xpose.msra.mxu0 0.0
    %1021 = vmatprep.subr.mxu0 0.0
    %1022 = vmatpush1.xpose.msra.mxu0 0.0
    %1023 = vmatprep.subr.mxu0 0.0
    %1024 = vmatpush1.xpose.msra.mxu0 0.0
    %1025 = vmatprep.subr.mxu0 0.0
    %1026 = vmatpush1.xpose.msra.mxu0 0.0
    %1027 = vmatprep.subr.mxu0 0.0
    %1028 = vmatpush1.xpose.msra.mxu0 0.0
    %1029 = vmatprep.subr.mxu0 0.0
    %1030 = vmatpush1.xpose.msra.mxu0 0.0
    %1031 = vmatprep.subr.mxu0 0.0
    %1032 = vmatpush1.xpose.msra.mxu0 0.0
    %1033 = vmatprep.subr.mxu0 0.0
    %1034 = vmatpush1.xpose.msra.mxu0 0.0
    %1035 = vmatprep.subr.mxu0 0.0
    %1036 = vmatpush1.xpose.msra.mxu0 0.0
    %1037 = vmatprep.subr.mxu0 0.0
    %1038 = vmatpush1.xpose.msra.mxu0 0.0
    %1039 = vmatprep.subr.mxu0 0.0
    %1040 = vmatpush1.xpose.msra.mxu0 0.0
    %1041 = vmatprep.subr.mxu0 0.0
    %1042 = vmatpush1.xpose.msra.mxu0 0.0
    %1043 = vmatprep.subr.mxu0 0.0
    %1044 = vmatpush1.xpose.msra.mxu0 0.0
    %1045 = vmatprep.subr.mxu0 0.0
    %1046 = vmatpush1.xpose.msra.mxu0 0.0
    %1047 = vmatprep.subr.mxu0 0.0
    %1048 = vmatpush1.xpose.msra.mxu0 0.0
    %1049 = vmatprep.subr.mxu0 0.0
    %1050 = vmatpush1.xpose.msra.mxu0 0.0
    %1051 = vmatprep.subr.mxu0 0.0
    %1052 = vmatpush1.xpose.msra.mxu0 0.0
    %1053 = vmatprep.subr.mxu0 0.0
    %1054 = vmatpush1.xpose.msra.mxu0 0.0
    %1055 = vmatprep.subr.mxu0 0.0
    %1056 = vmatpush1.xpose.msra.mxu0 0.0
    %1057 = vmatprep.mubr.f32.mxu0 0.0
    %1058 = vmatmul.mubr.f32.gmra.mrb[0].mxu0 %v985
    %v1059 = vpop.f32.mrb[0].mxu0
    %v1060 = vadd.f32 0.0, %v1059
    %v1061 = vpop.f32.mrb[0].mxu0
    %1062 = vmatprep.mubr.f32.mxu0 0.0
    %1063 = vmatmul.mubr.f32.gmra.mrb[0].mxu0 %v987
    %v1064 = vpop.f32.mrb[0].mxu0
    %v1065 = vadd.f32 0.0, %v1064
    %v1066 = vpop.f32.mrb[0].mxu0
    %1067 = vdwg.mxu0
    %1068 = vrot.lane.b32.xlu0 %v426, 104
    %v1069 = vpop.permute.xlu0 %1068
    %1070 = vrot.lane.b32.xlu0 %v431, 104
    %v1071 = vpop.permute.xlu0 %1070
    %1072 = vrot.lane.b32.xlu0 %v426, 72
    %v1073 = vpop.permute.xlu0 %1072
    %1074 = vrot.lane.b32.xlu0 %v431, 72
    %v1075 = vpop.permute.xlu0 %1074
    %v1076 = vsel %vm440, %v1069, 0
    %v1078 = vsel %vm440, %v1071, 0
    %v1080 = vsel %vm440, %v1073, 0
    %v1082 = vsel %vm440, %v1075, 0
    %1084 = vmatprep.subr.mxu0 0.0
    %1085 = vmatpush1.xpose.msra.mxu0 %v1080
    %1086 = vmatprep.subr.mxu0 0.0
    %1087 = vmatpush1.xpose.msra.mxu0 %v1082
    %1088 = vmatprep.subr.mxu0 0.0
    %1089 = vmatpush1.xpose.msra.mxu0 0.0
    %1090 = vmatprep.subr.mxu0 0.0
    %1091 = vmatpush1.xpose.msra.mxu0 0.0
    %1092 = vmatprep.subr.mxu0 0.0
    %1093 = vmatpush1.xpose.msra.mxu0 0.0
    %1094 = vmatprep.subr.mxu0 0.0
    %1095 = vmatpush1.xpose.msra.mxu0 0.0
    %1096 = vmatprep.subr.mxu0 0.0
    %1097 = vmatpush1.xpose.msra.mxu0 0.0
    %1098 = vmatprep.subr.mxu0 0.0
    %1099 = vmatpush1.xpose.msra.mxu0 0.0
    %1100 = vmatprep.subr.mxu0 0.0
    %1101 = vmatpush1.xpose.msra.mxu0 0.0
    %1102 = vmatprep.subr.mxu0 0.0
    %1103 = vmatpush1.xpose.msra.mxu0 0.0
    %1104 = vmatprep.subr.mxu0 0.0
    %1105 = vmatpush1.xpose.msra.mxu0 0.0
    %1106 = vmatprep.subr.mxu0 0.0
    %1107 = vmatpush1.xpose.msra.mxu0 0.0
    %1108 = vmatprep.subr.mxu0 0.0
    %1109 = vmatpush1.xpose.msra.mxu0 0.0
    %1110 = vmatprep.subr.mxu0 0.0
    %1111 = vmatpush1.xpose.msra.mxu0 0.0
    %1112 = vmatprep.subr.mxu0 0.0
    %1113 = vmatpush1.xpose.msra.mxu0 0.0
    %1114 = vmatprep.subr.mxu0 0.0
    %1115 = vmatpush1.xpose.msra.mxu0 0.0
    %1116 = vmatprep.subr.mxu0 0.0
    %1117 = vmatpush1.xpose.msra.mxu0 0.0
    %1118 = vmatprep.subr.mxu0 0.0
    %1119 = vmatpush1.xpose.msra.mxu0 0.0
    %1120 = vmatprep.subr.mxu0 0.0
    %1121 = vmatpush1.xpose.msra.mxu0 0.0
    %1122 = vmatprep.subr.mxu0 0.0
    %1123 = vmatpush1.xpose.msra.mxu0 0.0
    %1124 = vmatprep.subr.mxu0 0.0
    %1125 = vmatpush1.xpose.msra.mxu0 0.0
    %1126 = vmatprep.subr.mxu0 0.0
    %1127 = vmatpush1.xpose.msra.mxu0 0.0
    %1128 = vmatprep.subr.mxu0 0.0
    %1129 = vmatpush1.xpose.msra.mxu0 0.0
    %1130 = vmatprep.subr.mxu0 0.0
    %1131 = vmatpush1.xpose.msra.mxu0 0.0
    %1132 = vmatprep.subr.mxu0 0.0
    %1133 = vmatpush1.xpose.msra.mxu0 0.0
    %1134 = vmatprep.subr.mxu0 0.0
    %1135 = vmatpush1.xpose.msra.mxu0 0.0
    %1136 = vmatprep.subr.mxu0 0.0
    %1137 = vmatpush1.xpose.msra.mxu0 0.0
    %1138 = vmatprep.subr.mxu0 0.0
    %1139 = vmatpush1.xpose.msra.mxu0 0.0
    %1140 = vmatprep.subr.mxu0 0.0
    %1141 = vmatpush1.xpose.msra.mxu0 0.0
    %1142 = vmatprep.subr.mxu0 0.0
    %1143 = vmatpush1.xpose.msra.mxu0 0.0
    %1144 = vmatprep.subr.mxu0 0.0
    %1145 = vmatpush1.xpose.msra.mxu0 0.0
    %1146 = vmatprep.subr.mxu0 0.0
    %1147 = vmatpush1.xpose.msra.mxu0 0.0
    %1148 = vmatprep.mubr.f32.mxu0 0.0
    %1149 = vmatmul.mubr.f32.gmra.mrb[0].mxu0 %v1076
    %v1150 = vpop.f32.mrb[0].mxu0
    %v1151 = vadd.f32 0.0, %v1150
    %v1152 = vpop.f32.mrb[0].mxu0
    %1153 = vmatprep.mubr.f32.mxu0 0.0
    %1154 = vmatmul.mubr.f32.gmra.mrb[0].mxu0 %v1078
    %v1155 = vpop.f32.mrb[0].mxu0
    %v1156 = vadd.f32 0.0, %v1155
    %v1157 = vpop.f32.mrb[0].mxu0
    %1158 = vdwg.mxu0
    %v1159 = vadd.f32 %v516, %v78
    %v1160 = vadd.f32 %v521, %v78
    %v1161 = vadd.f32 %v607, %v78
    %v1162 = vadd.f32 %v612, %v78
    %v1163 = vadd.f32 %v698, %v78
    %v1164 = vadd.f32 %v703, %v78
    %v1165 = vadd.f32 %v789, %v78
    %v1166 = vadd.f32 %v794, %v78
    %v1167 = vadd.f32 %v878, %v78
    %v1168 = vadd.f32 %v883, %v78
    %v1169 = vadd.f32 %v969, %v78
    %v1170 = vadd.f32 %v974, %v78
    %v1171 = vadd.f32 %v1060, %v78
    %v1172 = vadd.f32 %v1065, %v78
    %v1173 = vadd.f32 %v1151, %v78
    %v1174 = vadd.f32 %v1156, %v78
    %vm1175 = vcmask 130048
    %v1176 = vsel %vm1175, %v1159, -inf
    %1177 = vmax.xlane.f32.xlu0 %v1176
    %v1178 = vpop.xlane.xlu0 %1177
    %v1179 = vsel %vm1175, %v1160, -inf
    %1180 = vmax.xlane.f32.xlu0 %v1179
    %v1181 = vpop.xlane.xlu0 %1180
    %v1182 = vsel %vm1175, %v1161, -inf
    %1183 = vmax.xlane.f32.xlu0 %v1182
    %v1184 = vpop.xlane.xlu0 %1183
    %v1185 = vsel %vm1175, %v1162, -inf
    %1186 = vmax.xlane.f32.xlu0 %v1185
    %v1187 = vpop.xlane.xlu0 %1186
    %v1188 = vsel %vm1175, %v1163, -inf
    %1189 = vmax.xlane.f32.xlu0 %v1188
    %v1190 = vpop.xlane.xlu0 %1189
    %v1191 = vsel %vm1175, %v1164, -inf
    %1192 = vmax.xlane.f32.xlu0 %v1191
    %v1193 = vpop.xlane.xlu0 %1192
    %v1194 = vsel %vm1175, %v1165, -inf
    %1195 = vmax.xlane.f32.xlu0 %v1194
    %v1196 = vpop.xlane.xlu0 %1195
    %v1197 = vsel %vm1175, %v1166, -inf
    %1198 = vmax.xlane.f32.xlu0 %v1197
    %v1199 = vpop.xlane.xlu0 %1198
    %v1200 = vsel %vm1175, %v1167, -inf
    %1201 = vmax.xlane.f32.xlu0 %v1200
    %v1202 = vpop.xlane.xlu0 %1201
    %v1203 = vsel %vm1175, %v1168, -inf
    %1204 = vmax.xlane.f32.xlu0 %v1203
    %v1205 = vpop.xlane.xlu0 %1204
    %v1206 = vsel %vm1175, %v1169, -inf
    %1207 = vmax.xlane.f32.xlu0 %v1206
    %v1208 = vpop.xlane.xlu0 %1207
    %v1209 = vsel %vm1175, %v1170, -inf
    %1210 = vmax.xlane.f32.xlu0 %v1209
    %v1211 = vpop.xlane.xlu0 %1210
    %v1212 = vsel %vm1175, %v1171, -inf
    %1213 = vmax.xlane.f32.xlu0 %v1212
    %v1214 = vpop.xlane.xlu0 %1213
    %v1215 = vsel %vm1175, %v1172, -inf
    %1216 = vmax.xlane.f32.xlu0 %v1215
    %v1217 = vpop.xlane.xlu0 %1216
    %v1218 = vsel %vm1175, %v1173, -inf
    %1219 = vmax.xlane.f32.xlu0 %v1218
    %v1220 = vpop.xlane.xlu0 %1219
    %v1221 = vsel %vm1175, %v1174, -inf
    %1222 = vmax.xlane.f32.xlu0 %v1221
    %v1223 = vpop.xlane.xlu0 %1222
    %v1224 = vsub.f32 %v1159, %v1178
    %v1225 = vsub.f32 %v1160, %v1181
    %v1226 = vsub.f32 %v1161, %v1184
    %v1227 = vsub.f32 %v1162, %v1187
    %v1228 = vsub.f32 %v1163, %v1190
    %v1229 = vsub.f32 %v1164, %v1193
    %v1230 = vsub.f32 %v1165, %v1196
    %v1231 = vsub.f32 %v1166, %v1199
    %v1232 = vsub.f32 %v1167, %v1202
    %v1233 = vsub.f32 %v1168, %v1205
    %v1234 = vsub.f32 %v1169, %v1208
    %v1235 = vsub.f32 %v1170, %v1211
    %v1236 = vsub.f32 %v1171, %v1214
    %v1237 = vsub.f32 %v1172, %v1217
    %v1238 = vsub.f32 %v1173, %v1220
    %v1239 = vsub.f32 %v1174, %v1223
    %v1240 = vmul.f32 %v1224, 1.442695
    %v1241 = vpow.pop %v1240
    %v1242 = vmul.f32 %v1225, 1.442695
    %v1243 = vpow.pop %v1242
    %v1244 = vmul.f32 %v1226, 1.442695
    %v1245 = vpow.pop %v1244
    %v1246 = vmul.f32 %v1227, 1.442695
    %v1247 = vpow.pop %v1246
    %v1248 = vmul.f32 %v1228, 1.442695
    %v1249 = vpow.pop %v1248
    %v1250 = vmul.f32 %v1229, 1.442695
    %v1251 = vpow.pop %v1250
    %v1252 = vmul.f32 %v1230, 1.442695
    %v1253 = vpow.pop %v1252
    %v1254 = vmul.f32 %v1231, 1.442695
    %v1255 = vpow.pop %v1254
    %v1256 = vmul.f32 %v1232, 1.442695
    %v1257 = vpow.pop %v1256
    %v1258 = vmul.f32 %v1233, 1.442695
    %v1259 = vpow.pop %v1258
    %v1260 = vmul.f32 %v1234, 1.442695
    %v1261 = vpow.pop %v1260
    %v1262 = vmul.f32 %v1235, 1.442695
    %v1263 = vpow.pop %v1262
    %v1264 = vmul.f32 %v1236, 1.442695
    %v1265 = vpow.pop %v1264
    %v1266 = vmul.f32 %v1237, 1.442695
    %v1267 = vpow.pop %v1266
    %v1268 = vmul.f32 %v1238, 1.442695
    %v1269 = vpow.pop %v1268
    %v1270 = vmul.f32 %v1239, 1.442695
    %v1271 = vpow.pop %v1270
    %v1272 = vsel %vm1175, %v1241, 0.0
    %1273 = vadd.xlane.f32.xlu0 %v1272
    %v1274 = vpop.xlane.xlu0 %1273
    %v1275 = vsel %vm1175, %v1243, 0.0
    %1276 = vadd.xlane.f32.xlu0 %v1275
    %v1277 = vpop.xlane.xlu0 %1276
    %v1278 = vsel %vm1175, %v1245, 0.0
    %1279 = vadd.xlane.f32.xlu0 %v1278
    %v1280 = vpop.xlane.xlu0 %1279
    %v1281 = vsel %vm1175, %v1247, 0.0
    %1282 = vadd.xlane.f32.xlu0 %v1281
    %v1283 = vpop.xlane.xlu0 %1282
    %v1284 = vsel %vm1175, %v1249, 0.0
    %1285 = vadd.xlane.f32.xlu0 %v1284
    %v1286 = vpop.xlane.xlu0 %1285
    %v1287 = vsel %vm1175, %v1251, 0.0
    %1288 = vadd.xlane.f32.xlu0 %v1287
    %v1289 = vpop.xlane.xlu0 %1288
    %v1290 = vsel %vm1175, %v1253, 0.0
    %1291 = vadd.xlane.f32.xlu0 %v1290
    %v1292 = vpop.xlane.xlu0 %1291
    %v1293 = vsel %vm1175, %v1255, 0.0
    %1294 = vadd.xlane.f32.xlu0 %v1293
    %v1295 = vpop.xlane.xlu0 %1294
    %v1296 = vsel %vm1175, %v1257, 0.0
    %1297 = vadd.xlane.f32.xlu0 %v1296
    %v1298 = vpop.xlane.xlu0 %1297
    %v1299 = vsel %vm1175, %v1259, 0.0
    %1300 = vadd.xlane.f32.xlu0 %v1299
    %v1301 = vpop.xlane.xlu0 %1300
    %v1302 = vsel %vm1175, %v1261, 0.0
    %1303 = vadd.xlane.f32.xlu0 %v1302
    %v1304 = vpop.xlane.xlu0 %1303
    %v1305 = vsel %vm1175, %v1263, 0.0
    %1306 = vadd.xlane.f32.xlu0 %v1305
    %v1307 = vpop.xlane.xlu0 %1306
    %v1308 = vsel %vm1175, %v1265, 0.0
    %1309 = vadd.xlane.f32.xlu0 %v1308
    %v1310 = vpop.xlane.xlu0 %1309
    %v1311 = vsel %vm1175, %v1267, 0.0
    %1312 = vadd.xlane.f32.xlu0 %v1311
    %v1313 = vpop.xlane.xlu0 %1312
    %v1314 = vsel %vm1175, %v1269, 0.0
    %1315 = vadd.xlane.f32.xlu0 %v1314
    %v1316 = vpop.xlane.xlu0 %1315
    %v1317 = vsel %vm1175, %v1271, 0.0
    %1318 = vadd.xlane.f32.xlu0 %v1317
    %v1319 = vpop.xlane.xlu0 %1318
    %v1320 = vrcp.pop %v1274
    %v1321 = vrcp.pop %v1277
    %v1322 = vrcp.pop %v1280
    %v1323 = vrcp.pop %v1283
    %v1324 = vrcp.pop %v1286
    %v1325 = vrcp.pop %v1289
    %v1326 = vrcp.pop %v1292
    %v1327 = vrcp.pop %v1295
    %v1328 = vrcp.pop %v1298
    %v1329 = vrcp.pop %v1301
    %v1330 = vrcp.pop %v1304
    %v1331 = vrcp.pop %v1307
    %v1332 = vrcp.pop %v1310
    %v1333 = vrcp.pop %v1313
    %v1334 = vrcp.pop %v1316
    %v1335 = vrcp.pop %v1319
    %v1336 = vmul.f32 %v1241, %v1320
    %v1337 = vmul.f32 %v1243, %v1321
    %v1338 = vmul.f32 %v1245, %v1322
    %v1339 = vmul.f32 %v1247, %v1323
    %v1340 = vmul.f32 %v1249, %v1324
    %v1341 = vmul.f32 %v1251, %v1325
    %v1342 = vmul.f32 %v1253, %v1326
    %v1343 = vmul.f32 %v1255, %v1327
    %v1344 = vmul.f32 %v1257, %v1328
    %v1345 = vmul.f32 %v1259, %v1329
    %v1346 = vmul.f32 %v1261, %v1330
    %v1347 = vmul.f32 %v1263, %v1331
    %v1348 = vmul.f32 %v1265, %v1332
    %v1349 = vmul.f32 %v1267, %v1333
    %v1350 = vmul.f32 %v1269, %v1334
    %v1351 = vmul.f32 %v1271, %v1335
    %1352 = vrot.lane.b32.xlu0 %v416, 64
    %v1353 = vpop.permute.xlu0 %1352
    %1354 = vrot.lane.b32.xlu0 %v421, 64
    %v1355 = vpop.permute.xlu0 %1354
    %v1359 = vsel %vm1175, %v1336, 0
    %v1362 = vsel %vm1175, %v1337, 0
    %1364 = vmatprep.subr.mxu0 0.0
    %1365 = vmatpush1.msra.mxu0 %v1353
    %1366 = vmatprep.subr.mxu0 0.0
    %1367 = vmatpush1.msra.mxu0 %v1355
    %1368 = vmatprep.subr.mxu0 0.0
    %1369 = vmatpush1.msra.mxu0 0.0
    %1370 = vmatprep.subr.mxu0 0.0
    %1371 = vmatpush1.msra.mxu0 0.0
    %1372 = vmatprep.subr.mxu0 0.0
    %1373 = vmatpush1.msra.mxu0 0.0
    %1374 = vmatprep.subr.mxu0 0.0
    %1375 = vmatpush1.msra.mxu0 0.0
    %1376 = vmatprep.subr.mxu0 0.0
    %1377 = vmatpush1.msra.mxu0 0.0
    %1378 = vmatprep.subr.mxu0 0.0
    %1379 = vmatpush1.msra.mxu0 0.0
    %1380 = vmatprep.subr.mxu0 0.0
    %1381 = vmatpush1.msra.mxu0 0.0
    %1382 = vmatprep.subr.mxu0 0.0
    %1383 = vmatpush1.msra.mxu0 0.0
    %1384 = vmatprep.subr.mxu0 0.0
    %1385 = vmatpush1.msra.mxu0 0.0
    %1386 = vmatprep.subr.mxu0 0.0
    %1387 = vmatpush1.msra.mxu0 0.0
    %1388 = vmatprep.subr.mxu0 0.0
    %1389 = vmatpush1.msra.mxu0 0.0
    %1390 = vmatprep.subr.mxu0 0.0
    %1391 = vmatpush1.msra.mxu0 0.0
    %1392 = vmatprep.subr.mxu0 0.0
    %1393 = vmatpush1.msra.mxu0 0.0
    %1394 = vmatprep.subr.mxu0 0.0
    %1395 = vmatpush1.msra.mxu0 0.0
    %1396 = vmatprep.subr.mxu0 0.0
    %1397 = vmatpush1.msra.mxu0 0.0
    %1398 = vmatprep.subr.mxu0 0.0
    %1399 = vmatpush1.msra.mxu0 0.0
    %1400 = vmatprep.subr.mxu0 0.0
    %1401 = vmatpush1.msra.mxu0 0.0
    %1402 = vmatprep.subr.mxu0 0.0
    %1403 = vmatpush1.msra.mxu0 0.0
    %1404 = vmatprep.subr.mxu0 0.0
    %1405 = vmatpush1.msra.mxu0 0.0
    %1406 = vmatprep.subr.mxu0 0.0
    %1407 = vmatpush1.msra.mxu0 0.0
    %1408 = vmatprep.subr.mxu0 0.0
    %1409 = vmatpush1.msra.mxu0 0.0
    %1410 = vmatprep.subr.mxu0 0.0
    %1411 = vmatpush1.msra.mxu0 0.0
    %1412 = vmatprep.subr.mxu0 0.0
    %1413 = vmatpush1.msra.mxu0 0.0
    %1414 = vmatprep.subr.mxu0 0.0
    %1415 = vmatpush1.msra.mxu0 0.0
    %1416 = vmatprep.subr.mxu0 0.0
    %1417 = vmatpush1.msra.mxu0 0.0
    %1418 = vmatprep.subr.mxu0 0.0
    %1419 = vmatpush1.msra.mxu0 0.0
    %1420 = vmatprep.subr.mxu0 0.0
    %1421 = vmatpush1.msra.mxu0 0.0
    %1422 = vmatprep.subr.mxu0 0.0
    %1423 = vmatpush1.msra.mxu0 0.0
    %1424 = vmatprep.subr.mxu0 0.0
    %1425 = vmatpush1.msra.mxu0 0.0
    %1426 = vmatprep.subr.mxu0 0.0
    %1427 = vmatpush1.msra.mxu0 0.0
    %1428 = vmatprep.mubr.f32.mxu0 0.0
    %1429 = vmatmul.mubr.f32.gmra.mrb[0].mxu0 %v1359
    %v1430 = vpop.f32.mrb[0].mxu0
    %v1431 = vadd.f32 0.0, %v1430
    %v1432 = vpop.f32.mrb[0].mxu0
    %1433 = vmatprep.mubr.f32.mxu0 0.0
    %1434 = vmatmul.mubr.f32.gmra.mrb[0].mxu0 %v1362
    %v1435 = vpop.f32.mrb[0].mxu0
    %v1436 = vadd.f32 0.0, %v1435
    %v1437 = vpop.f32.mrb[0].mxu0
    %1438 = vdwg.mxu0
    %1439 = vrot.lane.b32.xlu0 %v416, 56
    %v1440 = vpop.permute.xlu0 %1439
    %1441 = vrot.lane.b32.xlu0 %v421, 56
    %v1442 = vpop.permute.xlu0 %1441
    %v1446 = vsel %vm1175, %v1338, 0
    %v1449 = vsel %vm1175, %v1339, 0
    %1451 = vmatprep.subr.mxu0 0.0
    %1452 = vmatpush1.msra.mxu0 %v1440
    %1453 = vmatprep.subr.mxu0 0.0
    %1454 = vmatpush1.msra.mxu0 %v1442
    %1455 = vmatprep.subr.mxu0 0.0
    %1456 = vmatpush1.msra.mxu0 0.0
    %1457 = vmatprep.subr.mxu0 0.0
    %1458 = vmatpush1.msra.mxu0 0.0
    %1459 = vmatprep.subr.mxu0 0.0
    %1460 = vmatpush1.msra.mxu0 0.0
    %1461 = vmatprep.subr.mxu0 0.0
    %1462 = vmatpush1.msra.mxu0 0.0
    %1463 = vmatprep.subr.mxu0 0.0
    %1464 = vmatpush1.msra.mxu0 0.0
    %1465 = vmatprep.subr.mxu0 0.0
    %1466 = vmatpush1.msra.mxu0 0.0
    %1467 = vmatprep.subr.mxu0 0.0
    %1468 = vmatpush1.msra.mxu0 0.0
    %1469 = vmatprep.subr.mxu0 0.0
    %1470 = vmatpush1.msra.mxu0 0.0
    %1471 = vmatprep.subr.mxu0 0.0
    %1472 = vmatpush1.msra.mxu0 0.0
    %1473 = vmatprep.subr.mxu0 0.0
    %1474 = vmatpush1.msra.mxu0 0.0
    %1475 = vmatprep.subr.mxu0 0.0
    %1476 = vmatpush1.msra.mxu0 0.0
    %1477 = vmatprep.subr.mxu0 0.0
    %1478 = vmatpush1.msra.mxu0 0.0
    %1479 = vmatprep.subr.mxu0 0.0
    %1480 = vmatpush1.msra.mxu0 0.0
    %1481 = vmatprep.subr.mxu0 0.0
    %1482 = vmatpush1.msra.mxu0 0.0
    %1483 = vmatprep.subr.mxu0 0.0
    %1484 = vmatpush1.msra.mxu0 0.0
    %1485 = vmatprep.subr.mxu0 0.0
    %1486 = vmatpush1.msra.mxu0 0.0
    %1487 = vmatprep.subr.mxu0 0.0
    %1488 = vmatpush1.msra.mxu0 0.0
    %1489 = vmatprep.subr.mxu0 0.0
    %1490 = vmatpush1.msra.mxu0 0.0
    %1491 = vmatprep.subr.mxu0 0.0
    %1492 = vmatpush1.msra.mxu0 0.0
    %1493 = vmatprep.subr.mxu0 0.0
    %1494 = vmatpush1.msra.mxu0 0.0
    %1495 = vmatprep.subr.mxu0 0.0
    %1496 = vmatpush1.msra.mxu0 0.0
    %1497 = vmatprep.subr.mxu0 0.0
    %1498 = vmatpush1.msra.mxu0 0.0
    %1499 = vmatprep.subr.mxu0 0.0
    %1500 = vmatpush1.msra.mxu0 0.0
    %1501 = vmatprep.subr.mxu0 0.0
    %1502 = vmatpush1.msra.mxu0 0.0
    %1503 = vmatprep.subr.mxu0 0.0
    %1504 = vmatpush1.msra.mxu0 0.0
    %1505 = vmatprep.subr.mxu0 0.0
    %1506 = vmatpush1.msra.mxu0 0.0
    %1507 = vmatprep.subr.mxu0 0.0
    %1508 = vmatpush1.msra.mxu0 0.0
    %1509 = vmatprep.subr.mxu0 0.0
    %1510 = vmatpush1.msra.mxu0 0.0
    %1511 = vmatprep.subr.mxu0 0.0
    %1512 = vmatpush1.msra.mxu0 0.0
    %1513 = vmatprep.subr.mxu0 0.0
    %1514 = vmatpush1.msra.mxu0 0.0
    %1515 = vmatprep.mubr.f32.mxu0 0.0
    %1516 = vmatmul.mubr.f32.gmra.mrb[0].mxu0 %v1446
    %v1517 = vpop.f32.mrb[0].mxu0
    %v1518 = vadd.f32 0.0, %v1517
    %v1519 = vpop.f32.mrb[0].mxu0
    %1520 = vmatprep.mubr.f32.mxu0 0.0
    %1521 = vmatmul.mubr.f32.gmra.mrb[0].mxu0 %v1449
    %v1522 = vpop.f32.mrb[0].mxu0
    %v1523 = vadd.f32 0.0, %v1522
    %v1524 = vpop.f32.mrb[0].mxu0
    %1525 = vdwg.mxu0
    %1526 = vrot.lane.b32.xlu0 %v416, 48
    %v1527 = vpop.permute.xlu0 %1526
    %1528 = vrot.lane.b32.xlu0 %v421, 48
    %v1529 = vpop.permute.xlu0 %1528
    %v1533 = vsel %vm1175, %v1340, 0
    %v1536 = vsel %vm1175, %v1341, 0
    %1538 = vmatprep.subr.mxu0 0.0
    %1539 = vmatpush1.msra.mxu0 %v1527
    %1540 = vmatprep.subr.mxu0 0.0
    %1541 = vmatpush1.msra.mxu0 %v1529
    %1542 = vmatprep.subr.mxu0 0.0
    %1543 = vmatpush1.msra.mxu0 0.0
    %1544 = vmatprep.subr.mxu0 0.0
    %1545 = vmatpush1.msra.mxu0 0.0
    %1546 = vmatprep.subr.mxu0 0.0
    %1547 = vmatpush1.msra.mxu0 0.0
    %1548 = vmatprep.subr.mxu0 0.0
    %1549 = vmatpush1.msra.mxu0 0.0
    %1550 = vmatprep.subr.mxu0 0.0
    %1551 = vmatpush1.msra.mxu0 0.0
    %1552 = vmatprep.subr.mxu0 0.0
    %1553 = vmatpush1.msra.mxu0 0.0
    %1554 = vmatprep.subr.mxu0 0.0
    %1555 = vmatpush1.msra.mxu0 0.0
    %1556 = vmatprep.subr.mxu0 0.0
    %1557 = vmatpush1.msra.mxu0 0.0
    %1558 = vmatprep.subr.mxu0 0.0
    %1559 = vmatpush1.msra.mxu0 0.0
    %1560 = vmatprep.subr.mxu0 0.0
    %1561 = vmatpush1.msra.mxu0 0.0
    %1562 = vmatprep.subr.mxu0 0.0
    %1563 = vmatpush1.msra.mxu0 0.0
    %1564 = vmatprep.subr.mxu0 0.0
    %1565 = vmatpush1.msra.mxu0 0.0
    %1566 = vmatprep.subr.mxu0 0.0
    %1567 = vmatpush1.msra.mxu0 0.0
    %1568 = vmatprep.subr.mxu0 0.0
    %1569 = vmatpush1.msra.mxu0 0.0
    %1570 = vmatprep.subr.mxu0 0.0
    %1571 = vmatpush1.msra.mxu0 0.0
    %1572 = vmatprep.subr.mxu0 0.0
    %1573 = vmatpush1.msra.mxu0 0.0
    %1574 = vmatprep.subr.mxu0 0.0
    %1575 = vmatpush1.msra.mxu0 0.0
    %1576 = vmatprep.subr.mxu0 0.0
    %1577 = vmatpush1.msra.mxu0 0.0
    %1578 = vmatprep.subr.mxu0 0.0
    %1579 = vmatpush1.msra.mxu0 0.0
    %1580 = vmatprep.subr.mxu0 0.0
    %1581 = vmatpush1.msra.mxu0 0.0
    %1582 = vmatprep.subr.mxu0 0.0
    %1583 = vmatpush1.msra.mxu0 0.0
    %1584 = vmatprep.subr.mxu0 0.0
    %1585 = vmatpush1.msra.mxu0 0.0
    %1586 = vmatprep.subr.mxu0 0.0
    %1587 = vmatpush1.msra.mxu0 0.0
    %1588 = vmatprep.subr.mxu0 0.0
    %1589 = vmatpush1.msra.mxu0 0.0
    %1590 = vmatprep.subr.mxu0 0.0
    %1591 = vmatpush1.msra.mxu0 0.0
    %1592 = vmatprep.subr.mxu0 0.0
    %1593 = vmatpush1.msra.mxu0 0.0
    %1594 = vmatprep.subr.mxu0 0.0
    %1595 = vmatpush1.msra.mxu0 0.0
    %1596 = vmatprep.subr.mxu0 0.0
    %1597 = vmatpush1.msra.mxu0 0.0
    %1598 = vmatprep.subr.mxu0 0.0
    %1599 = vmatpush1.msra.mxu0 0.0
    %1600 = vmatprep.subr.mxu0 0.0
    %1601 = vmatpush1.msra.mxu0 0.0
    %1602 = vmatprep.mubr.f32.mxu0 0.0
    %1603 = vmatmul.mubr.f32.gmra.mrb[0].mxu0 %v1533
    %v1604 = vpop.f32.mrb[0].mxu0
    %v1605 = vadd.f32 0.0, %v1604
    %v1606 = vpop.f32.mrb[0].mxu0
    %1607 = vmatprep.mubr.f32.mxu0 0.0
    %1608 = vmatmul.mubr.f32.gmra.mrb[0].mxu0 %v1536
    %v1609 = vpop.f32.mrb[0].mxu0
    %v1610 = vadd.f32 0.0, %v1609
    %v1611 = vpop.f32.mrb[0].mxu0
    %1612 = vdwg.mxu0
    %1613 = vrot.lane.b32.xlu0 %v416, 40
    %v1614 = vpop.permute.xlu0 %1613
    %1615 = vrot.lane.b32.xlu0 %v421, 40
    %v1616 = vpop.permute.xlu0 %1615
    %v1620 = vsel %vm1175, %v1342, 0
    %v1623 = vsel %vm1175, %v1343, 0
    %1625 = vmatprep.subr.mxu0 0.0
    %1626 = vmatpush1.msra.mxu0 %v1614
    %1627 = vmatprep.subr.mxu0 0.0
    %1628 = vmatpush1.msra.mxu0 %v1616
    %1629 = vmatprep.subr.mxu0 0.0
    %1630 = vmatpush1.msra.mxu0 0.0
    %1631 = vmatprep.subr.mxu0 0.0
    %1632 = vmatpush1.msra.mxu0 0.0
    %1633 = vmatprep.subr.mxu0 0.0
    %1634 = vmatpush1.msra.mxu0 0.0
    %1635 = vmatprep.subr.mxu0 0.0
    %1636 = vmatpush1.msra.mxu0 0.0
    %1637 = vmatprep.subr.mxu0 0.0
    %1638 = vmatpush1.msra.mxu0 0.0
    %1639 = vmatprep.subr.mxu0 0.0
    %1640 = vmatpush1.msra.mxu0 0.0
    %1641 = vmatprep.subr.mxu0 0.0
    %1642 = vmatpush1.msra.mxu0 0.0
    %1643 = vmatprep.subr.mxu0 0.0
    %1644 = vmatpush1.msra.mxu0 0.0
    %1645 = vmatprep.subr.mxu0 0.0
    %1646 = vmatpush1.msra.mxu0 0.0
    %1647 = vmatprep.subr.mxu0 0.0
    %1648 = vmatpush1.msra.mxu0 0.0
    %1649 = vmatprep.subr.mxu0 0.0
    %1650 = vmatpush1.msra.mxu0 0.0
    %1651 = vmatprep.subr.mxu0 0.0
    %1652 = vmatpush1.msra.mxu0 0.0
    %1653 = vmatprep.subr.mxu0 0.0
    %1654 = vmatpush1.msra.mxu0 0.0
    %1655 = vmatprep.subr.mxu0 0.0
    %1656 = vmatpush1.msra.mxu0 0.0
    %1657 = vmatprep.subr.mxu0 0.0
    %1658 = vmatpush1.msra.mxu0 0.0
    %1659 = vmatprep.subr.mxu0 0.0
    %1660 = vmatpush1.msra.mxu0 0.0
    %1661 = vmatprep.subr.mxu0 0.0
    %1662 = vmatpush1.msra.mxu0 0.0
    %1663 = vmatprep.subr.mxu0 0.0
    %1664 = vmatpush1.msra.mxu0 0.0
    %1665 = vmatprep.subr.mxu0 0.0
    %1666 = vmatpush1.msra.mxu0 0.0
    %1667 = vmatprep.subr.mxu0 0.0
    %1668 = vmatpush1.msra.mxu0 0.0
    %1669 = vmatprep.subr.mxu0 0.0
    %1670 = vmatpush1.msra.mxu0 0.0
    %1671 = vmatprep.subr.mxu0 0.0
    %1672 = vmatpush1.msra.mxu0 0.0
    %1673 = vmatprep.subr.mxu0 0.0
    %1674 = vmatpush1.msra.mxu0 0.0
    %1675 = vmatprep.subr.mxu0 0.0
    %1676 = vmatpush1.msra.mxu0 0.0
    %1677 = vmatprep.subr.mxu0 0.0
    %1678 = vmatpush1.msra.mxu0 0.0
    %1679 = vmatprep.subr.mxu0 0.0
    %1680 = vmatpush1.msra.mxu0 0.0
    %1681 = vmatprep.subr.mxu0 0.0
    %1682 = vmatpush1.msra.mxu0 0.0
    %1683 = vmatprep.subr.mxu0 0.0
    %1684 = vmatpush1.msra.mxu0 0.0
    %1685 = vmatprep.subr.mxu0 0.0
    %1686 = vmatpush1.msra.mxu0 0.0
    %1687 = vmatprep.subr.mxu0 0.0
    %1688 = vmatpush1.msra.mxu0 0.0
    %1689 = vmatprep.mubr.f32.mxu0 0.0
    %1690 = vmatmul.mubr.f32.gmra.mrb[0].mxu0 %v1620
    %v1691 = vpop.f32.mrb[0].mxu0
    %v1692 = vadd.f32 0.0, %v1691
    %v1693 = vpop.f32.mrb[0].mxu0
    %1694 = vmatprep.mubr.f32.mxu0 0.0
    %1695 = vmatmul.mubr.f32.gmra.mrb[0].mxu0 %v1623
    %v1696 = vpop.f32.mrb[0].mxu0
    %v1697 = vadd.f32 0.0, %v1696
    %v1698 = vpop.f32.mrb[0].mxu0
    %1699 = vdwg.mxu0
    %1702 = vrot.lane.b32.xlu0 %v1518, 8
    %v1703 = vpop.permute.xlu0 %1702
    %1704 = vrot.lane.b32.xlu0 %v1523, 8
    %v1705 = vpop.permute.xlu0 %1704
    %1710 = vrot.lane.b32.xlu0 %v1605, 16
    %v1711 = vpop.permute.xlu0 %1710
    %1712 = vrot.lane.b32.xlu0 %v1610, 16
    %v1713 = vpop.permute.xlu0 %1712
    %1718 = vrot.lane.b32.xlu0 %v1692, 24
    %v1719 = vpop.permute.xlu0 %1718
    %1720 = vrot.lane.b32.xlu0 %v1697, 24
    %v1721 = vpop.permute.xlu0 %1720
    %v1724 = vsel %vm440, %v1431, %v1703
    %v1725 = vsel %vm440, %v1436, %v1705
    %v1726 = vsel %vm1175, %v1724, %v1711
    %v1727 = vsel %vm1175, %v1725, %v1713
    %vm1728 = vcmask 195584
    %v1729 = vsel %vm1728, %v1726, %v1719
    %v1730 = vsel %vm1728, %v1727, %v1721
    %1731 = vrot.lane.b32.xlu0 %v426, 64
    %v1732 = vpop.permute.xlu0 %1731
    %1733 = vrot.lane.b32.xlu0 %v431, 64
    %v1734 = vpop.permute.xlu0 %1733
    %v1738 = vsel %vm1175, %v1344, 0
    %v1741 = vsel %vm1175, %v1345, 0
    %1743 = vmatprep.subr.mxu0 0.0
    %1744 = vmatpush1.msra.mxu0 %v1732
    %1745 = vmatprep.subr.mxu0 0.0
    %1746 = vmatpush1.msra.mxu0 %v1734
    %1747 = vmatprep.subr.mxu0 0.0
    %1748 = vmatpush1.msra.mxu0 0.0
    %1749 = vmatprep.subr.mxu0 0.0
    %1750 = vmatpush1.msra.mxu0 0.0
    %1751 = vmatprep.subr.mxu0 0.0
    %1752 = vmatpush1.msra.mxu0 0.0
    %1753 = vmatprep.subr.mxu0 0.0
    %1754 = vmatpush1.msra.mxu0 0.0
    %1755 = vmatprep.subr.mxu0 0.0
    %1756 = vmatpush1.msra.mxu0 0.0
    %1757 = vmatprep.subr.mxu0 0.0
    %1758 = vmatpush1.msra.mxu0 0.0
    %1759 = vmatprep.subr.mxu0 0.0
    %1760 = vmatpush1.msra.mxu0 0.0
    %1761 = vmatprep.subr.mxu0 0.0
    %1762 = vmatpush1.msra.mxu0 0.0
    %1763 = vmatprep.subr.mxu0 0.0
    %1764 = vmatpush1.msra.mxu0 0.0
    %1765 = vmatprep.subr.mxu0 0.0
    %1766 = vmatpush1.msra.mxu0 0.0
    %1767 = vmatprep.subr.mxu0 0.0
    %1768 = vmatpush1.msra.mxu0 0.0
    %1769 = vmatprep.subr.mxu0 0.0
    %1770 = vmatpush1.msra.mxu0 0.0
    %1771 = vmatprep.subr.mxu0 0.0
    %1772 = vmatpush1.msra.mxu0 0.0
    %1773 = vmatprep.subr.mxu0 0.0
    %1774 = vmatpush1.msra.mxu0 0.0
    %1775 = vmatprep.subr.mxu0 0.0
    %1776 = vmatpush1.msra.mxu0 0.0
    %1777 = vmatprep.subr.mxu0 0.0
    %1778 = vmatpush1.msra.mxu0 0.0
    %1779 = vmatprep.subr.mxu0 0.0
    %1780 = vmatpush1.msra.mxu0 0.0
    %1781 = vmatprep.subr.mxu0 0.0
    %1782 = vmatpush1.msra.mxu0 0.0
    %1783 = vmatprep.subr.mxu0 0.0
    %1784 = vmatpush1.msra.mxu0 0.0
    %1785 = vmatprep.subr.mxu0 0.0
    %1786 = vmatpush1.msra.mxu0 0.0
    %1787 = vmatprep.subr.mxu0 0.0
    %1788 = vmatpush1.msra.mxu0 0.0
    %1789 = vmatprep.subr.mxu0 0.0
    %1790 = vmatpush1.msra.mxu0 0.0
    %1791 = vmatprep.subr.mxu0 0.0
    %1792 = vmatpush1.msra.mxu0 0.0
    %1793 = vmatprep.subr.mxu0 0.0
    %1794 = vmatpush1.msra.mxu0 0.0
    %1795 = vmatprep.subr.mxu0 0.0
    %1796 = vmatpush1.msra.mxu0 0.0
    %1797 = vmatprep.subr.mxu0 0.0
    %1798 = vmatpush1.msra.mxu0 0.0
    %1799 = vmatprep.subr.mxu0 0.0
    %1800 = vmatpush1.msra.mxu0 0.0
    %1801 = vmatprep.subr.mxu0 0.0
    %1802 = vmatpush1.msra.mxu0 0.0
    %1803 = vmatprep.subr.mxu0 0.0
    %1804 = vmatpush1.msra.mxu0 0.0
    %1805 = vmatprep.subr.mxu0 0.0
    %1806 = vmatpush1.msra.mxu0 0.0
    %1807 = vmatprep.mubr.f32.mxu0 0.0
    %1808 = vmatmul.mubr.f32.gmra.mrb[0].mxu0 %v1738
    %v1809 = vpop.f32.mrb[0].mxu0
    %v1810 = vadd.f32 0.0, %v1809
    %v1811 = vpop.f32.mrb[0].mxu0
    %1812 = vmatprep.mubr.f32.mxu0 0.0
    %1813 = vmatmul.mubr.f32.gmra.mrb[0].mxu0 %v1741
    %v1814 = vpop.f32.mrb[0].mxu0
    %v1815 = vadd.f32 0.0, %v1814
    %v1816 = vpop.f32.mrb[0].mxu0
    %1817 = vdwg.mxu0
    %1818 = vrot.lane.b32.xlu0 %v426, 56
    %v1819 = vpop.permute.xlu0 %1818
    %1820 = vrot.lane.b32.xlu0 %v431, 56
    %v1821 = vpop.permute.xlu0 %1820
    %v1825 = vsel %vm1175, %v1346, 0
    %v1828 = vsel %vm1175, %v1347, 0
    %1830 = vmatprep.subr.mxu0 0.0
    %1831 = vmatpush1.msra.mxu0 %v1819
    %1832 = vmatprep.subr.mxu0 0.0
    %1833 = vmatpush1.msra.mxu0 %v1821
    %1834 = vmatprep.subr.mxu0 0.0
    %1835 = vmatpush1.msra.mxu0 0.0
    %1836 = vmatprep.subr.mxu0 0.0
    %1837 = vmatpush1.msra.mxu0 0.0
    %1838 = vmatprep.subr.mxu0 0.0
    %1839 = vmatpush1.msra.mxu0 0.0
    %1840 = vmatprep.subr.mxu0 0.0
    %1841 = vmatpush1.msra.mxu0 0.0
    %1842 = vmatprep.subr.mxu0 0.0
    %1843 = vmatpush1.msra.mxu0 0.0
    %1844 = vmatprep.subr.mxu0 0.0
    %1845 = vmatpush1.msra.mxu0 0.0
    %1846 = vmatprep.subr.mxu0 0.0
    %1847 = vmatpush1.msra.mxu0 0.0
    %1848 = vmatprep.subr.mxu0 0.0
    %1849 = vmatpush1.msra.mxu0 0.0
    %1850 = vmatprep.subr.mxu0 0.0
    %1851 = vmatpush1.msra.mxu0 0.0
    %1852 = vmatprep.subr.mxu0 0.0
    %1853 = vmatpush1.msra.mxu0 0.0
    %1854 = vmatprep.subr.mxu0 0.0
    %1855 = vmatpush1.msra.mxu0 0.0
    %1856 = vmatprep.subr.mxu0 0.0
    %1857 = vmatpush1.msra.mxu0 0.0
    %1858 = vmatprep.subr.mxu0 0.0
    %1859 = vmatpush1.msra.mxu0 0.0
    %1860 = vmatprep.subr.mxu0 0.0
    %1861 = vmatpush1.msra.mxu0 0.0
    %1862 = vmatprep.subr.mxu0 0.0
    %1863 = vmatpush1.msra.mxu0 0.0
    %1864 = vmatprep.subr.mxu0 0.0
    %1865 = vmatpush1.msra.mxu0 0.0
    %1866 = vmatprep.subr.mxu0 0.0
    %1867 = vmatpush1.msra.mxu0 0.0
    %1868 = vmatprep.subr.mxu0 0.0
    %1869 = vmatpush1.msra.mxu0 0.0
    %1870 = vmatprep.subr.mxu0 0.0
    %1871 = vmatpush1.msra.mxu0 0.0
    %1872 = vmatprep.subr.mxu0 0.0
    %1873 = vmatpush1.msra.mxu0 0.0
    %1874 = vmatprep.subr.mxu0 0.0
    %1875 = vmatpush1.msra.mxu0 0.0
    %1876 = vmatprep.subr.mxu0 0.0
    %1877 = vmatpush1.msra.mxu0 0.0
    %1878 = vmatprep.subr.mxu0 0.0
    %1879 = vmatpush1.msra.mxu0 0.0
    %1880 = vmatprep.subr.mxu0 0.0
    %1881 = vmatpush1.msra.mxu0 0.0
    %1882 = vmatprep.subr.mxu0 0.0
    %1883 = vmatpush1.msra.mxu0 0.0
    %1884 = vmatprep.subr.mxu0 0.0
    %1885 = vmatpush1.msra.mxu0 0.0
    %1886 = vmatprep.subr.mxu0 0.0
    %1887 = vmatpush1.msra.mxu0 0.0
    %1888 = vmatprep.subr.mxu0 0.0
    %1889 = vmatpush1.msra.mxu0 0.0
    %1890 = vmatprep.subr.mxu0 0.0
    %1891 = vmatpush1.msra.mxu0 0.0
    %1892 = vmatprep.subr.mxu0 0.0
    %1893 = vmatpush1.msra.mxu0 0.0
    %1894 = vmatprep.mubr.f32.mxu0 0.0
    %1895 = vmatmul.mubr.f32.gmra.mrb[0].mxu0 %v1825
    %v1896 = vpop.f32.mrb[0].mxu0
    %v1897 = vadd.f32 0.0, %v1896
    %v1898 = vpop.f32.mrb[0].mxu0
    %1899 = vmatprep.mubr.f32.mxu0 0.0
    %1900 = vmatmul.mubr.f32.gmra.mrb[0].mxu0 %v1828
    %v1901 = vpop.f32.mrb[0].mxu0
    %v1902 = vadd.f32 0.0, %v1901
    %v1903 = vpop.f32.mrb[0].mxu0
    %1904 = vdwg.mxu0
    %1905 = vrot.lane.b32.xlu0 %v426, 48
    %v1906 = vpop.permute.xlu0 %1905
    %1907 = vrot.lane.b32.xlu0 %v431, 48
    %v1908 = vpop.permute.xlu0 %1907
    %v1912 = vsel %vm1175, %v1348, 0
    %v1915 = vsel %vm1175, %v1349, 0
    %1917 = vmatprep.subr.mxu0 0.0
    %1918 = vmatpush1.msra.mxu0 %v1906
    %1919 = vmatprep.subr.mxu0 0.0
    %1920 = vmatpush1.msra.mxu0 %v1908
    %1921 = vmatprep.subr.mxu0 0.0
    %1922 = vmatpush1.msra.mxu0 0.0
    %1923 = vmatprep.subr.mxu0 0.0
    %1924 = vmatpush1.msra.mxu0 0.0
    %1925 = vmatprep.subr.mxu0 0.0
    %1926 = vmatpush1.msra.mxu0 0.0
    %1927 = vmatprep.subr.mxu0 0.0
    %1928 = vmatpush1.msra.mxu0 0.0
    %1929 = vmatprep.subr.mxu0 0.0
    %1930 = vmatpush1.msra.mxu0 0.0
    %1931 = vmatprep.subr.mxu0 0.0
    %1932 = vmatpush1.msra.mxu0 0.0
    %1933 = vmatprep.subr.mxu0 0.0
    %1934 = vmatpush1.msra.mxu0 0.0
    %1935 = vmatprep.subr.mxu0 0.0
    %1936 = vmatpush1.msra.mxu0 0.0
    %1937 = vmatprep.subr.mxu0 0.0
    %1938 = vmatpush1.msra.mxu0 0.0
    %1939 = vmatprep.subr.mxu0 0.0
    %1940 = vmatpush1.msra.mxu0 0.0
    %1941 = vmatprep.subr.mxu0 0.0
    %1942 = vmatpush1.msra.mxu0 0.0
    %1943 = vmatprep.subr.mxu0 0.0
    %1944 = vmatpush1.msra.mxu0 0.0
    %1945 = vmatprep.subr.mxu0 0.0
    %1946 = vmatpush1.msra.mxu0 0.0
    %1947 = vmatprep.subr.mxu0 0.0
    %1948 = vmatpush1.msra.mxu0 0.0
    %1949 = vmatprep.subr.mxu0 0.0
    %1950 = vmatpush1.msra.mxu0 0.0
    %1951 = vmatprep.subr.mxu0 0.0
    %1952 = vmatpush1.msra.mxu0 0.0
    %1953 = vmatprep.subr.mxu0 0.0
    %1954 = vmatpush1.msra.mxu0 0.0
    %1955 = vmatprep.subr.mxu0 0.0
    %1956 = vmatpush1.msra.mxu0 0.0
    %1957 = vmatprep.subr.mxu0 0.0
    %1958 = vmatpush1.msra.mxu0 0.0
    %1959 = vmatprep.subr.mxu0 0.0
    %1960 = vmatpush1.msra.mxu0 0.0
    %1961 = vmatprep.subr.mxu0 0.0
    %1962 = vmatpush1.msra.mxu0 0.0
    %1963 = vmatprep.subr.mxu0 0.0
    %1964 = vmatpush1.msra.mxu0 0.0
    %1965 = vmatprep.subr.mxu0 0.0
    %1966 = vmatpush1.msra.mxu0 0.0
    %1967 = vmatprep.subr.mxu0 0.0
    %1968 = vmatpush1.msra.mxu0 0.0
    %1969 = vmatprep.subr.mxu0 0.0
    %1970 = vmatpush1.msra.mxu0 0.0
    %1971 = vmatprep.subr.mxu0 0.0
    %1972 = vmatpush1.msra.mxu0 0.0
    %1973 = vmatprep.subr.mxu0 0.0
    %1974 = vmatpush1.msra.mxu0 0.0
    %1975 = vmatprep.subr.mxu0 0.0
    %1976 = vmatpush1.msra.mxu0 0.0
    %1977 = vmatprep.subr.mxu0 0.0
    %1978 = vmatpush1.msra.mxu0 0.0
    %1979 = vmatprep.subr.mxu0 0.0
    %1980 = vmatpush1.msra.mxu0 0.0
    %1981 = vmatprep.mubr.f32.mxu0 0.0
    %1982 = vmatmul.mubr.f32.gmra.mrb[0].mxu0 %v1912
    %v1983 = vpop.f32.mrb[0].mxu0
    %v1984 = vadd.f32 0.0, %v1983
    %v1985 = vpop.f32.mrb[0].mxu0
    %1986 = vmatprep.mubr.f32.mxu0 0.0
    %1987 = vmatmul.mubr.f32.gmra.mrb[0].mxu0 %v1915
    %v1988 = vpop.f32.mrb[0].mxu0
    %v1989 = vadd.f32 0.0, %v1988
    %v1990 = vpop.f32.mrb[0].mxu0
    %1991 = vdwg.mxu0
    %1992 = vrot.lane.b32.xlu0 %v426, 40
    %v1993 = vpop.permute.xlu0 %1992
    %1994 = vrot.lane.b32.xlu0 %v431, 40
    %v1995 = vpop.permute.xlu0 %1994
    %v1999 = vsel %vm1175, %v1350, 0
    %v2002 = vsel %vm1175, %v1351, 0
    %2004 = vmatprep.subr.mxu0 0.0
    %2005 = vmatpush1.msra.mxu0 %v1993
    %2006 = vmatprep.subr.mxu0 0.0
    %2007 = vmatpush1.msra.mxu0 %v1995
    %2008 = vmatprep.subr.mxu0 0.0
    %2009 = vmatpush1.msra.mxu0 0.0
    %2010 = vmatprep.subr.mxu0 0.0
    %2011 = vmatpush1.msra.mxu0 0.0
    %2012 = vmatprep.subr.mxu0 0.0
    %2013 = vmatpush1.msra.mxu0 0.0
    %2014 = vmatprep.subr.mxu0 0.0
    %2015 = vmatpush1.msra.mxu0 0.0
    %2016 = vmatprep.subr.mxu0 0.0
    %2017 = vmatpush1.msra.mxu0 0.0
    %2018 = vmatprep.subr.mxu0 0.0
    %2019 = vmatpush1.msra.mxu0 0.0
    %2020 = vmatprep.subr.mxu0 0.0
    %2021 = vmatpush1.msra.mxu0 0.0
    %2022 = vmatprep.subr.mxu0 0.0
    %2023 = vmatpush1.msra.mxu0 0.0
    %2024 = vmatprep.subr.mxu0 0.0
    %2025 = vmatpush1.msra.mxu0 0.0
    %2026 = vmatprep.subr.mxu0 0.0
    %2027 = vmatpush1.msra.mxu0 0.0
    %2028 = vmatprep.subr.mxu0 0.0
    %2029 = vmatpush1.msra.mxu0 0.0
    %2030 = vmatprep.subr.mxu0 0.0
    %2031 = vmatpush1.msra.mxu0 0.0
    %2032 = vmatprep.subr.mxu0 0.0
    %2033 = vmatpush1.msra.mxu0 0.0
    %2034 = vmatprep.subr.mxu0 0.0
    %2035 = vmatpush1.msra.mxu0 0.0
    %2036 = vmatprep.subr.mxu0 0.0
    %2037 = vmatpush1.msra.mxu0 0.0
    %2038 = vmatprep.subr.mxu0 0.0
    %2039 = vmatpush1.msra.mxu0 0.0
    %2040 = vmatprep.subr.mxu0 0.0
    %2041 = vmatpush1.msra.mxu0 0.0
    %2042 = vmatprep.subr.mxu0 0.0
    %2043 = vmatpush1.msra.mxu0 0.0
    %2044 = vmatprep.subr.mxu0 0.0
    %2045 = vmatpush1.msra.mxu0 0.0
    %2046 = vmatprep.subr.mxu0 0.0
    %2047 = vmatpush1.msra.mxu0 0.0
    %2048 = vmatprep.subr.mxu0 0.0
    %2049 = vmatpush1.msra.mxu0 0.0
    %2050 = vmatprep.subr.mxu0 0.0
    %2051 = vmatpush1.msra.mxu0 0.0
    %2052 = vmatprep.subr.mxu0 0.0
    %2053 = vmatpush1.msra.mxu0 0.0
    %2054 = vmatprep.subr.mxu0 0.0
    %2055 = vmatpush1.msra.mxu0 0.0
    %2056 = vmatprep.subr.mxu0 0.0
    %2057 = vmatpush1.msra.mxu0 0.0
    %2058 = vmatprep.subr.mxu0 0.0
    %2059 = vmatpush1.msra.mxu0 0.0
    %2060 = vmatprep.subr.mxu0 0.0
    %2061 = vmatpush1.msra.mxu0 0.0
    %2062 = vmatprep.subr.mxu0 0.0
    %2063 = vmatpush1.msra.mxu0 0.0
    %2064 = vmatprep.subr.mxu0 0.0
    %2065 = vmatpush1.msra.mxu0 0.0
    %2066 = vmatprep.subr.mxu0 0.0
    %2067 = vmatpush1.msra.mxu0 0.0
    %2068 = vmatprep.mubr.f32.mxu0 0.0
    %2069 = vmatmul.mubr.f32.gmra.mrb[0].mxu0 %v1999
    %v2070 = vpop.f32.mrb[0].mxu0
    %v2071 = vadd.f32 0.0, %v2070
    %v2072 = vpop.f32.mrb[0].mxu0
    %2073 = vmatprep.mubr.f32.mxu0 0.0
    %2074 = vmatmul.mubr.f32.gmra.mrb[0].mxu0 %v2002
    %v2075 = vpop.f32.mrb[0].mxu0
    %v2076 = vadd.f32 0.0, %v2075
    %v2077 = vpop.f32.mrb[0].mxu0
    %2078 = vdwg.mxu0
    %2081 = vrot.lane.b32.xlu0 %v1897, 8
    %v2082 = vpop.permute.xlu0 %2081
    %2083 = vrot.lane.b32.xlu0 %v1902, 8
    %v2084 = vpop.permute.xlu0 %2083
    %2089 = vrot.lane.b32.xlu0 %v1984, 16
    %v2090 = vpop.permute.xlu0 %2089
    %2091 = vrot.lane.b32.xlu0 %v1989, 16
    %v2092 = vpop.permute.xlu0 %2091
    %2097 = vrot.lane.b32.xlu0 %v2071, 24
    %v2098 = vpop.permute.xlu0 %2097
    %2099 = vrot.lane.b32.xlu0 %v2076, 24
    %v2100 = vpop.permute.xlu0 %2099
    %v2103 = vsel %vm440, %v1810, %v2082
    %v2104 = vsel %vm440, %v1815, %v2084
    %v2105 = vsel %vm1175, %v2103, %v2090
    %v2106 = vsel %vm1175, %v2104, %v2092
    %v2107 = vsel %vm1728, %v2105, %v2098
    %v2108 = vsel %vm1728, %v2106, %v2100
    %v2109 = vld [vmem:[%s10] sm:$0xff]
    %v2110 = vld [vmem:[%s10 + $0x8] sm:$0xff]
    %v2111 = vld [vmem:[%s10 + $0x10] sm:$0xff]
    %v2112 = vld [vmem:[%s10 + $0x18] sm:$0xff]
    %v2114 = vsel %vm277, %v1729, 0
    %v2117 = vsel %vm277, %v1730, 0
    %v2120 = vsel %vm277, %v2107, 0
    %v2123 = vsel %vm277, %v2108, 0
    %2125 = vmatprep.subr.mxu0 0.0
    %2126 = vmatpush1.msra.mxu0 %v2109
    %2127 = vmatprep.subr.mxu0 0.0
    %2128 = vmatpush1.msra.mxu0 %v2110
    %2129 = vmatprep.subr.mxu0 0.0
    %2130 = vmatpush1.msra.mxu0 %v2111
    %2131 = vmatprep.subr.mxu0 0.0
    %2132 = vmatpush1.msra.mxu0 %v2112
    %2133 = vmatprep.subr.mxu0 0.0
    %2134 = vmatpush1.msra.mxu0 0.0
    %2135 = vmatprep.subr.mxu0 0.0
    %2136 = vmatpush1.msra.mxu0 0.0
    %2137 = vmatprep.subr.mxu0 0.0
    %2138 = vmatpush1.msra.mxu0 0.0
    %2139 = vmatprep.subr.mxu0 0.0
    %2140 = vmatpush1.msra.mxu0 0.0
    %2141 = vmatprep.subr.mxu0 0.0
    %2142 = vmatpush1.msra.mxu0 0.0
    %2143 = vmatprep.subr.mxu0 0.0
    %2144 = vmatpush1.msra.mxu0 0.0
    %2145 = vmatprep.subr.mxu0 0.0
    %2146 = vmatpush1.msra.mxu0 0.0
    %2147 = vmatprep.subr.mxu0 0.0
    %2148 = vmatpush1.msra.mxu0 0.0
    %2149 = vmatprep.subr.mxu0 0.0
    %2150 = vmatpush1.msra.mxu0 0.0
    %2151 = vmatprep.subr.mxu0 0.0
    %2152 = vmatpush1.msra.mxu0 0.0
    %2153 = vmatprep.subr.mxu0 0.0
    %2154 = vmatpush1.msra.mxu0 0.0
    %2155 = vmatprep.subr.mxu0 0.0
    %2156 = vmatpush1.msra.mxu0 0.0
    %2157 = vmatprep.subr.mxu0 0.0
    %2158 = vmatpush1.msra.mxu0 0.0
    %2159 = vmatprep.subr.mxu0 0.0
    %2160 = vmatpush1.msra.mxu0 0.0
    %2161 = vmatprep.subr.mxu0 0.0
    %2162 = vmatpush1.msra.mxu0 0.0
    %2163 = vmatprep.subr.mxu0 0.0
    %2164 = vmatpush1.msra.mxu0 0.0
    %2165 = vmatprep.subr.mxu0 0.0
    %2166 = vmatpush1.msra.mxu0 0.0
    %2167 = vmatprep.subr.mxu0 0.0
    %2168 = vmatpush1.msra.mxu0 0.0
    %2169 = vmatprep.subr.mxu0 0.0
    %2170 = vmatpush1.msra.mxu0 0.0
    %2171 = vmatprep.subr.mxu0 0.0
    %2172 = vmatpush1.msra.mxu0 0.0
    %2173 = vmatprep.subr.mxu0 0.0
    %2174 = vmatpush1.msra.mxu0 0.0
    %2175 = vmatprep.subr.mxu0 0.0
    %2176 = vmatpush1.msra.mxu0 0.0
    %2177 = vmatprep.subr.mxu0 0.0
    %2178 = vmatpush1.msra.mxu0 0.0
    %2179 = vmatprep.subr.mxu0 0.0
    %2180 = vmatpush1.msra.mxu0 0.0
    %2181 = vmatprep.subr.mxu0 0.0
    %2182 = vmatpush1.msra.mxu0 0.0
    %2183 = vmatprep.subr.mxu0 0.0
    %2184 = vmatpush1.msra.mxu0 0.0
    %2185 = vmatprep.subr.mxu0 0.0
    %2186 = vmatpush1.msra.mxu0 0.0
    %2187 = vmatprep.subr.mxu0 0.0
    %2188 = vmatpush1.msra.mxu0 0.0
    %2189 = vmatprep.mubr.f32.mxu0 0.0
    %2190 = vmatmul.mubr.f32.gmra.mrb[0].mxu0 %v2114
    %v2191 = vpop.f32.mrb[0].mxu0
    %v2192 = vadd.f32 0.0, %v2191
    %v2193 = vpop.f32.mrb[0].mxu0
    %2194 = vmatprep.mubr.f32.mxu0 0.0
    %2195 = vmatmul.mubr.f32.gmra.mrb[0].mxu0 %v2117
    %v2196 = vpop.f32.mrb[0].mxu0
    %v2197 = vadd.f32 0.0, %v2196
    %v2198 = vpop.f32.mrb[0].mxu0
    %2199 = vmatprep.mubr.f32.mxu0 0.0
    %2200 = vmatmul.mubr.f32.gmra.mrb[0].mxu0 %v2120
    %v2201 = vpop.f32.mrb[0].mxu0
    %v2202 = vadd.f32 0.0, %v2201
    %v2203 = vpop.f32.mrb[0].mxu0
    %2204 = vmatprep.mubr.f32.mxu0 0.0
    %2205 = vmatmul.mubr.f32.gmra.mrb[0].mxu0 %v2123
    %v2206 = vpop.f32.mrb[0].mxu0
    %v2207 = vadd.f32 0.0, %v2206
    %v2208 = vpop.f32.mrb[0].mxu0
    %2209 = vdwg.mxu0
    %v2210 = vadd.f32 %v272, %v2192
    %v2211 = vadd.f32 %v274, %v2197
    %v2212 = vadd.f32 %v273, %v2202
    %v2213 = vadd.f32 %v274, %v2207
    %v2214 = vld [vmem:[%s11] sm:$0x1]
    %v2216 = vlaneseq
    %v2217 = vshrl.u32 %v2216, 7
    %v2218 = vsub.s32 0, %v2217
    %v2219 = vrot.slane %v2214, %v2218
    %v2221 = vadd.f32 %v2210, %v2219
    %v2222 = vadd.f32 %v2211, %v2219
    %v2223 = vadd.f32 %v2212, %v2219
    %v2224 = vadd.f32 %v2213, %v2219
    %v2225 = vld [vmem:[%s12] sm:$0x1]
    %v2226 = vld [vmem:[%s13] sm:$0x1]
    %v2227 = vsel %vm277, %v2221, 0.0
    %2228 = vadd.xlane.f32.xlu0 %v2227
    %v2229 = vpop.xlane.xlu0 %2228
    %v2230 = vsel %vm277, %v2222, 0.0
    %2231 = vadd.xlane.f32.xlu0 %v2230
    %v2232 = vpop.xlane.xlu0 %2231
    %v2233 = vsel %vm277, %v2223, 0.0
    %2234 = vadd.xlane.f32.xlu0 %v2233
    %v2235 = vpop.xlane.xlu0 %2234
    %v2236 = vsel %vm277, %v2224, 0.0
    %2237 = vadd.xlane.f32.xlu0 %v2236
    %v2238 = vpop.xlane.xlu0 %2237
    %v2239 = vmul.f32 %v2229, %v287
    %v2240 = vmul.f32 %v2232, %v287
    %v2241 = vmul.f32 %v2235, %v287
    %v2242 = vmul.f32 %v2238, %v287
    %v2243 = vsub.f32 %v2221, %v2239
    %v2244 = vsub.f32 %v2222, %v2240
    %v2245 = vsub.f32 %v2223, %v2241
    %v2246 = vsub.f32 %v2224, %v2242
    %v2247 = vmul.f32 %v2243, %v2243
    %v2248 = vmul.f32 %v2244, %v2244
    %v2249 = vmul.f32 %v2245, %v2245
    %v2250 = vmul.f32 %v2246, %v2246
    %v2251 = vsel %vm277, %v2247, 0.0
    %2252 = vadd.xlane.f32.xlu0 %v2251
    %v2253 = vpop.xlane.xlu0 %2252
    %v2254 = vsel %vm277, %v2248, 0.0
    %2255 = vadd.xlane.f32.xlu0 %v2254
    %v2256 = vpop.xlane.xlu0 %2255
    %v2257 = vsel %vm277, %v2249, 0.0
    %2258 = vadd.xlane.f32.xlu0 %v2257
    %v2259 = vpop.xlane.xlu0 %2258
    %v2260 = vsel %vm277, %v2250, 0.0
    %2261 = vadd.xlane.f32.xlu0 %v2260
    %v2262 = vpop.xlane.xlu0 %2261
    %v2263 = vmul.f32 %v2253, %v287
    %v2264 = vmul.f32 %v2256, %v287
    %v2265 = vmul.f32 %v2259, %v287
    %v2266 = vmul.f32 %v2262, %v287
    %v2267 = vadd.f32 %v2263, 1e-05
    %v2268 = vadd.f32 %v2264, 1e-05
    %v2269 = vadd.f32 %v2265, 1e-05
    %v2270 = vadd.f32 %v2266, 1e-05
    %v2271 = vrsqrt.pop %v2267
    %v2272 = vrsqrt.pop %v2268
    %v2273 = vrsqrt.pop %v2269
    %v2274 = vrsqrt.pop %v2270
    %v2275 = vmul.f32 %v2243, %v2271
    %v2276 = vmul.f32 %v2244, %v2272
    %v2277 = vmul.f32 %v2245, %v2273
    %v2278 = vmul.f32 %v2246, %v2274
    %v2280 = vlaneseq
    %v2281 = vshrl.u32 %v2280, 7
    %v2282 = vsub.s32 0, %v2281
    %v2283 = vrot.slane %v2225, %v2282
    %v2285 = vmul.f32 %v2275, %v2283
    %v2286 = vmul.f32 %v2276, %v2283
    %v2287 = vmul.f32 %v2277, %v2283
    %v2288 = vmul.f32 %v2278, %v2283
    %v2290 = vlaneseq
    %v2291 = vshrl.u32 %v2290, 7
    %v2292 = vsub.s32 0, %v2291
    %v2293 = vrot.slane %v2226, %v2292
    %v2295 = vadd.f32 %v2285, %v2293
    %v2296 = vadd.f32 %v2286, %v2293
    %v2297 = vadd.f32 %v2287, %v2293
    %v2298 = vadd.f32 %v2288, %v2293
    %v2299 = vld [vmem:[%s14] sm:$0xff]
    %v2300 = vld [vmem:[%s14 + $0x8] sm:$0xff]
    %v2301 = vld [vmem:[%s14 + $0x10] sm:$0xff]
    %v2302 = vld [vmem:[%s14 + $0x18] sm:$0xff]
    %v2303 = vld [vmem:[%s15] sm:$0x1]
    %v2305 = vlaneseq
    %v2306 = vshrl.u32 %v2305, 7
    %v2307 = vsub.s32 0, %v2306
    %v2308 = vrot.slane %v2303, %v2307
    %v2311 = vsel %vm277, %v2295, 0
    %v2314 = vsel %vm277, %v2296, 0
    %v2317 = vsel %vm277, %v2297, 0
    %v2320 = vsel %vm277, %v2298, 0
    %2322 = vmatprep.subr.mxu0 0.0
    %2323 = vmatpush1.msra.mxu0 %v2299
    %2324 = vmatprep.subr.mxu0 0.0
    %2325 = vmatpush1.msra.mxu0 %v2300
    %2326 = vmatprep.subr.mxu0 0.0
    %2327 = vmatpush1.msra.mxu0 %v2301
    %2328 = vmatprep.subr.mxu0 0.0
    %2329 = vmatpush1.msra.mxu0 %v2302
    %2330 = vmatprep.subr.mxu0 0.0
    %2331 = vmatpush1.msra.mxu0 0.0
    %2332 = vmatprep.subr.mxu0 0.0
    %2333 = vmatpush1.msra.mxu0 0.0
    %2334 = vmatprep.subr.mxu0 0.0
    %2335 = vmatpush1.msra.mxu0 0.0
    %2336 = vmatprep.subr.mxu0 0.0
    %2337 = vmatpush1.msra.mxu0 0.0
    %2338 = vmatprep.subr.mxu0 0.0
    %2339 = vmatpush1.msra.mxu0 0.0
    %2340 = vmatprep.subr.mxu0 0.0
    %2341 = vmatpush1.msra.mxu0 0.0
    %2342 = vmatprep.subr.mxu0 0.0
    %2343 = vmatpush1.msra.mxu0 0.0
    %2344 = vmatprep.subr.mxu0 0.0
    %2345 = vmatpush1.msra.mxu0 0.0
    %2346 = vmatprep.subr.mxu0 0.0
    %2347 = vmatpush1.msra.mxu0 0.0
    %2348 = vmatprep.subr.mxu0 0.0
    %2349 = vmatpush1.msra.mxu0 0.0
    %2350 = vmatprep.subr.mxu0 0.0
    %2351 = vmatpush1.msra.mxu0 0.0
    %2352 = vmatprep.subr.mxu0 0.0
    %2353 = vmatpush1.msra.mxu0 0.0
    %2354 = vmatprep.subr.mxu0 0.0
    %2355 = vmatpush1.msra.mxu0 0.0
    %2356 = vmatprep.subr.mxu0 0.0
    %2357 = vmatpush1.msra.mxu0 0.0
    %2358 = vmatprep.subr.mxu0 0.0
    %2359 = vmatpush1.msra.mxu0 0.0
    %2360 = vmatprep.subr.mxu0 0.0
    %2361 = vmatpush1.msra.mxu0 0.0
    %2362 = vmatprep.subr.mxu0 0.0
    %2363 = vmatpush1.msra.mxu0 0.0
    %2364 = vmatprep.subr.mxu0 0.0
    %2365 = vmatpush1.msra.mxu0 0.0
    %2366 = vmatprep.subr.mxu0 0.0
    %2367 = vmatpush1.msra.mxu0 0.0
    %2368 = vmatprep.subr.mxu0 0.0
    %2369 = vmatpush1.msra.mxu0 0.0
    %2370 = vmatprep.subr.mxu0 0.0
    %2371 = vmatpush1.msra.mxu0 0.0
    %2372 = vmatprep.subr.mxu0 0.0
    %2373 = vmatpush1.msra.mxu0 0.0
    %2374 = vmatprep.subr.mxu0 0.0
    %2375 = vmatpush1.msra.mxu0 0.0
    %2376 = vmatprep.subr.mxu0 0.0
    %2377 = vmatpush1.msra.mxu0 0.0
    %2378 = vmatprep.subr.mxu0 0.0
    %2379 = vmatpush1.msra.mxu0 0.0
    %2380 = vmatprep.subr.mxu0 0.0
    %2381 = vmatpush1.msra.mxu0 0.0
    %2382 = vmatprep.subr.mxu0 0.0
    %2383 = vmatpush1.msra.mxu0 0.0
    %2384 = vmatprep.subr.mxu0 0.0
    %2385 = vmatpush1.msra.mxu0 0.0
    %2386 = vmatprep.mubr.f32.mxu0 0.0
    %2387 = vmatmul.mubr.f32.gmra.mrb[0].mxu0 %v2311
    %v2388 = vpop.f32.mrb[0].mxu0
    %v2389 = vadd.f32 %v2308, %v2388
    %v2390 = vpop.f32.mrb[0].mxu0
    %2391 = vmatprep.mubr.f32.mxu0 0.0
    %2392 = vmatmul.mubr.f32.gmra.mrb[0].mxu0 %v2314
    %v2393 = vpop.f32.mrb[0].mxu0
    %v2394 = vadd.f32 %v2308, %v2393
    %v2395 = vpop.f32.mrb[0].mxu0
    %2396 = vmatprep.mubr.f32.mxu0 0.0
    %2397 = vmatmul.mubr.f32.gmra.mrb[0].mxu0 %v2317
    %v2398 = vpop.f32.mrb[0].mxu0
    %v2399 = vadd.f32 %v2308, %v2398
    %v2400 = vpop.f32.mrb[0].mxu0
    %2401 = vmatprep.mubr.f32.mxu0 0.0
    %2402 = vmatmul.mubr.f32.gmra.mrb[0].mxu0 %v2320
    %v2403 = vpop.f32.mrb[0].mxu0
    %v2404 = vadd.f32 %v2308, %v2403
    %v2405 = vpop.f32.mrb[0].mxu0
    %2406 = vdwg.mxu0
    %v2407 = vmul.f32 %v2389, 0.5
    %v2408 = vmul.f32 %v2394, 0.5
    %v2409 = vmul.f32 %v2399, 0.5
    %v2410 = vmul.f32 %v2404, 0.5
    %v2411 = vmul.f32 %v2389, 0.70710677
    %v2412 = vmul.f32 %v2394, 0.70710677
    %v2413 = vmul.f32 %v2399, 0.70710677
    %v2414 = vmul.f32 %v2404, 0.70710677
    %vm2415 = vcmp.ge.f32.partialorder %v2411, 0.0
    %vm2416 = vcmp.ge.f32.partialorder %v2412, 0.0
    %vm2417 = vcmp.ge.f32.partialorder %v2413, 0.0
    %vm2418 = vcmp.ge.f32.partialorder %v2414, 0.0
    %v2419 = vsel %vm2415, 1.0, -1.0
    %v2420 = vsel %vm2416, 1.0, -1.0
    %v2421 = vsel %vm2417, 1.0, -1.0
    %v2422 = vsel %vm2418, 1.0, -1.0
    %v2423 = vand.u32 2147483647, %v2411
    %v2424 = vand.u32 2147483647, %v2412
    %v2425 = vand.u32 2147483647, %v2413
    %v2426 = vand.u32 2147483647, %v2414
    %v2427 = vmul.f32 %v2423, 0.3275911
    %v2428 = vmul.f32 %v2424, 0.3275911
    %v2429 = vmul.f32 %v2425, 0.3275911
    %v2430 = vmul.f32 %v2426, 0.3275911
    %v2431 = vadd.f32 %v2427, 1.0
    %v2432 = vadd.f32 %v2428, 1.0
    %v2433 = vadd.f32 %v2429, 1.0
    %v2434 = vadd.f32 %v2430, 1.0
    %v2435 = vrcp.pop %v2431
    %v2436 = vrcp.pop %v2432
    %v2437 = vrcp.pop %v2433
    %v2438 = vrcp.pop %v2434
    %v2439 = vmul.f32 %v2435, 1.0614054
    %v2440 = vmul.f32 %v2436, 1.0614054
    %v2441 = vmul.f32 %v2437, 1.0614054
    %v2442 = vmul.f32 %v2438, 1.0614054
    %v2443 = vadd.f32 %v2439, -1.4531521
    %v2444 = vadd.f32 %v2440, -1.4531521
    %v2445 = vadd.f32 %v2441, -1.4531521
    %v2446 = vadd.f32 %v2442, -1.4531521
    %v2447 = vmul.f32 %v2443, %v2435
    %v2448 = vmul.f32 %v2444, %v2436
    %v2449 = vmul.f32 %v2445, %v2437
    %v2450 = vmul.f32 %v2446, %v2438
    %v2451 = vadd.f32 %v2447, 1.4214138
    %v2452 = vadd.f32 %v2448, 1.4214138
    %v2453 = vadd.f32 %v2449, 1.4214138
    %v2454 = vadd.f32 %v2450, 1.4214138
    %v2455 = vmul.f32 %v2451, %v2435
    %v2456 = vmul.f32 %v2452, %v2436
    %v2457 = vmul.f32 %v2453, %v2437
    %v2458 = vmul.f32 %v2454, %v2438
    %v2459 = vadd.f32 %v2455, -0.28449672
    %v2460 = vadd.f32 %v2456, -0.28449672
    %v2461 = vadd.f32 %v2457, -0.28449672
    %v2462 = vadd.f32 %v2458, -0.28449672
    %v2463 = vmul.f32 %v2459, %v2435
    %v2464 = vmul.f32 %v2460, %v2436
    %v2465 = vmul.f32 %v2461, %v2437
    %v2466 = vmul.f32 %v2462, %v2438
    %v2467 = vadd.f32 %v2463, 0.2548296
    %v2468 = vadd.f32 %v2464, 0.2548296
    %v2469 = vadd.f32 %v2465, 0.2548296
    %v2470 = vadd.f32 %v2466, 0.2548296
    %v2471 = vmul.f32 %v2467, %v2435
    %v2472 = vmul.f32 %v2468, %v2436
    %v2473 = vmul.f32 %v2469, %v2437
    %v2474 = vmul.f32 %v2470, %v2438
    %v2475 = vsub.f32 0.0, %v2423
    %v2476 = vsub.f32 0.0, %v2424
    %v2477 = vsub.f32 0.0, %v2425
    %v2478 = vsub.f32 0.0, %v2426
    %v2479 = vmul.f32 %v2475, %v2423
    %v2480 = vmul.f32 %v2476, %v2424
    %v2481 = vmul.f32 %v2477, %v2425
    %v2482 = vmul.f32 %v2478, %v2426
    %v2483 = vmul.f32 %v2479, 1.442695
    %v2484 = vpow.pop %v2483
    %v2485 = vmul.f32 %v2480, 1.442695
    %v2486 = vpow.pop %v2485
    %v2487 = vmul.f32 %v2481, 1.442695
    %v2488 = vpow.pop %v2487
    %v2489 = vmul.f32 %v2482, 1.442695
    %v2490 = vpow.pop %v2489
    %v2491 = vmul.f32 %v2471, %v2484
    %v2492 = vmul.f32 %v2472, %v2486
    %v2493 = vmul.f32 %v2473, %v2488
    %v2494 = vmul.f32 %v2474, %v2490
    %v2495 = vsub.f32 1.0, %v2491
    %v2496 = vsub.f32 1.0, %v2492
    %v2497 = vsub.f32 1.0, %v2493
    %v2498 = vsub.f32 1.0, %v2494
    %v2499 = vmul.f32 %v2419, %v2495
    %v2500 = vmul.f32 %v2420, %v2496
    %v2501 = vmul.f32 %v2421, %v2497
    %v2502 = vmul.f32 %v2422, %v2498
    %v2503 = vadd.f32 %v2499, 1.0
    %v2504 = vadd.f32 %v2500, 1.0
    %v2505 = vadd.f32 %v2501, 1.0
    %v2506 = vadd.f32 %v2502, 1.0
    %v2507 = vmul.f32 %v2407, %v2503
    %v2508 = vmul.f32 %v2408, %v2504
    %v2509 = vmul.f32 %v2409, %v2505
    %v2510 = vmul.f32 %v2410, %v2506
    %v2511 = vld [vmem:[%s16] sm:$0xff]
    %v2512 = vld [vmem:[%s16 + $0x8] sm:$0xff]
    %v2513 = vld [vmem:[%s16 + $0x10] sm:$0xff]
    %v2514 = vld [vmem:[%s16 + $0x18] sm:$0xff]
    %v2515 = vld [vmem:[%s16 + $0x20] sm:$0xff]
    %v2516 = vld [vmem:[%s16 + $0x28] sm:$0xff]
    %v2517 = vld [vmem:[%s16 + $0x30] sm:$0xff]
    %v2518 = vld [vmem:[%s16 + $0x38] sm:$0xff]
    %vm2519 = vcmask 523264
    %v2521 = vsel %vm2519, %v2507, 0
    %v2524 = vsel %vm2519, %v2508, 0
    %v2527 = vsel %vm2519, %v2509, 0
    %v2530 = vsel %vm2519, %v2510, 0
    %2532 = vmatprep.subr.mxu0 0.0
    %2533 = vmatpush1.msra.mxu0 %v2511
    %2534 = vmatprep.subr.mxu0 0.0
    %2535 = vmatpush1.msra.mxu0 %v2512
    %2536 = vmatprep.subr.mxu0 0.0
    %2537 = vmatpush1.msra.mxu0 %v2513
    %2538 = vmatprep.subr.mxu0 0.0
    %2539 = vmatpush1.msra.mxu0 %v2514
    %2540 = vmatprep.subr.mxu0 0.0
    %2541 = vmatpush1.msra.mxu0 %v2515
    %2542 = vmatprep.subr.mxu0 0.0
    %2543 = vmatpush1.msra.mxu0 %v2516
    %2544 = vmatprep.subr.mxu0 0.0
    %2545 = vmatpush1.msra.mxu0 %v2517
    %2546 = vmatprep.subr.mxu0 0.0
    %2547 = vmatpush1.msra.mxu0 %v2518
    %2548 = vmatprep.subr.mxu0 0.0
    %2549 = vmatpush1.msra.mxu0 0.0
    %2550 = vmatprep.subr.mxu0 0.0
    %2551 = vmatpush1.msra.mxu0 0.0
    %2552 = vmatprep.subr.mxu0 0.0
    %2553 = vmatpush1.msra.mxu0 0.0
    %2554 = vmatprep.subr.mxu0 0.0
    %2555 = vmatpush1.msra.mxu0 0.0
    %2556 = vmatprep.subr.mxu0 0.0
    %2557 = vmatpush1.msra.mxu0 0.0
    %2558 = vmatprep.subr.mxu0 0.0
    %2559 = vmatpush1.msra.mxu0 0.0
    %2560 = vmatprep.subr.mxu0 0.0
    %2561 = vmatpush1.msra.mxu0 0.0
    %2562 = vmatprep.subr.mxu0 0.0
    %2563 = vmatpush1.msra.mxu0 0.0
    %2564 = vmatprep.subr.mxu0 0.0
    %2565 = vmatpush1.msra.mxu0 0.0
    %2566 = vmatprep.subr.mxu0 0.0
    %2567 = vmatpush1.msra.mxu0 0.0
    %2568 = vmatprep.subr.mxu0 0.0
    %2569 = vmatpush1.msra.mxu0 0.0
    %2570 = vmatprep.subr.mxu0 0.0
    %2571 = vmatpush1.msra.mxu0 0.0
    %2572 = vmatprep.subr.mxu0 0.0
    %2573 = vmatpush1.msra.mxu0 0.0
    %2574 = vmatprep.subr.mxu0 0.0
    %2575 = vmatpush1.msra.mxu0 0.0
    %2576 = vmatprep.subr.mxu0 0.0
    %2577 = vmatpush1.msra.mxu0 0.0
    %2578 = vmatprep.subr.mxu0 0.0
    %2579 = vmatpush1.msra.mxu0 0.0
    %2580 = vmatprep.subr.mxu0 0.0
    %2581 = vmatpush1.msra.mxu0 0.0
    %2582 = vmatprep.subr.mxu0 0.0
    %2583 = vmatpush1.msra.mxu0 0.0
    %2584 = vmatprep.subr.mxu0 0.0
    %2585 = vmatpush1.msra.mxu0 0.0
    %2586 = vmatprep.subr.mxu0 0.0
    %2587 = vmatpush1.msra.mxu0 0.0
    %2588 = vmatprep.subr.mxu0 0.0
    %2589 = vmatpush1.msra.mxu0 0.0
    %2590 = vmatprep.subr.mxu0 0.0
    %2591 = vmatpush1.msra.mxu0 0.0
    %2592 = vmatprep.subr.mxu0 0.0
    %2593 = vmatpush1.msra.mxu0 0.0
    %2594 = vmatprep.subr.mxu0 0.0
    %2595 = vmatpush1.msra.mxu0 0.0
    %2596 = vmatprep.mubr.f32.mxu0 0.0
    %2597 = vmatmul.mubr.f32.gmra.mrb[0].mxu0 %v2521
    %v2598 = vpop.f32.mrb[0].mxu0
    %v2599 = vadd.f32 0.0, %v2598
    %v2600 = vpop.f32.mrb[0].mxu0
    %2601 = vmatprep.mubr.f32.mxu0 0.0
    %2602 = vmatmul.mubr.f32.gmra.mrb[0].mxu0 %v2524
    %v2603 = vpop.f32.mrb[0].mxu0
    %v2604 = vadd.f32 0.0, %v2603
    %v2605 = vpop.f32.mrb[0].mxu0
    %2606 = vmatprep.mubr.f32.mxu0 0.0
    %2607 = vmatmul.mubr.f32.gmra.mrb[0].mxu0 %v2527
    %v2608 = vpop.f32.mrb[0].mxu0
    %v2609 = vadd.f32 0.0, %v2608
    %v2610 = vpop.f32.mrb[0].mxu0
    %2611 = vmatprep.mubr.f32.mxu0 0.0
    %2612 = vmatmul.mubr.f32.gmra.mrb[0].mxu0 %v2530
    %v2613 = vpop.f32.mrb[0].mxu0
    %v2614 = vadd.f32 0.0, %v2613
    %v2615 = vpop.f32.mrb[0].mxu0
    %2616 = vdwg.mxu0
    %v2617 = vadd.f32 %v2221, %v2599
    %v2618 = vadd.f32 %v2222, %v2604
    %v2619 = vadd.f32 %v2223, %v2609
    %v2620 = vadd.f32 %v2224, %v2614
    %v2621 = vld [vmem:[%s17] sm:$0x1]
    %v2623 = vlaneseq
    %v2624 = vshrl.u32 %v2623, 7
    %v2625 = vsub.s32 0, %v2624
    %v2626 = vrot.slane %v2621, %v2625
    %v2628 = vadd.f32 %v2617, %v2626
    %v2629 = vadd.f32 %v2618, %v2626
    %v2630 = vadd.f32 %v2619, %v2626
    %v2631 = vadd.f32 %v2620, %v2626
    %s2632 = scalar_lea.vmem %s7, 1
    %v2633 = vld [vmem:[%s2632] sm:$0x1]
    %s2634 = scalar_lea.vmem %s8, 1
    %v2635 = vld [vmem:[%s2634] sm:$0x1]
    %v2636 = vsel %vm277, %v2628, 0.0
    %2637 = vadd.xlane.f32.xlu0 %v2636
    %v2638 = vpop.xlane.xlu0 %2637
    %v2639 = vsel %vm277, %v2629, 0.0
    %2640 = vadd.xlane.f32.xlu0 %v2639
    %v2641 = vpop.xlane.xlu0 %2640
    %v2642 = vsel %vm277, %v2630, 0.0
    %2643 = vadd.xlane.f32.xlu0 %v2642
    %v2644 = vpop.xlane.xlu0 %2643
    %v2645 = vsel %vm277, %v2631, 0.0
    %2646 = vadd.xlane.f32.xlu0 %v2645
    %v2647 = vpop.xlane.xlu0 %2646
    %v2648 = vmul.f32 %v2638, %v287
    %v2649 = vmul.f32 %v2641, %v287
    %v2650 = vmul.f32 %v2644, %v287
    %v2651 = vmul.f32 %v2647, %v287
    %v2652 = vsub.f32 %v2628, %v2648
    %v2653 = vsub.f32 %v2629, %v2649
    %v2654 = vsub.f32 %v2630, %v2650
    %v2655 = vsub.f32 %v2631, %v2651
    %v2656 = vmul.f32 %v2652, %v2652
    %v2657 = vmul.f32 %v2653, %v2653
    %v2658 = vmul.f32 %v2654, %v2654
    %v2659 = vmul.f32 %v2655, %v2655
    %v2660 = vsel %vm277, %v2656, 0.0
    %2661 = vadd.xlane.f32.xlu0 %v2660
    %v2662 = vpop.xlane.xlu0 %2661
    %v2663 = vsel %vm277, %v2657, 0.0
    %2664 = vadd.xlane.f32.xlu0 %v2663
    %v2665 = vpop.xlane.xlu0 %2664
    %v2666 = vsel %vm277, %v2658, 0.0
    %2667 = vadd.xlane.f32.xlu0 %v2666
    %v2668 = vpop.xlane.xlu0 %2667
    %v2669 = vsel %vm277, %v2659, 0.0
    %2670 = vadd.xlane.f32.xlu0 %v2669
    %v2671 = vpop.xlane.xlu0 %2670
    %v2672 = vmul.f32 %v2662, %v287
    %v2673 = vmul.f32 %v2665, %v287
    %v2674 = vmul.f32 %v2668, %v287
    %v2675 = vmul.f32 %v2671, %v287
    %v2676 = vadd.f32 %v2672, 1e-05
    %v2677 = vadd.f32 %v2673, 1e-05
    %v2678 = vadd.f32 %v2674, 1e-05
    %v2679 = vadd.f32 %v2675, 1e-05
    %v2680 = vrsqrt.pop %v2676
    %v2681 = vrsqrt.pop %v2677
    %v2682 = vrsqrt.pop %v2678
    %v2683 = vrsqrt.pop %v2679
    %v2684 = vmul.f32 %v2652, %v2680
    %v2685 = vmul.f32 %v2653, %v2681
    %v2686 = vmul.f32 %v2654, %v2682
    %v2687 = vmul.f32 %v2655, %v2683
    %v2689 = vlaneseq
    %v2690 = vshrl.u32 %v2689, 7
    %v2691 = vsub.s32 0, %v2690
    %v2692 = vrot.slane %v2633, %v2691
    %v2694 = vmul.f32 %v2684, %v2692
    %v2695 = vmul.f32 %v2685, %v2692
    %v2696 = vmul.f32 %v2686, %v2692
    %v2697 = vmul.f32 %v2687, %v2692
    %v2699 = vlaneseq
    %v2700 = vshrl.u32 %v2699, 7
    %v2701 = vsub.s32 0, %v2700
    %v2702 = vrot.slane %v2635, %v2701
    %v2704 = vadd.f32 %v2694, %v2702
    %v2705 = vadd.f32 %v2695, %v2702
    %v2706 = vadd.f32 %v2696, %v2702
    %v2707 = vadd.f32 %v2697, %v2702
    %s2708 = scalar_lea.vmem %s9, 32
    %v2709 = vld [vmem:[%s2708] sm:$0xff]
    %v2710 = vld [vmem:[%s2708 + $0x8] sm:$0xff]
    %v2711 = vld [vmem:[%s2708 + $0x10] sm:$0xff]
    %v2712 = vld [vmem:[%s2708 + $0x18] sm:$0xff]
    %v2714 = vsel %vm277, %v2704, 0
    %v2717 = vsel %vm277, %v2705, 0
    %v2720 = vsel %vm277, %v2706, 0
    %v2723 = vsel %vm277, %v2707, 0
    %2725 = vmatprep.subr.mxu0 0.0
    %2726 = vmatpush1.msra.mxu0 %v2709
    %2727 = vmatprep.subr.mxu0 0.0
    %2728 = vmatpush1.msra.mxu0 %v2710
    %2729 = vmatprep.subr.mxu0 0.0
    %2730 = vmatpush1.msra.mxu0 %v2711
    %2731 = vmatprep.subr.mxu0 0.0
    %2732 = vmatpush1.msra.mxu0 %v2712
    %2733 = vmatprep.subr.mxu0 0.0
    %2734 = vmatpush1.msra.mxu0 0.0
    %2735 = vmatprep.subr.mxu0 0.0
    %2736 = vmatpush1.msra.mxu0 0.0
    %2737 = vmatprep.subr.mxu0 0.0
    %2738 = vmatpush1.msra.mxu0 0.0
    %2739 = vmatprep.subr.mxu0 0.0
    %2740 = vmatpush1.msra.mxu0 0.0
    %2741 = vmatprep.subr.mxu0 0.0
    %2742 = vmatpush1.msra.mxu0 0.0
    %2743 = vmatprep.subr.mxu0 0.0
    %2744 = vmatpush1.msra.mxu0 0.0
    %2745 = vmatprep.subr.mxu0 0.0
    %2746 = vmatpush1.msra.mxu0 0.0
    %2747 = vmatprep.subr.mxu0 0.0
    %2748 = vmatpush1.msra.mxu0 0.0
    %2749 = vmatprep.subr.mxu0 0.0
    %2750 = vmatpush1.msra.mxu0 0.0
    %2751 = vmatprep.subr.mxu0 0.0
    %2752 = vmatpush1.msra.mxu0 0.0
    %2753 = vmatprep.subr.mxu0 0.0
    %2754 = vmatpush1.msra.mxu0 0.0
    %2755 = vmatprep.subr.mxu0 0.0
    %2756 = vmatpush1.msra.mxu0 0.0
    %2757 = vmatprep.subr.mxu0 0.0
    %2758 = vmatpush1.msra.mxu0 0.0
    %2759 = vmatprep.subr.mxu0 0.0
    %2760 = vmatpush1.msra.mxu0 0.0
    %2761 = vmatprep.subr.mxu0 0.0
    %2762 = vmatpush1.msra.mxu0 0.0
    %2763 = vmatprep.subr.mxu0 0.0
    %2764 = vmatpush1.msra.mxu0 0.0
    %2765 = vmatprep.subr.mxu0 0.0
    %2766 = vmatpush1.msra.mxu0 0.0
    %2767 = vmatprep.subr.mxu0 0.0
    %2768 = vmatpush1.msra.mxu0 0.0
    %2769 = vmatprep.subr.mxu0 0.0
    %2770 = vmatpush1.msra.mxu0 0.0
    %2771 = vmatprep.subr.mxu0 0.0
    %2772 = vmatpush1.msra.mxu0 0.0
    %2773 = vmatprep.subr.mxu0 0.0
    %2774 = vmatpush1.msra.mxu0 0.0
    %2775 = vmatprep.subr.mxu0 0.0
    %2776 = vmatpush1.msra.mxu0 0.0
    %2777 = vmatprep.subr.mxu0 0.0
    %2778 = vmatpush1.msra.mxu0 0.0
    %2779 = vmatprep.subr.mxu0 0.0
    %2780 = vmatpush1.msra.mxu0 0.0
    %2781 = vmatprep.subr.mxu0 0.0
    %2782 = vmatpush1.msra.mxu0 0.0
    %2783 = vmatprep.subr.mxu0 0.0
    %2784 = vmatpush1.msra.mxu0 0.0
    %2785 = vmatprep.subr.mxu0 0.0
    %2786 = vmatpush1.msra.mxu0 0.0
    %2787 = vmatprep.subr.mxu0 0.0
    %2788 = vmatpush1.msra.mxu0 0.0
    %2789 = vmatprep.mubr.f32.mxu0 0.0
    %2790 = vmatmul.mubr.f32.gmra.mrb[0].mxu0 %v2714
    %v2791 = vpop.f32.mrb[0].mxu0
    %v2792 = vadd.f32 0.0, %v2791
    %v2793 = vpop.f32.mrb[0].mxu0
    %2794 = vmatprep.mubr.f32.mxu0 0.0
    %2795 = vmatmul.mubr.f32.gmra.mrb[0].mxu0 %v2717
    %v2796 = vpop.f32.mrb[0].mxu0
    %v2797 = vadd.f32 0.0, %v2796
    %v2798 = vpop.f32.mrb[0].mxu0
    %2799 = vmatprep.mubr.f32.mxu0 0.0
    %2800 = vmatmul.mubr.f32.gmra.mrb[0].mxu0 %v2720
    %v2801 = vpop.f32.mrb[0].mxu0
    %v2802 = vadd.f32 0.0, %v2801
    %v2803 = vpop.f32.mrb[0].mxu0
    %2804 = vmatprep.mubr.f32.mxu0 0.0
    %2805 = vmatmul.mubr.f32.gmra.mrb[0].mxu0 %v2723
    %v2806 = vpop.f32.mrb[0].mxu0
    %v2807 = vadd.f32 0.0, %v2806
    %v2808 = vpop.f32.mrb[0].mxu0
    %2809 = vdwg.mxu0
    %2812 = vrot.lane.b32.xlu0 %v2792, 96
    %v2813 = vpop.permute.xlu0 %2812
    %2814 = vrot.lane.b32.xlu0 %v2797, 96
    %v2815 = vpop.permute.xlu0 %2814
    %v2816 = vsel %vm440, %v2792, 0
    %v2818 = vsel %vm440, %v2797, 0
    %v2820 = vsel %vm440, %v2813, 0
    %v2822 = vsel %vm440, %v2815, 0
    %2824 = vmatprep.subr.mxu0 0.0
    %2825 = vmatpush1.xpose.msra.mxu0 %v2820
    %2826 = vmatprep.subr.mxu0 0.0
    %2827 = vmatpush1.xpose.msra.mxu0 %v2822
    %2828 = vmatprep.subr.mxu0 0.0
    %2829 = vmatpush1.xpose.msra.mxu0 0.0
    %2830 = vmatprep.subr.mxu0 0.0
    %2831 = vmatpush1.xpose.msra.mxu0 0.0
    %2832 = vmatprep.subr.mxu0 0.0
    %2833 = vmatpush1.xpose.msra.mxu0 0.0
    %2834 = vmatprep.subr.mxu0 0.0
    %2835 = vmatpush1.xpose.msra.mxu0 0.0
    %2836 = vmatprep.subr.mxu0 0.0
    %2837 = vmatpush1.xpose.msra.mxu0 0.0
    %2838 = vmatprep.subr.mxu0 0.0
    %2839 = vmatpush1.xpose.msra.mxu0 0.0
    %2840 = vmatprep.subr.mxu0 0.0
    %2841 = vmatpush1.xpose.msra.mxu0 0.0
    %2842 = vmatprep.subr.mxu0 0.0
    %2843 = vmatpush1.xpose.msra.mxu0 0.0
    %2844 = vmatprep.subr.mxu0 0.0
    %2845 = vmatpush1.xpose.msra.mxu0 0.0
    %2846 = vmatprep.subr.mxu0 0.0
    %2847 = vmatpush1.xpose.msra.mxu0 0.0
    %2848 = vmatprep.subr.mxu0 0.0
    %2849 = vmatpush1.xpose.msra.mxu0 0.0
    %2850 = vmatprep.subr.mxu0 0.0
    %2851 = vmatpush1.xpose.msra.mxu0 0.0
    %2852 = vmatprep.subr.mxu0 0.0
    %2853 = vmatpush1.xpose.msra.mxu0 0.0
    %2854 = vmatprep.subr.mxu0 0.0
    %2855 = vmatpush1.xpose.msra.mxu0 0.0
    %2856 = vmatprep.subr.mxu0 0.0
    %2857 = vmatpush1.xpose.msra.mxu0 0.0
    %2858 = vmatprep.subr.mxu0 0.0
    %2859 = vmatpush1.xpose.msra.mxu0 0.0
    %2860 = vmatprep.subr.mxu0 0.0
    %2861 = vmatpush1.xpose.msra.mxu0 0.0
    %2862 = vmatprep.subr.mxu0 0.0
    %2863 = vmatpush1.xpose.msra.mxu0 0.0
    %2864 = vmatprep.subr.mxu0 0.0
    %2865 = vmatpush1.xpose.msra.mxu0 0.0
    %2866 = vmatprep.subr.mxu0 0.0
    %2867 = vmatpush1.xpose.msra.mxu0 0.0
    %2868 = vmatprep.subr.mxu0 0.0
    %2869 = vmatpush1.xpose.msra.mxu0 0.0
    %2870 = vmatprep.subr.mxu0 0.0
    %2871 = vmatpush1.xpose.msra.mxu0 0.0
    %2872 = vmatprep.subr.mxu0 0.0
    %2873 = vmatpush1.xpose.msra.mxu0 0.0
    %2874 = vmatprep.subr.mxu0 0.0
    %2875 = vmatpush1.xpose.msra.mxu0 0.0
    %2876 = vmatprep.subr.mxu0 0.0
    %2877 = vmatpush1.xpose.msra.mxu0 0.0
    %2878 = vmatprep.subr.mxu0 0.0
    %2879 = vmatpush1.xpose.msra.mxu0 0.0
    %2880 = vmatprep.subr.mxu0 0.0
    %2881 = vmatpush1.xpose.msra.mxu0 0.0
    %2882 = vmatprep.subr.mxu0 0.0
    %2883 = vmatpush1.xpose.msra.mxu0 0.0
    %2884 = vmatprep.subr.mxu0 0.0
    %2885 = vmatpush1.xpose.msra.mxu0 0.0
    %2886 = vmatprep.subr.mxu0 0.0
    %2887 = vmatpush1.xpose.msra.mxu0 0.0
    %2888 = vmatprep.mubr.f32.mxu0 0.0
    %2889 = vmatmul.mubr.f32.gmra.mrb[0].mxu0 %v2816
    %v2890 = vpop.f32.mrb[0].mxu0
    %v2891 = vadd.f32 0.0, %v2890
    %v2892 = vpop.f32.mrb[0].mxu0
    %2893 = vmatprep.mubr.f32.mxu0 0.0
    %2894 = vmatmul.mubr.f32.gmra.mrb[0].mxu0 %v2818
    %v2895 = vpop.f32.mrb[0].mxu0
    %v2896 = vadd.f32 0.0, %v2895
    %v2897 = vpop.f32.mrb[0].mxu0
    %2898 = vdwg.mxu0
    %2899 = vrot.lane.b32.xlu0 %v2792, 120
    %v2900 = vpop.permute.xlu0 %2899
    %2901 = vrot.lane.b32.xlu0 %v2797, 120
    %v2902 = vpop.permute.xlu0 %2901
    %2903 = vrot.lane.b32.xlu0 %v2792, 88
    %v2904 = vpop.permute.xlu0 %2903
    %2905 = vrot.lane.b32.xlu0 %v2797, 88
    %v2906 = vpop.permute.xlu0 %2905
    %v2907 = vsel %vm440, %v2900, 0
    %v2909 = vsel %vm440, %v2902, 0
    %v2911 = vsel %vm440, %v2904, 0
    %v2913 = vsel %vm440, %v2906, 0
    %2915 = vmatprep.subr.mxu0 0.0
    %2916 = vmatpush1.xpose.msra.mxu0 %v2911
    %2917 = vmatprep.subr.mxu0 0.0
    %2918 = vmatpush1.xpose.msra.mxu0 %v2913
    %2919 = vmatprep.subr.mxu0 0.0
    %2920 = vmatpush1.xpose.msra.mxu0 0.0
    %2921 = vmatprep.subr.mxu0 0.0
    %2922 = vmatpush1.xpose.msra.mxu0 0.0
    %2923 = vmatprep.subr.mxu0 0.0
    %2924 = vmatpush1.xpose.msra.mxu0 0.0
    %2925 = vmatprep.subr.mxu0 0.0
    %2926 = vmatpush1.xpose.msra.mxu0 0.0
    %2927 = vmatprep.subr.mxu0 0.0
    %2928 = vmatpush1.xpose.msra.mxu0 0.0
    %2929 = vmatprep.subr.mxu0 0.0
    %2930 = vmatpush1.xpose.msra.mxu0 0.0
    %2931 = vmatprep.subr.mxu0 0.0
    %2932 = vmatpush1.xpose.msra.mxu0 0.0
    %2933 = vmatprep.subr.mxu0 0.0
    %2934 = vmatpush1.xpose.msra.mxu0 0.0
    %2935 = vmatprep.subr.mxu0 0.0
    %2936 = vmatpush1.xpose.msra.mxu0 0.0
    %2937 = vmatprep.subr.mxu0 0.0
    %2938 = vmatpush1.xpose.msra.mxu0 0.0
    %2939 = vmatprep.subr.mxu0 0.0
    %2940 = vmatpush1.xpose.msra.mxu0 0.0
    %2941 = vmatprep.subr.mxu0 0.0
    %2942 = vmatpush1.xpose.msra.mxu0 0.0
    %2943 = vmatprep.subr.mxu0 0.0
    %2944 = vmatpush1.xpose.msra.mxu0 0.0
    %2945 = vmatprep.subr.mxu0 0.0
    %2946 = vmatpush1.xpose.msra.mxu0 0.0
    %2947 = vmatprep.subr.mxu0 0.0
    %2948 = vmatpush1.xpose.msra.mxu0 0.0
    %2949 = vmatprep.subr.mxu0 0.0
    %2950 = vmatpush1.xpose.msra.mxu0 0.0
    %2951 = vmatprep.subr.mxu0 0.0
    %2952 = vmatpush1.xpose.msra.mxu0 0.0
    %2953 = vmatprep.subr.mxu0 0.0
    %2954 = vmatpush1.xpose.msra.mxu0 0.0
    %2955 = vmatprep.subr.mxu0 0.0
    %2956 = vmatpush1.xpose.msra.mxu0 0.0
    %2957 = vmatprep.subr.mxu0 0.0
    %2958 = vmatpush1.xpose.msra.mxu0 0.0
    %2959 = vmatprep.subr.mxu0 0.0
    %2960 = vmatpush1.xpose.msra.mxu0 0.0
    %2961 = vmatprep.subr.mxu0 0.0
    %2962 = vmatpush1.xpose.msra.mxu0 0.0
    %2963 = vmatprep.subr.mxu0 0.0
    %2964 = vmatpush1.xpose.msra.mxu0 0.0
    %2965 = vmatprep.subr.mxu0 0.0
    %2966 = vmatpush1.xpose.msra.mxu0 0.0
    %2967 = vmatprep.subr.mxu0 0.0
    %2968 = vmatpush1.xpose.msra.mxu0 0.0
    %2969 = vmatprep.subr.mxu0 0.0
    %2970 = vmatpush1.xpose.msra.mxu0 0.0
    %2971 = vmatprep.subr.mxu0 0.0
    %2972 = vmatpush1.xpose.msra.mxu0 0.0
    %2973 = vmatprep.subr.mxu0 0.0
    %2974 = vmatpush1.xpose.msra.mxu0 0.0
    %2975 = vmatprep.subr.mxu0 0.0
    %2976 = vmatpush1.xpose.msra.mxu0 0.0
    %2977 = vmatprep.subr.mxu0 0.0
    %2978 = vmatpush1.xpose.msra.mxu0 0.0
    %2979 = vmatprep.mubr.f32.mxu0 0.0
    %2980 = vmatmul.mubr.f32.gmra.mrb[0].mxu0 %v2907
    %v2981 = vpop.f32.mrb[0].mxu0
    %v2982 = vadd.f32 0.0, %v2981
    %v2983 = vpop.f32.mrb[0].mxu0
    %2984 = vmatprep.mubr.f32.mxu0 0.0
    %2985 = vmatmul.mubr.f32.gmra.mrb[0].mxu0 %v2909
    %v2986 = vpop.f32.mrb[0].mxu0
    %v2987 = vadd.f32 0.0, %v2986
    %v2988 = vpop.f32.mrb[0].mxu0
    %2989 = vdwg.mxu0
    %2990 = vrot.lane.b32.xlu0 %v2792, 112
    %v2991 = vpop.permute.xlu0 %2990
    %2992 = vrot.lane.b32.xlu0 %v2797, 112
    %v2993 = vpop.permute.xlu0 %2992
    %2994 = vrot.lane.b32.xlu0 %v2792, 80
    %v2995 = vpop.permute.xlu0 %2994
    %2996 = vrot.lane.b32.xlu0 %v2797, 80
    %v2997 = vpop.permute.xlu0 %2996
    %v2998 = vsel %vm440, %v2991, 0
    %v3000 = vsel %vm440, %v2993, 0
    %v3002 = vsel %vm440, %v2995, 0
    %v3004 = vsel %vm440, %v2997, 0
    %3006 = vmatprep.subr.mxu0 0.0
    %3007 = vmatpush1.xpose.msra.mxu0 %v3002
    %3008 = vmatprep.subr.mxu0 0.0
    %3009 = vmatpush1.xpose.msra.mxu0 %v3004
    %3010 = vmatprep.subr.mxu0 0.0
    %3011 = vmatpush1.xpose.msra.mxu0 0.0
    %3012 = vmatprep.subr.mxu0 0.0
    %3013 = vmatpush1.xpose.msra.mxu0 0.0
    %3014 = vmatprep.subr.mxu0 0.0
    %3015 = vmatpush1.xpose.msra.mxu0 0.0
    %3016 = vmatprep.subr.mxu0 0.0
    %3017 = vmatpush1.xpose.msra.mxu0 0.0
    %3018 = vmatprep.subr.mxu0 0.0
    %3019 = vmatpush1.xpose.msra.mxu0 0.0
    %3020 = vmatprep.subr.mxu0 0.0
    %3021 = vmatpush1.xpose.msra.mxu0 0.0
    %3022 = vmatprep.subr.mxu0 0.0
    %3023 = vmatpush1.xpose.msra.mxu0 0.0
    %3024 = vmatprep.subr.mxu0 0.0
    %3025 = vmatpush1.xpose.msra.mxu0 0.0
    %3026 = vmatprep.subr.mxu0 0.0
    %3027 = vmatpush1.xpose.msra.mxu0 0.0
    %3028 = vmatprep.subr.mxu0 0.0
    %3029 = vmatpush1.xpose.msra.mxu0 0.0
    %3030 = vmatprep.subr.mxu0 0.0
    %3031 = vmatpush1.xpose.msra.mxu0 0.0
    %3032 = vmatprep.subr.mxu0 0.0
    %3033 = vmatpush1.xpose.msra.mxu0 0.0
    %3034 = vmatprep.subr.mxu0 0.0
    %3035 = vmatpush1.xpose.msra.mxu0 0.0
    %3036 = vmatprep.subr.mxu0 0.0
    %3037 = vmatpush1.xpose.msra.mxu0 0.0
    %3038 = vmatprep.subr.mxu0 0.0
    %3039 = vmatpush1.xpose.msra.mxu0 0.0
    %3040 = vmatprep.subr.mxu0 0.0
    %3041 = vmatpush1.xpose.msra.mxu0 0.0
    %3042 = vmatprep.subr.mxu0 0.0
    %3043 = vmatpush1.xpose.msra.mxu0 0.0
    %3044 = vmatprep.subr.mxu0 0.0
    %3045 = vmatpush1.xpose.msra.mxu0 0.0
    %3046 = vmatprep.subr.mxu0 0.0
    %3047 = vmatpush1.xpose.msra.mxu0 0.0
    %3048 = vmatprep.subr.mxu0 0.0
    %3049 = vmatpush1.xpose.msra.mxu0 0.0
    %3050 = vmatprep.subr.mxu0 0.0
    %3051 = vmatpush1.xpose.msra.mxu0 0.0
    %3052 = vmatprep.subr.mxu0 0.0
    %3053 = vmatpush1.xpose.msra.mxu0 0.0
    %3054 = vmatprep.subr.mxu0 0.0
    %3055 = vmatpush1.xpose.msra.mxu0 0.0
    %3056 = vmatprep.subr.mxu0 0.0
    %3057 = vmatpush1.xpose.msra.mxu0 0.0
    %3058 = vmatprep.subr.mxu0 0.0
    %3059 = vmatpush1.xpose.msra.mxu0 0.0
    %3060 = vmatprep.subr.mxu0 0.0
    %3061 = vmatpush1.xpose.msra.mxu0 0.0
    %3062 = vmatprep.subr.mxu0 0.0
    %3063 = vmatpush1.xpose.msra.mxu0 0.0
    %3064 = vmatprep.subr.mxu0 0.0
    %3065 = vmatpush1.xpose.msra.mxu0 0.0
    %3066 = vmatprep.subr.mxu0 0.0
    %3067 = vmatpush1.xpose.msra.mxu0 0.0
    %3068 = vmatprep.subr.mxu0 0.0
    %3069 = vmatpush1.xpose.msra.mxu0 0.0
    %3070 = vmatprep.mubr.f32.mxu0 0.0
    %3071 = vmatmul.mubr.f32.gmra.mrb[0].mxu0 %v2998
    %v3072 = vpop.f32.mrb[0].mxu0
    %v3073 = vadd.f32 0.0, %v3072
    %v3074 = vpop.f32.mrb[0].mxu0
    %3075 = vmatprep.mubr.f32.mxu0 0.0
    %3076 = vmatmul.mubr.f32.gmra.mrb[0].mxu0 %v3000
    %v3077 = vpop.f32.mrb[0].mxu0
    %v3078 = vadd.f32 0.0, %v3077
    %v3079 = vpop.f32.mrb[0].mxu0
    %3080 = vdwg.mxu0
    %3081 = vrot.lane.b32.xlu0 %v2792, 104
    %v3082 = vpop.permute.xlu0 %3081
    %3083 = vrot.lane.b32.xlu0 %v2797, 104
    %v3084 = vpop.permute.xlu0 %3083
    %3085 = vrot.lane.b32.xlu0 %v2792, 72
    %v3086 = vpop.permute.xlu0 %3085
    %3087 = vrot.lane.b32.xlu0 %v2797, 72
    %v3088 = vpop.permute.xlu0 %3087
    %v3089 = vsel %vm440, %v3082, 0
    %v3091 = vsel %vm440, %v3084, 0
    %v3093 = vsel %vm440, %v3086, 0
    %v3095 = vsel %vm440, %v3088, 0
    %3097 = vmatprep.subr.mxu0 0.0
    %3098 = vmatpush1.xpose.msra.mxu0 %v3093
    %3099 = vmatprep.subr.mxu0 0.0
    %3100 = vmatpush1.xpose.msra.mxu0 %v3095
    %3101 = vmatprep.subr.mxu0 0.0
    %3102 = vmatpush1.xpose.msra.mxu0 0.0
    %3103 = vmatprep.subr.mxu0 0.0
    %3104 = vmatpush1.xpose.msra.mxu0 0.0
    %3105 = vmatprep.subr.mxu0 0.0
    %3106 = vmatpush1.xpose.msra.mxu0 0.0
    %3107 = vmatprep.subr.mxu0 0.0
    %3108 = vmatpush1.xpose.msra.mxu0 0.0
    %3109 = vmatprep.subr.mxu0 0.0
    %3110 = vmatpush1.xpose.msra.mxu0 0.0
    %3111 = vmatprep.subr.mxu0 0.0
    %3112 = vmatpush1.xpose.msra.mxu0 0.0
    %3113 = vmatprep.subr.mxu0 0.0
    %3114 = vmatpush1.xpose.msra.mxu0 0.0
    %3115 = vmatprep.subr.mxu0 0.0
    %3116 = vmatpush1.xpose.msra.mxu0 0.0
    %3117 = vmatprep.subr.mxu0 0.0
    %3118 = vmatpush1.xpose.msra.mxu0 0.0
    %3119 = vmatprep.subr.mxu0 0.0
    %3120 = vmatpush1.xpose.msra.mxu0 0.0
    %3121 = vmatprep.subr.mxu0 0.0
    %3122 = vmatpush1.xpose.msra.mxu0 0.0
    %3123 = vmatprep.subr.mxu0 0.0
    %3124 = vmatpush1.xpose.msra.mxu0 0.0
    %3125 = vmatprep.subr.mxu0 0.0
    %3126 = vmatpush1.xpose.msra.mxu0 0.0
    %3127 = vmatprep.subr.mxu0 0.0
    %3128 = vmatpush1.xpose.msra.mxu0 0.0
    %3129 = vmatprep.subr.mxu0 0.0
    %3130 = vmatpush1.xpose.msra.mxu0 0.0
    %3131 = vmatprep.subr.mxu0 0.0
    %3132 = vmatpush1.xpose.msra.mxu0 0.0
    %3133 = vmatprep.subr.mxu0 0.0
    %3134 = vmatpush1.xpose.msra.mxu0 0.0
    %3135 = vmatprep.subr.mxu0 0.0
    %3136 = vmatpush1.xpose.msra.mxu0 0.0
    %3137 = vmatprep.subr.mxu0 0.0
    %3138 = vmatpush1.xpose.msra.mxu0 0.0
    %3139 = vmatprep.subr.mxu0 0.0
    %3140 = vmatpush1.xpose.msra.mxu0 0.0
    %3141 = vmatprep.subr.mxu0 0.0
    %3142 = vmatpush1.xpose.msra.mxu0 0.0
    %3143 = vmatprep.subr.mxu0 0.0
    %3144 = vmatpush1.xpose.msra.mxu0 0.0
    %3145 = vmatprep.subr.mxu0 0.0
    %3146 = vmatpush1.xpose.msra.mxu0 0.0
    %3147 = vmatprep.subr.mxu0 0.0
    %3148 = vmatpush1.xpose.msra.mxu0 0.0
    %3149 = vmatprep.subr.mxu0 0.0
    %3150 = vmatpush1.xpose.msra.mxu0 0.0
    %3151 = vmatprep.subr.mxu0 0.0
    %3152 = vmatpush1.xpose.msra.mxu0 0.0
    %3153 = vmatprep.subr.mxu0 0.0
    %3154 = vmatpush1.xpose.msra.mxu0 0.0
    %3155 = vmatprep.subr.mxu0 0.0
    %3156 = vmatpush1.xpose.msra.mxu0 0.0
    %3157 = vmatprep.subr.mxu0 0.0
    %3158 = vmatpush1.xpose.msra.mxu0 0.0
    %3159 = vmatprep.subr.mxu0 0.0
    %3160 = vmatpush1.xpose.msra.mxu0 0.0
    %3161 = vmatprep.mubr.f32.mxu0 0.0
    %3162 = vmatmul.mubr.f32.gmra.mrb[0].mxu0 %v3089
    %v3163 = vpop.f32.mrb[0].mxu0
    %v3164 = vadd.f32 0.0, %v3163
    %v3165 = vpop.f32.mrb[0].mxu0
    %3166 = vmatprep.mubr.f32.mxu0 0.0
    %3167 = vmatmul.mubr.f32.gmra.mrb[0].mxu0 %v3091
    %v3168 = vpop.f32.mrb[0].mxu0
    %v3169 = vadd.f32 0.0, %v3168
    %v3170 = vpop.f32.mrb[0].mxu0
    %3171 = vdwg.mxu0
    %3174 = vrot.lane.b32.xlu0 %v2802, 96
    %v3175 = vpop.permute.xlu0 %3174
    %3176 = vrot.lane.b32.xlu0 %v2807, 96
    %v3177 = vpop.permute.xlu0 %3176
    %v3178 = vsel %vm440, %v2802, 0
    %v3180 = vsel %vm440, %v2807, 0
    %v3182 = vsel %vm440, %v3175, 0
    %v3184 = vsel %vm440, %v3177, 0
    %3186 = vmatprep.subr.mxu0 0.0
    %3187 = vmatpush1.xpose.msra.mxu0 %v3182
    %3188 = vmatprep.subr.mxu0 0.0
    %3189 = vmatpush1.xpose.msra.mxu0 %v3184
    %3190 = vmatprep.subr.mxu0 0.0
    %3191 = vmatpush1.xpose.msra.mxu0 0.0
    %3192 = vmatprep.subr.mxu0 0.0
    %3193 = vmatpush1.xpose.msra.mxu0 0.0
    %3194 = vmatprep.subr.mxu0 0.0
    %3195 = vmatpush1.xpose.msra.mxu0 0.0
    %3196 = vmatprep.subr.mxu0 0.0
    %3197 = vmatpush1.xpose.msra.mxu0 0.0
    %3198 = vmatprep.subr.mxu0 0.0
    %3199 = vmatpush1.xpose.msra.mxu0 0.0
    %3200 = vmatprep.subr.mxu0 0.0
    %3201 = vmatpush1.xpose.msra.mxu0 0.0
    %3202 = vmatprep.subr.mxu0 0.0
    %3203 = vmatpush1.xpose.msra.mxu0 0.0
    %3204 = vmatprep.subr.mxu0 0.0
    %3205 = vmatpush1.xpose.msra.mxu0 0.0
    %3206 = vmatprep.subr.mxu0 0.0
    %3207 = vmatpush1.xpose.msra.mxu0 0.0
    %3208 = vmatprep.subr.mxu0 0.0
    %3209 = vmatpush1.xpose.msra.mxu0 0.0
    %3210 = vmatprep.subr.mxu0 0.0
    %3211 = vmatpush1.xpose.msra.mxu0 0.0
    %3212 = vmatprep.subr.mxu0 0.0
    %3213 = vmatpush1.xpose.msra.mxu0 0.0
    %3214 = vmatprep.subr.mxu0 0.0
    %3215 = vmatpush1.xpose.msra.mxu0 0.0
    %3216 = vmatprep.subr.mxu0 0.0
    %3217 = vmatpush1.xpose.msra.mxu0 0.0
    %3218 = vmatprep.subr.mxu0 0.0
    %3219 = vmatpush1.xpose.msra.mxu0 0.0
    %3220 = vmatprep.subr.mxu0 0.0
    %3221 = vmatpush1.xpose.msra.mxu0 0.0
    %3222 = vmatprep.subr.mxu0 0.0
    %3223 = vmatpush1.xpose.msra.mxu0 0.0
    %3224 = vmatprep.subr.mxu0 0.0
    %3225 = vmatpush1.xpose.msra.mxu0 0.0
    %3226 = vmatprep.subr.mxu0 0.0
    %3227 = vmatpush1.xpose.msra.mxu0 0.0
    %3228 = vmatprep.subr.mxu0 0.0
    %3229 = vmatpush1.xpose.msra.mxu0 0.0
    %3230 = vmatprep.subr.mxu0 0.0
    %3231 = vmatpush1.xpose.msra.mxu0 0.0
    %3232 = vmatprep.subr.mxu0 0.0
    %3233 = vmatpush1.xpose.msra.mxu0 0.0
    %3234 = vmatprep.subr.mxu0 0.0
    %3235 = vmatpush1.xpose.msra.mxu0 0.0
    %3236 = vmatprep.subr.mxu0 0.0
    %3237 = vmatpush1.xpose.msra.mxu0 0.0
    %3238 = vmatprep.subr.mxu0 0.0
    %3239 = vmatpush1.xpose.msra.mxu0 0.0
    %3240 = vmatprep.subr.mxu0 0.0
    %3241 = vmatpush1.xpose.msra.mxu0 0.0
    %3242 = vmatprep.subr.mxu0 0.0
    %3243 = vmatpush1.xpose.msra.mxu0 0.0
    %3244 = vmatprep.subr.mxu0 0.0
    %3245 = vmatpush1.xpose.msra.mxu0 0.0
    %3246 = vmatprep.subr.mxu0 0.0
    %3247 = vmatpush1.xpose.msra.mxu0 0.0
    %3248 = vmatprep.subr.mxu0 0.0
    %3249 = vmatpush1.xpose.msra.mxu0 0.0
    %3250 = vmatprep.mubr.f32.mxu0 0.0
    %3251 = vmatmul.mubr.f32.gmra.mrb[0].mxu0 %v3178
    %v3252 = vpop.f32.mrb[0].mxu0
    %v3253 = vadd.f32 0.0, %v3252
    %v3254 = vpop.f32.mrb[0].mxu0
    %3255 = vmatprep.mubr.f32.mxu0 0.0
    %3256 = vmatmul.mubr.f32.gmra.mrb[0].mxu0 %v3180
    %v3257 = vpop.f32.mrb[0].mxu0
    %v3258 = vadd.f32 0.0, %v3257
    %v3259 = vpop.f32.mrb[0].mxu0
    %3260 = vdwg.mxu0
    %3261 = vrot.lane.b32.xlu0 %v2802, 120
    %v3262 = vpop.permute.xlu0 %3261
    %3263 = vrot.lane.b32.xlu0 %v2807, 120
    %v3264 = vpop.permute.xlu0 %3263
    %3265 = vrot.lane.b32.xlu0 %v2802, 88
    %v3266 = vpop.permute.xlu0 %3265
    %3267 = vrot.lane.b32.xlu0 %v2807, 88
    %v3268 = vpop.permute.xlu0 %3267
    %v3269 = vsel %vm440, %v3262, 0
    %v3271 = vsel %vm440, %v3264, 0
    %v3273 = vsel %vm440, %v3266, 0
    %v3275 = vsel %vm440, %v3268, 0
    %3277 = vmatprep.subr.mxu0 0.0
    %3278 = vmatpush1.xpose.msra.mxu0 %v3273
    %3279 = vmatprep.subr.mxu0 0.0
    %3280 = vmatpush1.xpose.msra.mxu0 %v3275
    %3281 = vmatprep.subr.mxu0 0.0
    %3282 = vmatpush1.xpose.msra.mxu0 0.0
    %3283 = vmatprep.subr.mxu0 0.0
    %3284 = vmatpush1.xpose.msra.mxu0 0.0
    %3285 = vmatprep.subr.mxu0 0.0
    %3286 = vmatpush1.xpose.msra.mxu0 0.0
    %3287 = vmatprep.subr.mxu0 0.0
    %3288 = vmatpush1.xpose.msra.mxu0 0.0
    %3289 = vmatprep.subr.mxu0 0.0
    %3290 = vmatpush1.xpose.msra.mxu0 0.0
    %3291 = vmatprep.subr.mxu0 0.0
    %3292 = vmatpush1.xpose.msra.mxu0 0.0
    %3293 = vmatprep.subr.mxu0 0.0
    %3294 = vmatpush1.xpose.msra.mxu0 0.0
    %3295 = vmatprep.subr.mxu0 0.0
    %3296 = vmatpush1.xpose.msra.mxu0 0.0
    %3297 = vmatprep.subr.mxu0 0.0
    %3298 = vmatpush1.xpose.msra.mxu0 0.0
    %3299 = vmatprep.subr.mxu0 0.0
    %3300 = vmatpush1.xpose.msra.mxu0 0.0
    %3301 = vmatprep.subr.mxu0 0.0
    %3302 = vmatpush1.xpose.msra.mxu0 0.0
    %3303 = vmatprep.subr.mxu0 0.0
    %3304 = vmatpush1.xpose.msra.mxu0 0.0
    %3305 = vmatprep.subr.mxu0 0.0
    %3306 = vmatpush1.xpose.msra.mxu0 0.0
    %3307 = vmatprep.subr.mxu0 0.0
    %3308 = vmatpush1.xpose.msra.mxu0 0.0
    %3309 = vmatprep.subr.mxu0 0.0
    %3310 = vmatpush1.xpose.msra.mxu0 0.0
    %3311 = vmatprep.subr.mxu0 0.0
    %3312 = vmatpush1.xpose.msra.mxu0 0.0
    %3313 = vmatprep.subr.mxu0 0.0
    %3314 = vmatpush1.xpose.msra.mxu0 0.0
    %3315 = vmatprep.subr.mxu0 0.0
    %3316 = vmatpush1.xpose.msra.mxu0 0.0
    %3317 = vmatprep.subr.mxu0 0.0
    %3318 = vmatpush1.xpose.msra.mxu0 0.0
    %3319 = vmatprep.subr.mxu0 0.0
    %3320 = vmatpush1.xpose.msra.mxu0 0.0
    %3321 = vmatprep.subr.mxu0 0.0
    %3322 = vmatpush1.xpose.msra.mxu0 0.0
    %3323 = vmatprep.subr.mxu0 0.0
    %3324 = vmatpush1.xpose.msra.mxu0 0.0
    %3325 = vmatprep.subr.mxu0 0.0
    %3326 = vmatpush1.xpose.msra.mxu0 0.0
    %3327 = vmatprep.subr.mxu0 0.0
    %3328 = vmatpush1.xpose.msra.mxu0 0.0
    %3329 = vmatprep.subr.mxu0 0.0
    %3330 = vmatpush1.xpose.msra.mxu0 0.0
    %3331 = vmatprep.subr.mxu0 0.0
    %3332 = vmatpush1.xpose.msra.mxu0 0.0
    %3333 = vmatprep.subr.mxu0 0.0
    %3334 = vmatpush1.xpose.msra.mxu0 0.0
    %3335 = vmatprep.subr.mxu0 0.0
    %3336 = vmatpush1.xpose.msra.mxu0 0.0
    %3337 = vmatprep.subr.mxu0 0.0
    %3338 = vmatpush1.xpose.msra.mxu0 0.0
    %3339 = vmatprep.subr.mxu0 0.0
    %3340 = vmatpush1.xpose.msra.mxu0 0.0
    %3341 = vmatprep.mubr.f32.mxu0 0.0
    %3342 = vmatmul.mubr.f32.gmra.mrb[0].mxu0 %v3269
    %v3343 = vpop.f32.mrb[0].mxu0
    %v3344 = vadd.f32 0.0, %v3343
    %v3345 = vpop.f32.mrb[0].mxu0
    %3346 = vmatprep.mubr.f32.mxu0 0.0
    %3347 = vmatmul.mubr.f32.gmra.mrb[0].mxu0 %v3271
    %v3348 = vpop.f32.mrb[0].mxu0
    %v3349 = vadd.f32 0.0, %v3348
    %v3350 = vpop.f32.mrb[0].mxu0
    %3351 = vdwg.mxu0
    %3352 = vrot.lane.b32.xlu0 %v2802, 112
    %v3353 = vpop.permute.xlu0 %3352
    %3354 = vrot.lane.b32.xlu0 %v2807, 112
    %v3355 = vpop.permute.xlu0 %3354
    %3356 = vrot.lane.b32.xlu0 %v2802, 80
    %v3357 = vpop.permute.xlu0 %3356
    %3358 = vrot.lane.b32.xlu0 %v2807, 80
    %v3359 = vpop.permute.xlu0 %3358
    %v3360 = vsel %vm440, %v3353, 0
    %v3362 = vsel %vm440, %v3355, 0
    %v3364 = vsel %vm440, %v3357, 0
    %v3366 = vsel %vm440, %v3359, 0
    %3368 = vmatprep.subr.mxu0 0.0
    %3369 = vmatpush1.xpose.msra.mxu0 %v3364
    %3370 = vmatprep.subr.mxu0 0.0
    %3371 = vmatpush1.xpose.msra.mxu0 %v3366
    %3372 = vmatprep.subr.mxu0 0.0
    %3373 = vmatpush1.xpose.msra.mxu0 0.0
    %3374 = vmatprep.subr.mxu0 0.0
    %3375 = vmatpush1.xpose.msra.mxu0 0.0
    %3376 = vmatprep.subr.mxu0 0.0
    %3377 = vmatpush1.xpose.msra.mxu0 0.0
    %3378 = vmatprep.subr.mxu0 0.0
    %3379 = vmatpush1.xpose.msra.mxu0 0.0
    %3380 = vmatprep.subr.mxu0 0.0
    %3381 = vmatpush1.xpose.msra.mxu0 0.0
    %3382 = vmatprep.subr.mxu0 0.0
    %3383 = vmatpush1.xpose.msra.mxu0 0.0
    %3384 = vmatprep.subr.mxu0 0.0
    %3385 = vmatpush1.xpose.msra.mxu0 0.0
    %3386 = vmatprep.subr.mxu0 0.0
    %3387 = vmatpush1.xpose.msra.mxu0 0.0
    %3388 = vmatprep.subr.mxu0 0.0
    %3389 = vmatpush1.xpose.msra.mxu0 0.0
    %3390 = vmatprep.subr.mxu0 0.0
    %3391 = vmatpush1.xpose.msra.mxu0 0.0
    %3392 = vmatprep.subr.mxu0 0.0
    %3393 = vmatpush1.xpose.msra.mxu0 0.0
    %3394 = vmatprep.subr.mxu0 0.0
    %3395 = vmatpush1.xpose.msra.mxu0 0.0
    %3396 = vmatprep.subr.mxu0 0.0
    %3397 = vmatpush1.xpose.msra.mxu0 0.0
    %3398 = vmatprep.subr.mxu0 0.0
    %3399 = vmatpush1.xpose.msra.mxu0 0.0
    %3400 = vmatprep.subr.mxu0 0.0
    %3401 = vmatpush1.xpose.msra.mxu0 0.0
    %3402 = vmatprep.subr.mxu0 0.0
    %3403 = vmatpush1.xpose.msra.mxu0 0.0
    %3404 = vmatprep.subr.mxu0 0.0
    %3405 = vmatpush1.xpose.msra.mxu0 0.0
    %3406 = vmatprep.subr.mxu0 0.0
    %3407 = vmatpush1.xpose.msra.mxu0 0.0
    %3408 = vmatprep.subr.mxu0 0.0
    %3409 = vmatpush1.xpose.msra.mxu0 0.0
    %3410 = vmatprep.subr.mxu0 0.0
    %3411 = vmatpush1.xpose.msra.mxu0 0.0
    %3412 = vmatprep.subr.mxu0 0.0
    %3413 = vmatpush1.xpose.msra.mxu0 0.0
    %3414 = vmatprep.subr.mxu0 0.0
    %3415 = vmatpush1.xpose.msra.mxu0 0.0
    %3416 = vmatprep.subr.mxu0 0.0
    %3417 = vmatpush1.xpose.msra.mxu0 0.0
    %3418 = vmatprep.subr.mxu0 0.0
    %3419 = vmatpush1.xpose.msra.mxu0 0.0
    %3420 = vmatprep.subr.mxu0 0.0
    %3421 = vmatpush1.xpose.msra.mxu0 0.0
    %3422 = vmatprep.subr.mxu0 0.0
    %3423 = vmatpush1.xpose.msra.mxu0 0.0
    %3424 = vmatprep.subr.mxu0 0.0
    %3425 = vmatpush1.xpose.msra.mxu0 0.0
    %3426 = vmatprep.subr.mxu0 0.0
    %3427 = vmatpush1.xpose.msra.mxu0 0.0
    %3428 = vmatprep.subr.mxu0 0.0
    %3429 = vmatpush1.xpose.msra.mxu0 0.0
    %3430 = vmatprep.subr.mxu0 0.0
    %3431 = vmatpush1.xpose.msra.mxu0 0.0
    %3432 = vmatprep.mubr.f32.mxu0 0.0
    %3433 = vmatmul.mubr.f32.gmra.mrb[0].mxu0 %v3360
    %v3434 = vpop.f32.mrb[0].mxu0
    %v3435 = vadd.f32 0.0, %v3434
    %v3436 = vpop.f32.mrb[0].mxu0
    %3437 = vmatprep.mubr.f32.mxu0 0.0
    %3438 = vmatmul.mubr.f32.gmra.mrb[0].mxu0 %v3362
    %v3439 = vpop.f32.mrb[0].mxu0
    %v3440 = vadd.f32 0.0, %v3439
    %v3441 = vpop.f32.mrb[0].mxu0
    %3442 = vdwg.mxu0
    %3443 = vrot.lane.b32.xlu0 %v2802, 104
    %v3444 = vpop.permute.xlu0 %3443
    %3445 = vrot.lane.b32.xlu0 %v2807, 104
    %v3446 = vpop.permute.xlu0 %3445
    %3447 = vrot.lane.b32.xlu0 %v2802, 72
    %v3448 = vpop.permute.xlu0 %3447
    %3449 = vrot.lane.b32.xlu0 %v2807, 72
    %v3450 = vpop.permute.xlu0 %3449
    %v3451 = vsel %vm440, %v3444, 0
    %v3453 = vsel %vm440, %v3446, 0
    %v3455 = vsel %vm440, %v3448, 0
    %v3457 = vsel %vm440, %v3450, 0
    %3459 = vmatprep.subr.mxu0 0.0
    %3460 = vmatpush1.xpose.msra.mxu0 %v3455
    %3461 = vmatprep.subr.mxu0 0.0
    %3462 = vmatpush1.xpose.msra.mxu0 %v3457
    %3463 = vmatprep.subr.mxu0 0.0
    %3464 = vmatpush1.xpose.msra.mxu0 0.0
    %3465 = vmatprep.subr.mxu0 0.0
    %3466 = vmatpush1.xpose.msra.mxu0 0.0
    %3467 = vmatprep.subr.mxu0 0.0
    %3468 = vmatpush1.xpose.msra.mxu0 0.0
    %3469 = vmatprep.subr.mxu0 0.0
    %3470 = vmatpush1.xpose.msra.mxu0 0.0
    %3471 = vmatprep.subr.mxu0 0.0
    %3472 = vmatpush1.xpose.msra.mxu0 0.0
    %3473 = vmatprep.subr.mxu0 0.0
    %3474 = vmatpush1.xpose.msra.mxu0 0.0
    %3475 = vmatprep.subr.mxu0 0.0
    %3476 = vmatpush1.xpose.msra.mxu0 0.0
    %3477 = vmatprep.subr.mxu0 0.0
    %3478 = vmatpush1.xpose.msra.mxu0 0.0
    %3479 = vmatprep.subr.mxu0 0.0
    %3480 = vmatpush1.xpose.msra.mxu0 0.0
    %3481 = vmatprep.subr.mxu0 0.0
    %3482 = vmatpush1.xpose.msra.mxu0 0.0
    %3483 = vmatprep.subr.mxu0 0.0
    %3484 = vmatpush1.xpose.msra.mxu0 0.0
    %3485 = vmatprep.subr.mxu0 0.0
    %3486 = vmatpush1.xpose.msra.mxu0 0.0
    %3487 = vmatprep.subr.mxu0 0.0
    %3488 = vmatpush1.xpose.msra.mxu0 0.0
    %3489 = vmatprep.subr.mxu0 0.0
    %3490 = vmatpush1.xpose.msra.mxu0 0.0
    %3491 = vmatprep.subr.mxu0 0.0
    %3492 = vmatpush1.xpose.msra.mxu0 0.0
    %3493 = vmatprep.subr.mxu0 0.0
    %3494 = vmatpush1.xpose.msra.mxu0 0.0
    %3495 = vmatprep.subr.mxu0 0.0
    %3496 = vmatpush1.xpose.msra.mxu0 0.0
    %3497 = vmatprep.subr.mxu0 0.0
    %3498 = vmatpush1.xpose.msra.mxu0 0.0
    %3499 = vmatprep.subr.mxu0 0.0
    %3500 = vmatpush1.xpose.msra.mxu0 0.0
    %3501 = vmatprep.subr.mxu0 0.0
    %3502 = vmatpush1.xpose.msra.mxu0 0.0
    %3503 = vmatprep.subr.mxu0 0.0
    %3504 = vmatpush1.xpose.msra.mxu0 0.0
    %3505 = vmatprep.subr.mxu0 0.0
    %3506 = vmatpush1.xpose.msra.mxu0 0.0
    %3507 = vmatprep.subr.mxu0 0.0
    %3508 = vmatpush1.xpose.msra.mxu0 0.0
    %3509 = vmatprep.subr.mxu0 0.0
    %3510 = vmatpush1.xpose.msra.mxu0 0.0
    %3511 = vmatprep.subr.mxu0 0.0
    %3512 = vmatpush1.xpose.msra.mxu0 0.0
    %3513 = vmatprep.subr.mxu0 0.0
    %3514 = vmatpush1.xpose.msra.mxu0 0.0
    %3515 = vmatprep.subr.mxu0 0.0
    %3516 = vmatpush1.xpose.msra.mxu0 0.0
    %3517 = vmatprep.subr.mxu0 0.0
    %3518 = vmatpush1.xpose.msra.mxu0 0.0
    %3519 = vmatprep.subr.mxu0 0.0
    %3520 = vmatpush1.xpose.msra.mxu0 0.0
    %3521 = vmatprep.subr.mxu0 0.0
    %3522 = vmatpush1.xpose.msra.mxu0 0.0
    %3523 = vmatprep.mubr.f32.mxu0 0.0
    %3524 = vmatmul.mubr.f32.gmra.mrb[0].mxu0 %v3451
    %v3525 = vpop.f32.mrb[0].mxu0
    %v3526 = vadd.f32 0.0, %v3525
    %v3527 = vpop.f32.mrb[0].mxu0
    %3528 = vmatprep.mubr.f32.mxu0 0.0
    %3529 = vmatmul.mubr.f32.gmra.mrb[0].mxu0 %v3453
    %v3530 = vpop.f32.mrb[0].mxu0
    %v3531 = vadd.f32 0.0, %v3530
    %v3532 = vpop.f32.mrb[0].mxu0
    %3533 = vdwg.mxu0
    %v3534 = vadd.f32 %v2891, %v78
    %v3535 = vadd.f32 %v2896, %v78
    %v3536 = vadd.f32 %v2982, %v78
    %v3537 = vadd.f32 %v2987, %v78
    %v3538 = vadd.f32 %v3073, %v78
    %v3539 = vadd.f32 %v3078, %v78
    %v3540 = vadd.f32 %v3164, %v78
    %v3541 = vadd.f32 %v3169, %v78
    %v3542 = vadd.f32 %v3253, %v78
    %v3543 = vadd.f32 %v3258, %v78
    %v3544 = vadd.f32 %v3344, %v78
    %v3545 = vadd.f32 %v3349, %v78
    %v3546 = vadd.f32 %v3435, %v78
    %v3547 = vadd.f32 %v3440, %v78
    %v3548 = vadd.f32 %v3526, %v78
    %v3549 = vadd.f32 %v3531, %v78
    %v3550 = vsel %vm1175, %v3534, -inf
    %3551 = vmax.xlane.f32.xlu0 %v3550
    %v3552 = vpop.xlane.xlu0 %3551
    %v3553 = vsel %vm1175, %v3535, -inf
    %3554 = vmax.xlane.f32.xlu0 %v3553
    %v3555 = vpop.xlane.xlu0 %3554
    %v3556 = vsel %vm1175, %v3536, -inf
    %3557 = vmax.xlane.f32.xlu0 %v3556
    %v3558 = vpop.xlane.xlu0 %3557
    %v3559 = vsel %vm1175, %v3537, -inf
    %3560 = vmax.xlane.f32.xlu0 %v3559
    %v3561 = vpop.xlane.xlu0 %3560
    %v3562 = vsel %vm1175, %v3538, -inf
    %3563 = vmax.xlane.f32.xlu0 %v3562
    %v3564 = vpop.xlane.xlu0 %3563
    %v3565 = vsel %vm1175, %v3539, -inf
    %3566 = vmax.xlane.f32.xlu0 %v3565
    %v3567 = vpop.xlane.xlu0 %3566
    %v3568 = vsel %vm1175, %v3540, -inf
    %3569 = vmax.xlane.f32.xlu0 %v3568
    %v3570 = vpop.xlane.xlu0 %3569
    %v3571 = vsel %vm1175, %v3541, -inf
    %3572 = vmax.xlane.f32.xlu0 %v3571
    %v3573 = vpop.xlane.xlu0 %3572
    %v3574 = vsel %vm1175, %v3542, -inf
    %3575 = vmax.xlane.f32.xlu0 %v3574
    %v3576 = vpop.xlane.xlu0 %3575
    %v3577 = vsel %vm1175, %v3543, -inf
    %3578 = vmax.xlane.f32.xlu0 %v3577
    %v3579 = vpop.xlane.xlu0 %3578
    %v3580 = vsel %vm1175, %v3544, -inf
    %3581 = vmax.xlane.f32.xlu0 %v3580
    %v3582 = vpop.xlane.xlu0 %3581
    %v3583 = vsel %vm1175, %v3545, -inf
    %3584 = vmax.xlane.f32.xlu0 %v3583
    %v3585 = vpop.xlane.xlu0 %3584
    %v3586 = vsel %vm1175, %v3546, -inf
    %3587 = vmax.xlane.f32.xlu0 %v3586
    %v3588 = vpop.xlane.xlu0 %3587
    %v3589 = vsel %vm1175, %v3547, -inf
    %3590 = vmax.xlane.f32.xlu0 %v3589
    %v3591 = vpop.xlane.xlu0 %3590
    %v3592 = vsel %vm1175, %v3548, -inf
    %3593 = vmax.xlane.f32.xlu0 %v3592
    %v3594 = vpop.xlane.xlu0 %3593
    %v3595 = vsel %vm1175, %v3549, -inf
    %3596 = vmax.xlane.f32.xlu0 %v3595
    %v3597 = vpop.xlane.xlu0 %3596
    %v3598 = vsub.f32 %v3534, %v3552
    %v3599 = vsub.f32 %v3535, %v3555
    %v3600 = vsub.f32 %v3536, %v3558
    %v3601 = vsub.f32 %v3537, %v3561
    %v3602 = vsub.f32 %v3538, %v3564
    %v3603 = vsub.f32 %v3539, %v3567
    %v3604 = vsub.f32 %v3540, %v3570
    %v3605 = vsub.f32 %v3541, %v3573
    %v3606 = vsub.f32 %v3542, %v3576
    %v3607 = vsub.f32 %v3543, %v3579
    %v3608 = vsub.f32 %v3544, %v3582
    %v3609 = vsub.f32 %v3545, %v3585
    %v3610 = vsub.f32 %v3546, %v3588
    %v3611 = vsub.f32 %v3547, %v3591
    %v3612 = vsub.f32 %v3548, %v3594
    %v3613 = vsub.f32 %v3549, %v3597
    %v3614 = vmul.f32 %v3598, 1.442695
    %v3615 = vpow.pop %v3614
    %v3616 = vmul.f32 %v3599, 1.442695
    %v3617 = vpow.pop %v3616
    %v3618 = vmul.f32 %v3600, 1.442695
    %v3619 = vpow.pop %v3618
    %v3620 = vmul.f32 %v3601, 1.442695
    %v3621 = vpow.pop %v3620
    %v3622 = vmul.f32 %v3602, 1.442695
    %v3623 = vpow.pop %v3622
    %v3624 = vmul.f32 %v3603, 1.442695
    %v3625 = vpow.pop %v3624
    %v3626 = vmul.f32 %v3604, 1.442695
    %v3627 = vpow.pop %v3626
    %v3628 = vmul.f32 %v3605, 1.442695
    %v3629 = vpow.pop %v3628
    %v3630 = vmul.f32 %v3606, 1.442695
    %v3631 = vpow.pop %v3630
    %v3632 = vmul.f32 %v3607, 1.442695
    %v3633 = vpow.pop %v3632
    %v3634 = vmul.f32 %v3608, 1.442695
    %v3635 = vpow.pop %v3634
    %v3636 = vmul.f32 %v3609, 1.442695
    %v3637 = vpow.pop %v3636
    %v3638 = vmul.f32 %v3610, 1.442695
    %v3639 = vpow.pop %v3638
    %v3640 = vmul.f32 %v3611, 1.442695
    %v3641 = vpow.pop %v3640
    %v3642 = vmul.f32 %v3612, 1.442695
    %v3643 = vpow.pop %v3642
    %v3644 = vmul.f32 %v3613, 1.442695
    %v3645 = vpow.pop %v3644
    %v3646 = vsel %vm1175, %v3615, 0.0
    %3647 = vadd.xlane.f32.xlu0 %v3646
    %v3648 = vpop.xlane.xlu0 %3647
    %v3649 = vsel %vm1175, %v3617, 0.0
    %3650 = vadd.xlane.f32.xlu0 %v3649
    %v3651 = vpop.xlane.xlu0 %3650
    %v3652 = vsel %vm1175, %v3619, 0.0
    %3653 = vadd.xlane.f32.xlu0 %v3652
    %v3654 = vpop.xlane.xlu0 %3653
    %v3655 = vsel %vm1175, %v3621, 0.0
    %3656 = vadd.xlane.f32.xlu0 %v3655
    %v3657 = vpop.xlane.xlu0 %3656
    %v3658 = vsel %vm1175, %v3623, 0.0
    %3659 = vadd.xlane.f32.xlu0 %v3658
    %v3660 = vpop.xlane.xlu0 %3659
    %v3661 = vsel %vm1175, %v3625, 0.0
    %3662 = vadd.xlane.f32.xlu0 %v3661
    %v3663 = vpop.xlane.xlu0 %3662
    %v3664 = vsel %vm1175, %v3627, 0.0
    %3665 = vadd.xlane.f32.xlu0 %v3664
    %v3666 = vpop.xlane.xlu0 %3665
    %v3667 = vsel %vm1175, %v3629, 0.0
    %3668 = vadd.xlane.f32.xlu0 %v3667
    %v3669 = vpop.xlane.xlu0 %3668
    %v3670 = vsel %vm1175, %v3631, 0.0
    %3671 = vadd.xlane.f32.xlu0 %v3670
    %v3672 = vpop.xlane.xlu0 %3671
    %v3673 = vsel %vm1175, %v3633, 0.0
    %3674 = vadd.xlane.f32.xlu0 %v3673
    %v3675 = vpop.xlane.xlu0 %3674
    %v3676 = vsel %vm1175, %v3635, 0.0
    %3677 = vadd.xlane.f32.xlu0 %v3676
    %v3678 = vpop.xlane.xlu0 %3677
    %v3679 = vsel %vm1175, %v3637, 0.0
    %3680 = vadd.xlane.f32.xlu0 %v3679
    %v3681 = vpop.xlane.xlu0 %3680
    %v3682 = vsel %vm1175, %v3639, 0.0
    %3683 = vadd.xlane.f32.xlu0 %v3682
    %v3684 = vpop.xlane.xlu0 %3683
    %v3685 = vsel %vm1175, %v3641, 0.0
    %3686 = vadd.xlane.f32.xlu0 %v3685
    %v3687 = vpop.xlane.xlu0 %3686
    %v3688 = vsel %vm1175, %v3643, 0.0
    %3689 = vadd.xlane.f32.xlu0 %v3688
    %v3690 = vpop.xlane.xlu0 %3689
    %v3691 = vsel %vm1175, %v3645, 0.0
    %3692 = vadd.xlane.f32.xlu0 %v3691
    %v3693 = vpop.xlane.xlu0 %3692
    %v3694 = vrcp.pop %v3648
    %v3695 = vrcp.pop %v3651
    %v3696 = vrcp.pop %v3654
    %v3697 = vrcp.pop %v3657
    %v3698 = vrcp.pop %v3660
    %v3699 = vrcp.pop %v3663
    %v3700 = vrcp.pop %v3666
    %v3701 = vrcp.pop %v3669
    %v3702 = vrcp.pop %v3672
    %v3703 = vrcp.pop %v3675
    %v3704 = vrcp.pop %v3678
    %v3705 = vrcp.pop %v3681
    %v3706 = vrcp.pop %v3684
    %v3707 = vrcp.pop %v3687
    %v3708 = vrcp.pop %v3690
    %v3709 = vrcp.pop %v3693
    %v3710 = vmul.f32 %v3615, %v3694
    %v3711 = vmul.f32 %v3617, %v3695
    %v3712 = vmul.f32 %v3619, %v3696
    %v3713 = vmul.f32 %v3621, %v3697
    %v3714 = vmul.f32 %v3623, %v3698
    %v3715 = vmul.f32 %v3625, %v3699
    %v3716 = vmul.f32 %v3627, %v3700
    %v3717 = vmul.f32 %v3629, %v3701
    %v3718 = vmul.f32 %v3631, %v3702
    %v3719 = vmul.f32 %v3633, %v3703
    %v3720 = vmul.f32 %v3635, %v3704
    %v3721 = vmul.f32 %v3637, %v3705
    %v3722 = vmul.f32 %v3639, %v3706
    %v3723 = vmul.f32 %v3641, %v3707
    %v3724 = vmul.f32 %v3643, %v3708
    %v3725 = vmul.f32 %v3645, %v3709
    %3726 = vrot.lane.b32.xlu0 %v2792, 64
    %v3727 = vpop.permute.xlu0 %3726
    %3728 = vrot.lane.b32.xlu0 %v2797, 64
    %v3729 = vpop.permute.xlu0 %3728
    %v3733 = vsel %vm1175, %v3710, 0
    %v3736 = vsel %vm1175, %v3711, 0
    %3738 = vmatprep.subr.mxu0 0.0
    %3739 = vmatpush1.msra.mxu0 %v3727
    %3740 = vmatprep.subr.mxu0 0.0
    %3741 = vmatpush1.msra.mxu0 %v3729
    %3742 = vmatprep.subr.mxu0 0.0
    %3743 = vmatpush1.msra.mxu0 0.0
    %3744 = vmatprep.subr.mxu0 0.0
    %3745 = vmatpush1.msra.mxu0 0.0
    %3746 = vmatprep.subr.mxu0 0.0
    %3747 = vmatpush1.msra.mxu0 0.0
    %3748 = vmatprep.subr.mxu0 0.0
    %3749 = vmatpush1.msra.mxu0 0.0
    %3750 = vmatprep.subr.mxu0 0.0
    %3751 = vmatpush1.msra.mxu0 0.0
    %3752 = vmatprep.subr.mxu0 0.0
    %3753 = vmatpush1.msra.mxu0 0.0
    %3754 = vmatprep.subr.mxu0 0.0
    %3755 = vmatpush1.msra.mxu0 0.0
    %3756 = vmatprep.subr.mxu0 0.0
    %3757 = vmatpush1.msra.mxu0 0.0
    %3758 = vmatprep.subr.mxu0 0.0
    %3759 = vmatpush1.msra.mxu0 0.0
    %3760 = vmatprep.subr.mxu0 0.0
    %3761 = vmatpush1.msra.mxu0 0.0
    %3762 = vmatprep.subr.mxu0 0.0
    %3763 = vmatpush1.msra.mxu0 0.0
    %3764 = vmatprep.subr.mxu0 0.0
    %3765 = vmatpush1.msra.mxu0 0.0
    %3766 = vmatprep.subr.mxu0 0.0
    %3767 = vmatpush1.msra.mxu0 0.0
    %3768 = vmatprep.subr.mxu0 0.0
    %3769 = vmatpush1.msra.mxu0 0.0
    %3770 = vmatprep.subr.mxu0 0.0
    %3771 = vmatpush1.msra.mxu0 0.0
    %3772 = vmatprep.subr.mxu0 0.0
    %3773 = vmatpush1.msra.mxu0 0.0
    %3774 = vmatprep.subr.mxu0 0.0
    %3775 = vmatpush1.msra.mxu0 0.0
    %3776 = vmatprep.subr.mxu0 0.0
    %3777 = vmatpush1.msra.mxu0 0.0
    %3778 = vmatprep.subr.mxu0 0.0
    %3779 = vmatpush1.msra.mxu0 0.0
    %3780 = vmatprep.subr.mxu0 0.0
    %3781 = vmatpush1.msra.mxu0 0.0
    %3782 = vmatprep.subr.mxu0 0.0
    %3783 = vmatpush1.msra.mxu0 0.0
    %3784 = vmatprep.subr.mxu0 0.0
    %3785 = vmatpush1.msra.mxu0 0.0
    %3786 = vmatprep.subr.mxu0 0.0
    %3787 = vmatpush1.msra.mxu0 0.0
    %3788 = vmatprep.subr.mxu0 0.0
    %3789 = vmatpush1.msra.mxu0 0.0
    %3790 = vmatprep.subr.mxu0 0.0
    %3791 = vmatpush1.msra.mxu0 0.0
    %3792 = vmatprep.subr.mxu0 0.0
    %3793 = vmatpush1.msra.mxu0 0.0
    %3794 = vmatprep.subr.mxu0 0.0
    %3795 = vmatpush1.msra.mxu0 0.0
    %3796 = vmatprep.subr.mxu0 0.0
    %3797 = vmatpush1.msra.mxu0 0.0
    %3798 = vmatprep.subr.mxu0 0.0
    %3799 = vmatpush1.msra.mxu0 0.0
    %3800 = vmatprep.subr.mxu0 0.0
    %3801 = vmatpush1.msra.mxu0 0.0
    %3802 = vmatprep.mubr.f32.mxu0 0.0
    %3803 = vmatmul.mubr.f32.gmra.mrb[0].mxu0 %v3733
    %v3804 = vpop.f32.mrb[0].mxu0
    %v3805 = vadd.f32 0.0, %v3804
    %v3806 = vpop.f32.mrb[0].mxu0
    %3807 = vmatprep.mubr.f32.mxu0 0.0
    %3808 = vmatmul.mubr.f32.gmra.mrb[0].mxu0 %v3736
    %v3809 = vpop.f32.mrb[0].mxu0
    %v3810 = vadd.f32 0.0, %v3809
    %v3811 = vpop.f32.mrb[0].mxu0
    %3812 = vdwg.mxu0
    %3813 = vrot.lane.b32.xlu0 %v2792, 56
    %v3814 = vpop.permute.xlu0 %3813
    %3815 = vrot.lane.b32.xlu0 %v2797, 56
    %v3816 = vpop.permute.xlu0 %3815
    %v3820 = vsel %vm1175, %v3712, 0
    %v3823 = vsel %vm1175, %v3713, 0
    %3825 = vmatprep.subr.mxu0 0.0
    %3826 = vmatpush1.msra.mxu0 %v3814
    %3827 = vmatprep.subr.mxu0 0.0
    %3828 = vmatpush1.msra.mxu0 %v3816
    %3829 = vmatprep.subr.mxu0 0.0
    %3830 = vmatpush1.msra.mxu0 0.0
    %3831 = vmatprep.subr.mxu0 0.0
    %3832 = vmatpush1.msra.mxu0 0.0
    %3833 = vmatprep.subr.mxu0 0.0
    %3834 = vmatpush1.msra.mxu0 0.0
    %3835 = vmatprep.subr.mxu0 0.0
    %3836 = vmatpush1.msra.mxu0 0.0
    %3837 = vmatprep.subr.mxu0 0.0
    %3838 = vmatpush1.msra.mxu0 0.0
    %3839 = vmatprep.subr.mxu0 0.0
    %3840 = vmatpush1.msra.mxu0 0.0
    %3841 = vmatprep.subr.mxu0 0.0
    %3842 = vmatpush1.msra.mxu0 0.0
    %3843 = vmatprep.subr.mxu0 0.0
    %3844 = vmatpush1.msra.mxu0 0.0
    %3845 = vmatprep.subr.mxu0 0.0
    %3846 = vmatpush1.msra.mxu0 0.0
    %3847 = vmatprep.subr.mxu0 0.0
    %3848 = vmatpush1.msra.mxu0 0.0
    %3849 = vmatprep.subr.mxu0 0.0
    %3850 = vmatpush1.msra.mxu0 0.0
    %3851 = vmatprep.subr.mxu0 0.0
    %3852 = vmatpush1.msra.mxu0 0.0
    %3853 = vmatprep.subr.mxu0 0.0
    %3854 = vmatpush1.msra.mxu0 0.0
    %3855 = vmatprep.subr.mxu0 0.0
    %3856 = vmatpush1.msra.mxu0 0.0
    %3857 = vmatprep.subr.mxu0 0.0
    %3858 = vmatpush1.msra.mxu0 0.0
    %3859 = vmatprep.subr.mxu0 0.0
    %3860 = vmatpush1.msra.mxu0 0.0
    %3861 = vmatprep.subr.mxu0 0.0
    %3862 = vmatpush1.msra.mxu0 0.0
    %3863 = vmatprep.subr.mxu0 0.0
    %3864 = vmatpush1.msra.mxu0 0.0
    %3865 = vmatprep.subr.mxu0 0.0
    %3866 = vmatpush1.msra.mxu0 0.0
    %3867 = vmatprep.subr.mxu0 0.0
    %3868 = vmatpush1.msra.mxu0 0.0
    %3869 = vmatprep.subr.mxu0 0.0
    %3870 = vmatpush1.msra.mxu0 0.0
    %3871 = vmatprep.subr.mxu0 0.0
    %3872 = vmatpush1.msra.mxu0 0.0
    %3873 = vmatprep.subr.mxu0 0.0
    %3874 = vmatpush1.msra.mxu0 0.0
    %3875 = vmatprep.subr.mxu0 0.0
    %3876 = vmatpush1.msra.mxu0 0.0
    %3877 = vmatprep.subr.mxu0 0.0
    %3878 = vmatpush1.msra.mxu0 0.0
    %3879 = vmatprep.subr.mxu0 0.0
    %3880 = vmatpush1.msra.mxu0 0.0
    %3881 = vmatprep.subr.mxu0 0.0
    %3882 = vmatpush1.msra.mxu0 0.0
    %3883 = vmatprep.subr.mxu0 0.0
    %3884 = vmatpush1.msra.mxu0 0.0
    %3885 = vmatprep.subr.mxu0 0.0
    %3886 = vmatpush1.msra.mxu0 0.0
    %3887 = vmatprep.subr.mxu0 0.0
    %3888 = vmatpush1.msra.mxu0 0.0
    %3889 = vmatprep.mubr.f32.mxu0 0.0
    %3890 = vmatmul.mubr.f32.gmra.mrb[0].mxu0 %v3820
    %v3891 = vpop.f32.mrb[0].mxu0
    %v3892 = vadd.f32 0.0, %v3891
    %v3893 = vpop.f32.mrb[0].mxu0
    %3894 = vmatprep.mubr.f32.mxu0 0.0
    %3895 = vmatmul.mubr.f32.gmra.mrb[0].mxu0 %v3823
    %v3896 = vpop.f32.mrb[0].mxu0
    %v3897 = vadd.f32 0.0, %v3896
    %v3898 = vpop.f32.mrb[0].mxu0
    %3899 = vdwg.mxu0
    %3900 = vrot.lane.b32.xlu0 %v2792, 48
    %v3901 = vpop.permute.xlu0 %3900
    %3902 = vrot.lane.b32.xlu0 %v2797, 48
    %v3903 = vpop.permute.xlu0 %3902
    %v3907 = vsel %vm1175, %v3714, 0
    %v3910 = vsel %vm1175, %v3715, 0
    %3912 = vmatprep.subr.mxu0 0.0
    %3913 = vmatpush1.msra.mxu0 %v3901
    %3914 = vmatprep.subr.mxu0 0.0
    %3915 = vmatpush1.msra.mxu0 %v3903
    %3916 = vmatprep.subr.mxu0 0.0
    %3917 = vmatpush1.msra.mxu0 0.0
    %3918 = vmatprep.subr.mxu0 0.0
    %3919 = vmatpush1.msra.mxu0 0.0
    %3920 = vmatprep.subr.mxu0 0.0
    %3921 = vmatpush1.msra.mxu0 0.0
    %3922 = vmatprep.subr.mxu0 0.0
    %3923 = vmatpush1.msra.mxu0 0.0
    %3924 = vmatprep.subr.mxu0 0.0
    %3925 = vmatpush1.msra.mxu0 0.0
    %3926 = vmatprep.subr.mxu0 0.0
    %3927 = vmatpush1.msra.mxu0 0.0
    %3928 = vmatprep.subr.mxu0 0.0
    %3929 = vmatpush1.msra.mxu0 0.0
    %3930 = vmatprep.subr.mxu0 0.0
    %3931 = vmatpush1.msra.mxu0 0.0
    %3932 = vmatprep.subr.mxu0 0.0
    %3933 = vmatpush1.msra.mxu0 0.0
    %3934 = vmatprep.subr.mxu0 0.0
    %3935 = vmatpush1.msra.mxu0 0.0
    %3936 = vmatprep.subr.mxu0 0.0
    %3937 = vmatpush1.msra.mxu0 0.0
    %3938 = vmatprep.subr.mxu0 0.0
    %3939 = vmatpush1.msra.mxu0 0.0
    %3940 = vmatprep.subr.mxu0 0.0
    %3941 = vmatpush1.msra.mxu0 0.0
    %3942 = vmatprep.subr.mxu0 0.0
    %3943 = vmatpush1.msra.mxu0 0.0
    %3944 = vmatprep.subr.mxu0 0.0
    %3945 = vmatpush1.msra.mxu0 0.0
    %3946 = vmatprep.subr.mxu0 0.0
    %3947 = vmatpush1.msra.mxu0 0.0
    %3948 = vmatprep.subr.mxu0 0.0
    %3949 = vmatpush1.msra.mxu0 0.0
    %3950 = vmatprep.subr.mxu0 0.0
    %3951 = vmatpush1.msra.mxu0 0.0
    %3952 = vmatprep.subr.mxu0 0.0
    %3953 = vmatpush1.msra.mxu0 0.0
    %3954 = vmatprep.subr.mxu0 0.0
    %3955 = vmatpush1.msra.mxu0 0.0
    %3956 = vmatprep.subr.mxu0 0.0
    %3957 = vmatpush1.msra.mxu0 0.0
    %3958 = vmatprep.subr.mxu0 0.0
    %3959 = vmatpush1.msra.mxu0 0.0
    %3960 = vmatprep.subr.mxu0 0.0
    %3961 = vmatpush1.msra.mxu0 0.0
    %3962 = vmatprep.subr.mxu0 0.0
    %3963 = vmatpush1.msra.mxu0 0.0
    %3964 = vmatprep.subr.mxu0 0.0
    %3965 = vmatpush1.msra.mxu0 0.0
    %3966 = vmatprep.subr.mxu0 0.0
    %3967 = vmatpush1.msra.mxu0 0.0
    %3968 = vmatprep.subr.mxu0 0.0
    %3969 = vmatpush1.msra.mxu0 0.0
    %3970 = vmatprep.subr.mxu0 0.0
    %3971 = vmatpush1.msra.mxu0 0.0
    %3972 = vmatprep.subr.mxu0 0.0
    %3973 = vmatpush1.msra.mxu0 0.0
    %3974 = vmatprep.subr.mxu0 0.0
    %3975 = vmatpush1.msra.mxu0 0.0
    %3976 = vmatprep.mubr.f32.mxu0 0.0
    %3977 = vmatmul.mubr.f32.gmra.mrb[0].mxu0 %v3907
    %v3978 = vpop.f32.mrb[0].mxu0
    %v3979 = vadd.f32 0.0, %v3978
    %v3980 = vpop.f32.mrb[0].mxu0
    %3981 = vmatprep.mubr.f32.mxu0 0.0
    %3982 = vmatmul.mubr.f32.gmra.mrb[0].mxu0 %v3910
    %v3983 = vpop.f32.mrb[0].mxu0
    %v3984 = vadd.f32 0.0, %v3983
    %v3985 = vpop.f32.mrb[0].mxu0
    %3986 = vdwg.mxu0
    %3987 = vrot.lane.b32.xlu0 %v2792, 40
    %v3988 = vpop.permute.xlu0 %3987
    %3989 = vrot.lane.b32.xlu0 %v2797, 40
    %v3990 = vpop.permute.xlu0 %3989
    %v3994 = vsel %vm1175, %v3716, 0
    %v3997 = vsel %vm1175, %v3717, 0
    %3999 = vmatprep.subr.mxu0 0.0
    %4000 = vmatpush1.msra.mxu0 %v3988
    %4001 = vmatprep.subr.mxu0 0.0
    %4002 = vmatpush1.msra.mxu0 %v3990
    %4003 = vmatprep.subr.mxu0 0.0
    %4004 = vmatpush1.msra.mxu0 0.0
    %4005 = vmatprep.subr.mxu0 0.0
    %4006 = vmatpush1.msra.mxu0 0.0
    %4007 = vmatprep.subr.mxu0 0.0
    %4008 = vmatpush1.msra.mxu0 0.0
    %4009 = vmatprep.subr.mxu0 0.0
    %4010 = vmatpush1.msra.mxu0 0.0
    %4011 = vmatprep.subr.mxu0 0.0
    %4012 = vmatpush1.msra.mxu0 0.0
    %4013 = vmatprep.subr.mxu0 0.0
    %4014 = vmatpush1.msra.mxu0 0.0
    %4015 = vmatprep.subr.mxu0 0.0
    %4016 = vmatpush1.msra.mxu0 0.0
    %4017 = vmatprep.subr.mxu0 0.0
    %4018 = vmatpush1.msra.mxu0 0.0
    %4019 = vmatprep.subr.mxu0 0.0
    %4020 = vmatpush1.msra.mxu0 0.0
    %4021 = vmatprep.subr.mxu0 0.0
    %4022 = vmatpush1.msra.mxu0 0.0
    %4023 = vmatprep.subr.mxu0 0.0
    %4024 = vmatpush1.msra.mxu0 0.0
    %4025 = vmatprep.subr.mxu0 0.0
    %4026 = vmatpush1.msra.mxu0 0.0
    %4027 = vmatprep.subr.mxu0 0.0
    %4028 = vmatpush1.msra.mxu0 0.0
    %4029 = vmatprep.subr.mxu0 0.0
    %4030 = vmatpush1.msra.mxu0 0.0
    %4031 = vmatprep.subr.mxu0 0.0
    %4032 = vmatpush1.msra.mxu0 0.0
    %4033 = vmatprep.subr.mxu0 0.0
    %4034 = vmatpush1.msra.mxu0 0.0
    %4035 = vmatprep.subr.mxu0 0.0
    %4036 = vmatpush1.msra.mxu0 0.0
    %4037 = vmatprep.subr.mxu0 0.0
    %4038 = vmatpush1.msra.mxu0 0.0
    %4039 = vmatprep.subr.mxu0 0.0
    %4040 = vmatpush1.msra.mxu0 0.0
    %4041 = vmatprep.subr.mxu0 0.0
    %4042 = vmatpush1.msra.mxu0 0.0
    %4043 = vmatprep.subr.mxu0 0.0
    %4044 = vmatpush1.msra.mxu0 0.0
    %4045 = vmatprep.subr.mxu0 0.0
    %4046 = vmatpush1.msra.mxu0 0.0
    %4047 = vmatprep.subr.mxu0 0.0
    %4048 = vmatpush1.msra.mxu0 0.0
    %4049 = vmatprep.subr.mxu0 0.0
    %4050 = vmatpush1.msra.mxu0 0.0
    %4051 = vmatprep.subr.mxu0 0.0
    %4052 = vmatpush1.msra.mxu0 0.0
    %4053 = vmatprep.subr.mxu0 0.0
    %4054 = vmatpush1.msra.mxu0 0.0
    %4055 = vmatprep.subr.mxu0 0.0
    %4056 = vmatpush1.msra.mxu0 0.0
    %4057 = vmatprep.subr.mxu0 0.0
    %4058 = vmatpush1.msra.mxu0 0.0
    %4059 = vmatprep.subr.mxu0 0.0
    %4060 = vmatpush1.msra.mxu0 0.0
    %4061 = vmatprep.subr.mxu0 0.0
    %4062 = vmatpush1.msra.mxu0 0.0
    %4063 = vmatprep.mubr.f32.mxu0 0.0
    %4064 = vmatmul.mubr.f32.gmra.mrb[0].mxu0 %v3994
    %v4065 = vpop.f32.mrb[0].mxu0
    %v4066 = vadd.f32 0.0, %v4065
    %v4067 = vpop.f32.mrb[0].mxu0
    %4068 = vmatprep.mubr.f32.mxu0 0.0
    %4069 = vmatmul.mubr.f32.gmra.mrb[0].mxu0 %v3997
    %v4070 = vpop.f32.mrb[0].mxu0
    %v4071 = vadd.f32 0.0, %v4070
    %v4072 = vpop.f32.mrb[0].mxu0
    %4073 = vdwg.mxu0
    %4076 = vrot.lane.b32.xlu0 %v3892, 8
    %v4077 = vpop.permute.xlu0 %4076
    %4078 = vrot.lane.b32.xlu0 %v3897, 8
    %v4079 = vpop.permute.xlu0 %4078
    %4084 = vrot.lane.b32.xlu0 %v3979, 16
    %v4085 = vpop.permute.xlu0 %4084
    %4086 = vrot.lane.b32.xlu0 %v3984, 16
    %v4087 = vpop.permute.xlu0 %4086
    %4092 = vrot.lane.b32.xlu0 %v4066, 24
    %v4093 = vpop.permute.xlu0 %4092
    %4094 = vrot.lane.b32.xlu0 %v4071, 24
    %v4095 = vpop.permute.xlu0 %4094
    %v4098 = vsel %vm440, %v3805, %v4077
    %v4099 = vsel %vm440, %v3810, %v4079
    %v4100 = vsel %vm1175, %v4098, %v4085
    %v4101 = vsel %vm1175, %v4099, %v4087
    %v4102 = vsel %vm1728, %v4100, %v4093
    %v4103 = vsel %vm1728, %v4101, %v4095
    %4104 = vrot.lane.b32.xlu0 %v2802, 64
    %v4105 = vpop.permute.xlu0 %4104
    %4106 = vrot.lane.b32.xlu0 %v2807, 64
    %v4107 = vpop.permute.xlu0 %4106
    %v4111 = vsel %vm1175, %v3718, 0
    %v4114 = vsel %vm1175, %v3719, 0
    %4116 = vmatprep.subr.mxu0 0.0
    %4117 = vmatpush1.msra.mxu0 %v4105
    %4118 = vmatprep.subr.mxu0 0.0
    %4119 = vmatpush1.msra.mxu0 %v4107
    %4120 = vmatprep.subr.mxu0 0.0
    %4121 = vmatpush1.msra.mxu0 0.0
    %4122 = vmatprep.subr.mxu0 0.0
    %4123 = vmatpush1.msra.mxu0 0.0
    %4124 = vmatprep.subr.mxu0 0.0
    %4125 = vmatpush1.msra.mxu0 0.0
    %4126 = vmatprep.subr.mxu0 0.0
    %4127 = vmatpush1.msra.mxu0 0.0
    %4128 = vmatprep.subr.mxu0 0.0
    %4129 = vmatpush1.msra.mxu0 0.0
    %4130 = vmatprep.subr.mxu0 0.0
    %4131 = vmatpush1.msra.mxu0 0.0
    %4132 = vmatprep.subr.mxu0 0.0
    %4133 = vmatpush1.msra.mxu0 0.0
    %4134 = vmatprep.subr.mxu0 0.0
    %4135 = vmatpush1.msra.mxu0 0.0
    %4136 = vmatprep.subr.mxu0 0.0
    %4137 = vmatpush1.msra.mxu0 0.0
    %4138 = vmatprep.subr.mxu0 0.0
    %4139 = vmatpush1.msra.mxu0 0.0
    %4140 = vmatprep.subr.mxu0 0.0
    %4141 = vmatpush1.msra.mxu0 0.0
    %4142 = vmatprep.subr.mxu0 0.0
    %4143 = vmatpush1.msra.mxu0 0.0
    %4144 = vmatprep.subr.mxu0 0.0
    %4145 = vmatpush1.msra.mxu0 0.0
    %4146 = vmatprep.subr.mxu0 0.0
    %4147 = vmatpush1.msra.mxu0 0.0
    %4148 = vmatprep.subr.mxu0 0.0
    %4149 = vmatpush1.msra.mxu0 0.0
    %4150 = vmatprep.subr.mxu0 0.0
    %4151 = vmatpush1.msra.mxu0 0.0
    %4152 = vmatprep.subr.mxu0 0.0
    %4153 = vmatpush1.msra.mxu0 0.0
    %4154 = vmatprep.subr.mxu0 0.0
    %4155 = vmatpush1.msra.mxu0 0.0
    %4156 = vmatprep.subr.mxu0 0.0
    %4157 = vmatpush1.msra.mxu0 0.0
    %4158 = vmatprep.subr.mxu0 0.0
    %4159 = vmatpush1.msra.mxu0 0.0
    %4160 = vmatprep.subr.mxu0 0.0
    %4161 = vmatpush1.msra.mxu0 0.0
    %4162 = vmatprep.subr.mxu0 0.0
    %4163 = vmatpush1.msra.mxu0 0.0
    %4164 = vmatprep.subr.mxu0 0.0
    %4165 = vmatpush1.msra.mxu0 0.0
    %4166 = vmatprep.subr.mxu0 0.0
    %4167 = vmatpush1.msra.mxu0 0.0
    %4168 = vmatprep.subr.mxu0 0.0
    %4169 = vmatpush1.msra.mxu0 0.0
    %4170 = vmatprep.subr.mxu0 0.0
    %4171 = vmatpush1.msra.mxu0 0.0
    %4172 = vmatprep.subr.mxu0 0.0
    %4173 = vmatpush1.msra.mxu0 0.0
    %4174 = vmatprep.subr.mxu0 0.0
    %4175 = vmatpush1.msra.mxu0 0.0
    %4176 = vmatprep.subr.mxu0 0.0
    %4177 = vmatpush1.msra.mxu0 0.0
    %4178 = vmatprep.subr.mxu0 0.0
    %4179 = vmatpush1.msra.mxu0 0.0
    %4180 = vmatprep.mubr.f32.mxu0 0.0
    %4181 = vmatmul.mubr.f32.gmra.mrb[0].mxu0 %v4111
    %v4182 = vpop.f32.mrb[0].mxu0
    %v4183 = vadd.f32 0.0, %v4182
    %v4184 = vpop.f32.mrb[0].mxu0
    %4185 = vmatprep.mubr.f32.mxu0 0.0
    %4186 = vmatmul.mubr.f32.gmra.mrb[0].mxu0 %v4114
    %v4187 = vpop.f32.mrb[0].mxu0
    %v4188 = vadd.f32 0.0, %v4187
    %v4189 = vpop.f32.mrb[0].mxu0
    %4190 = vdwg.mxu0
    %4191 = vrot.lane.b32.xlu0 %v2802, 56
    %v4192 = vpop.permute.xlu0 %4191
    %4193 = vrot.lane.b32.xlu0 %v2807, 56
    %v4194 = vpop.permute.xlu0 %4193
    %v4198 = vsel %vm1175, %v3720, 0
    %v4201 = vsel %vm1175, %v3721, 0
    %4203 = vmatprep.subr.mxu0 0.0
    %4204 = vmatpush1.msra.mxu0 %v4192
    %4205 = vmatprep.subr.mxu0 0.0
    %4206 = vmatpush1.msra.mxu0 %v4194
    %4207 = vmatprep.subr.mxu0 0.0
    %4208 = vmatpush1.msra.mxu0 0.0
    %4209 = vmatprep.subr.mxu0 0.0
    %4210 = vmatpush1.msra.mxu0 0.0
    %4211 = vmatprep.subr.mxu0 0.0
    %4212 = vmatpush1.msra.mxu0 0.0
    %4213 = vmatprep.subr.mxu0 0.0
    %4214 = vmatpush1.msra.mxu0 0.0
    %4215 = vmatprep.subr.mxu0 0.0
    %4216 = vmatpush1.msra.mxu0 0.0
    %4217 = vmatprep.subr.mxu0 0.0
    %4218 = vmatpush1.msra.mxu0 0.0
    %4219 = vmatprep.subr.mxu0 0.0
    %4220 = vmatpush1.msra.mxu0 0.0
    %4221 = vmatprep.subr.mxu0 0.0
    %4222 = vmatpush1.msra.mxu0 0.0
    %4223 = vmatprep.subr.mxu0 0.0
    %4224 = vmatpush1.msra.mxu0 0.0
    %4225 = vmatprep.subr.mxu0 0.0
    %4226 = vmatpush1.msra.mxu0 0.0
    %4227 = vmatprep.subr.mxu0 0.0
    %4228 = vmatpush1.msra.mxu0 0.0
    %4229 = vmatprep.subr.mxu0 0.0
    %4230 = vmatpush1.msra.mxu0 0.0
    %4231 = vmatprep.subr.mxu0 0.0
    %4232 = vmatpush1.msra.mxu0 0.0
    %4233 = vmatprep.subr.mxu0 0.0
    %4234 = vmatpush1.msra.mxu0 0.0
    %4235 = vmatprep.subr.mxu0 0.0
    %4236 = vmatpush1.msra.mxu0 0.0
    %4237 = vmatprep.subr.mxu0 0.0
    %4238 = vmatpush1.msra.mxu0 0.0
    %4239 = vmatprep.subr.mxu0 0.0
    %4240 = vmatpush1.msra.mxu0 0.0
    %4241 = vmatprep.subr.mxu0 0.0
    %4242 = vmatpush1.msra.mxu0 0.0
    %4243 = vmatprep.subr.mxu0 0.0
    %4244 = vmatpush1.msra.mxu0 0.0
    %4245 = vmatprep.subr.mxu0 0.0
    %4246 = vmatpush1.msra.mxu0 0.0
    %4247 = vmatprep.subr.mxu0 0.0
    %4248 = vmatpush1.msra.mxu0 0.0
    %4249 = vmatprep.subr.mxu0 0.0
    %4250 = vmatpush1.msra.mxu0 0.0
    %4251 = vmatprep.subr.mxu0 0.0
    %4252 = vmatpush1.msra.mxu0 0.0
    %4253 = vmatprep.subr.mxu0 0.0
    %4254 = vmatpush1.msra.mxu0 0.0
    %4255 = vmatprep.subr.mxu0 0.0
    %4256 = vmatpush1.msra.mxu0 0.0
    %4257 = vmatprep.subr.mxu0 0.0
    %4258 = vmatpush1.msra.mxu0 0.0
    %4259 = vmatprep.subr.mxu0 0.0
    %4260 = vmatpush1.msra.mxu0 0.0
    %4261 = vmatprep.subr.mxu0 0.0
    %4262 = vmatpush1.msra.mxu0 0.0
    %4263 = vmatprep.subr.mxu0 0.0
    %4264 = vmatpush1.msra.mxu0 0.0
    %4265 = vmatprep.subr.mxu0 0.0
    %4266 = vmatpush1.msra.mxu0 0.0
    %4267 = vmatprep.mubr.f32.mxu0 0.0
    %4268 = vmatmul.mubr.f32.gmra.mrb[0].mxu0 %v4198
    %v4269 = vpop.f32.mrb[0].mxu0
    %v4270 = vadd.f32 0.0, %v4269
    %v4271 = vpop.f32.mrb[0].mxu0
    %4272 = vmatprep.mubr.f32.mxu0 0.0
    %4273 = vmatmul.mubr.f32.gmra.mrb[0].mxu0 %v4201
    %v4274 = vpop.f32.mrb[0].mxu0
    %v4275 = vadd.f32 0.0, %v4274
    %v4276 = vpop.f32.mrb[0].mxu0
    %4277 = vdwg.mxu0
    %4278 = vrot.lane.b32.xlu0 %v2802, 48
    %v4279 = vpop.permute.xlu0 %4278
    %4280 = vrot.lane.b32.xlu0 %v2807, 48
    %v4281 = vpop.permute.xlu0 %4280
    %v4285 = vsel %vm1175, %v3722, 0
    %v4288 = vsel %vm1175, %v3723, 0
    %4290 = vmatprep.subr.mxu0 0.0
    %4291 = vmatpush1.msra.mxu0 %v4279
    %4292 = vmatprep.subr.mxu0 0.0
    %4293 = vmatpush1.msra.mxu0 %v4281
    %4294 = vmatprep.subr.mxu0 0.0
    %4295 = vmatpush1.msra.mxu0 0.0
    %4296 = vmatprep.subr.mxu0 0.0
    %4297 = vmatpush1.msra.mxu0 0.0
    %4298 = vmatprep.subr.mxu0 0.0
    %4299 = vmatpush1.msra.mxu0 0.0
    %4300 = vmatprep.subr.mxu0 0.0
    %4301 = vmatpush1.msra.mxu0 0.0
    %4302 = vmatprep.subr.mxu0 0.0
    %4303 = vmatpush1.msra.mxu0 0.0
    %4304 = vmatprep.subr.mxu0 0.0
    %4305 = vmatpush1.msra.mxu0 0.0
    %4306 = vmatprep.subr.mxu0 0.0
    %4307 = vmatpush1.msra.mxu0 0.0
    %4308 = vmatprep.subr.mxu0 0.0
    %4309 = vmatpush1.msra.mxu0 0.0
    %4310 = vmatprep.subr.mxu0 0.0
    %4311 = vmatpush1.msra.mxu0 0.0
    %4312 = vmatprep.subr.mxu0 0.0
    %4313 = vmatpush1.msra.mxu0 0.0
    %4314 = vmatprep.subr.mxu0 0.0
    %4315 = vmatpush1.msra.mxu0 0.0
    %4316 = vmatprep.subr.mxu0 0.0
    %4317 = vmatpush1.msra.mxu0 0.0
    %4318 = vmatprep.subr.mxu0 0.0
    %4319 = vmatpush1.msra.mxu0 0.0
    %4320 = vmatprep.subr.mxu0 0.0
    %4321 = vmatpush1.msra.mxu0 0.0
    %4322 = vmatprep.subr.mxu0 0.0
    %4323 = vmatpush1.msra.mxu0 0.0
    %4324 = vmatprep.subr.mxu0 0.0
    %4325 = vmatpush1.msra.mxu0 0.0
    %4326 = vmatprep.subr.mxu0 0.0
    %4327 = vmatpush1.msra.mxu0 0.0
    %4328 = vmatprep.subr.mxu0 0.0
    %4329 = vmatpush1.msra.mxu0 0.0
    %4330 = vmatprep.subr.mxu0 0.0
    %4331 = vmatpush1.msra.mxu0 0.0
    %4332 = vmatprep.subr.mxu0 0.0
    %4333 = vmatpush1.msra.mxu0 0.0
    %4334 = vmatprep.subr.mxu0 0.0
    %4335 = vmatpush1.msra.mxu0 0.0
    %4336 = vmatprep.subr.mxu0 0.0
    %4337 = vmatpush1.msra.mxu0 0.0
    %4338 = vmatprep.subr.mxu0 0.0
    %4339 = vmatpush1.msra.mxu0 0.0
    %4340 = vmatprep.subr.mxu0 0.0
    %4341 = vmatpush1.msra.mxu0 0.0
    %4342 = vmatprep.subr.mxu0 0.0
    %4343 = vmatpush1.msra.mxu0 0.0
    %4344 = vmatprep.subr.mxu0 0.0
    %4345 = vmatpush1.msra.mxu0 0.0
    %4346 = vmatprep.subr.mxu0 0.0
    %4347 = vmatpush1.msra.mxu0 0.0
    %4348 = vmatprep.subr.mxu0 0.0
    %4349 = vmatpush1.msra.mxu0 0.0
    %4350 = vmatprep.subr.mxu0 0.0
    %4351 = vmatpush1.msra.mxu0 0.0
    %4352 = vmatprep.subr.mxu0 0.0
    %4353 = vmatpush1.msra.mxu0 0.0
    %4354 = vmatprep.mubr.f32.mxu0 0.0
    %4355 = vmatmul.mubr.f32.gmra.mrb[0].mxu0 %v4285
    %v4356 = vpop.f32.mrb[0].mxu0
    %v4357 = vadd.f32 0.0, %v4356
    %v4358 = vpop.f32.mrb[0].mxu0
    %4359 = vmatprep.mubr.f32.mxu0 0.0
    %4360 = vmatmul.mubr.f32.gmra.mrb[0].mxu0 %v4288
    %v4361 = vpop.f32.mrb[0].mxu0
    %v4362 = vadd.f32 0.0, %v4361
    %v4363 = vpop.f32.mrb[0].mxu0
    %4364 = vdwg.mxu0
    %4365 = vrot.lane.b32.xlu0 %v2802, 40
    %v4366 = vpop.permute.xlu0 %4365
    %4367 = vrot.lane.b32.xlu0 %v2807, 40
    %v4368 = vpop.permute.xlu0 %4367
    %v4372 = vsel %vm1175, %v3724, 0
    %v4375 = vsel %vm1175, %v3725, 0
    %4377 = vmatprep.subr.mxu0 0.0
    %4378 = vmatpush1.msra.mxu0 %v4366
    %4379 = vmatprep.subr.mxu0 0.0
    %4380 = vmatpush1.msra.mxu0 %v4368
    %4381 = vmatprep.subr.mxu0 0.0
    %4382 = vmatpush1.msra.mxu0 0.0
    %4383 = vmatprep.subr.mxu0 0.0
    %4384 = vmatpush1.msra.mxu0 0.0
    %4385 = vmatprep.subr.mxu0 0.0
    %4386 = vmatpush1.msra.mxu0 0.0
    %4387 = vmatprep.subr.mxu0 0.0
    %4388 = vmatpush1.msra.mxu0 0.0
    %4389 = vmatprep.subr.mxu0 0.0
    %4390 = vmatpush1.msra.mxu0 0.0
    %4391 = vmatprep.subr.mxu0 0.0
    %4392 = vmatpush1.msra.mxu0 0.0
    %4393 = vmatprep.subr.mxu0 0.0
    %4394 = vmatpush1.msra.mxu0 0.0
    %4395 = vmatprep.subr.mxu0 0.0
    %4396 = vmatpush1.msra.mxu0 0.0
    %4397 = vmatprep.subr.mxu0 0.0
    %4398 = vmatpush1.msra.mxu0 0.0
    %4399 = vmatprep.subr.mxu0 0.0
    %4400 = vmatpush1.msra.mxu0 0.0
    %4401 = vmatprep.subr.mxu0 0.0
    %4402 = vmatpush1.msra.mxu0 0.0
    %4403 = vmatprep.subr.mxu0 0.0
    %4404 = vmatpush1.msra.mxu0 0.0
    %4405 = vmatprep.subr.mxu0 0.0
    %4406 = vmatpush1.msra.mxu0 0.0
    %4407 = vmatprep.subr.mxu0 0.0
    %4408 = vmatpush1.msra.mxu0 0.0
    %4409 = vmatprep.subr.mxu0 0.0
    %4410 = vmatpush1.msra.mxu0 0.0
    %4411 = vmatprep.subr.mxu0 0.0
    %4412 = vmatpush1.msra.mxu0 0.0
    %4413 = vmatprep.subr.mxu0 0.0
    %4414 = vmatpush1.msra.mxu0 0.0
    %4415 = vmatprep.subr.mxu0 0.0
    %4416 = vmatpush1.msra.mxu0 0.0
    %4417 = vmatprep.subr.mxu0 0.0
    %4418 = vmatpush1.msra.mxu0 0.0
    %4419 = vmatprep.subr.mxu0 0.0
    %4420 = vmatpush1.msra.mxu0 0.0
    %4421 = vmatprep.subr.mxu0 0.0
    %4422 = vmatpush1.msra.mxu0 0.0
    %4423 = vmatprep.subr.mxu0 0.0
    %4424 = vmatpush1.msra.mxu0 0.0
    %4425 = vmatprep.subr.mxu0 0.0
    %4426 = vmatpush1.msra.mxu0 0.0
    %4427 = vmatprep.subr.mxu0 0.0
    %4428 = vmatpush1.msra.mxu0 0.0
    %4429 = vmatprep.subr.mxu0 0.0
    %4430 = vmatpush1.msra.mxu0 0.0
    %4431 = vmatprep.subr.mxu0 0.0
    %4432 = vmatpush1.msra.mxu0 0.0
    %4433 = vmatprep.subr.mxu0 0.0
    %4434 = vmatpush1.msra.mxu0 0.0
    %4435 = vmatprep.subr.mxu0 0.0
    %4436 = vmatpush1.msra.mxu0 0.0
    %4437 = vmatprep.subr.mxu0 0.0
    %4438 = vmatpush1.msra.mxu0 0.0
    %4439 = vmatprep.subr.mxu0 0.0
    %4440 = vmatpush1.msra.mxu0 0.0
    %4441 = vmatprep.mubr.f32.mxu0 0.0
    %4442 = vmatmul.mubr.f32.gmra.mrb[0].mxu0 %v4372
    %v4443 = vpop.f32.mrb[0].mxu0
    %v4444 = vadd.f32 0.0, %v4443
    %v4445 = vpop.f32.mrb[0].mxu0
    %4446 = vmatprep.mubr.f32.mxu0 0.0
    %4447 = vmatmul.mubr.f32.gmra.mrb[0].mxu0 %v4375
    %v4448 = vpop.f32.mrb[0].mxu0
    %v4449 = vadd.f32 0.0, %v4448
    %v4450 = vpop.f32.mrb[0].mxu0
    %4451 = vdwg.mxu0
    %4454 = vrot.lane.b32.xlu0 %v4270, 8
    %v4455 = vpop.permute.xlu0 %4454
    %4456 = vrot.lane.b32.xlu0 %v4275, 8
    %v4457 = vpop.permute.xlu0 %4456
    %4462 = vrot.lane.b32.xlu0 %v4357, 16
    %v4463 = vpop.permute.xlu0 %4462
    %4464 = vrot.lane.b32.xlu0 %v4362, 16
    %v4465 = vpop.permute.xlu0 %4464
    %4470 = vrot.lane.b32.xlu0 %v4444, 24
    %v4471 = vpop.permute.xlu0 %4470
    %4472 = vrot.lane.b32.xlu0 %v4449, 24
    %v4473 = vpop.permute.xlu0 %4472
    %v4476 = vsel %vm440, %v4183, %v4455
    %v4477 = vsel %vm440, %v4188, %v4457
    %v4478 = vsel %vm1175, %v4476, %v4463
    %v4479 = vsel %vm1175, %v4477, %v4465
    %v4480 = vsel %vm1728, %v4478, %v4471
    %v4481 = vsel %vm1728, %v4479, %v4473
    %s4482 = scalar_lea.vmem %s10, 32
    %v4483 = vld [vmem:[%s4482] sm:$0xff]
    %v4484 = vld [vmem:[%s4482 + $0x8] sm:$0xff]
    %v4485 = vld [vmem:[%s4482 + $0x10] sm:$0xff]
    %v4486 = vld [vmem:[%s4482 + $0x18] sm:$0xff]
    %v4488 = vsel %vm277, %v4102, 0
    %v4491 = vsel %vm277, %v4103, 0
    %v4494 = vsel %vm277, %v4480, 0
    %v4497 = vsel %vm277, %v4481, 0
    %4499 = vmatprep.subr.mxu0 0.0
    %4500 = vmatpush1.msra.mxu0 %v4483
    %4501 = vmatprep.subr.mxu0 0.0
    %4502 = vmatpush1.msra.mxu0 %v4484
    %4503 = vmatprep.subr.mxu0 0.0
    %4504 = vmatpush1.msra.mxu0 %v4485
    %4505 = vmatprep.subr.mxu0 0.0
    %4506 = vmatpush1.msra.mxu0 %v4486
    %4507 = vmatprep.subr.mxu0 0.0
    %4508 = vmatpush1.msra.mxu0 0.0
    %4509 = vmatprep.subr.mxu0 0.0
    %4510 = vmatpush1.msra.mxu0 0.0
    %4511 = vmatprep.subr.mxu0 0.0
    %4512 = vmatpush1.msra.mxu0 0.0
    %4513 = vmatprep.subr.mxu0 0.0
    %4514 = vmatpush1.msra.mxu0 0.0
    %4515 = vmatprep.subr.mxu0 0.0
    %4516 = vmatpush1.msra.mxu0 0.0
    %4517 = vmatprep.subr.mxu0 0.0
    %4518 = vmatpush1.msra.mxu0 0.0
    %4519 = vmatprep.subr.mxu0 0.0
    %4520 = vmatpush1.msra.mxu0 0.0
    %4521 = vmatprep.subr.mxu0 0.0
    %4522 = vmatpush1.msra.mxu0 0.0
    %4523 = vmatprep.subr.mxu0 0.0
    %4524 = vmatpush1.msra.mxu0 0.0
    %4525 = vmatprep.subr.mxu0 0.0
    %4526 = vmatpush1.msra.mxu0 0.0
    %4527 = vmatprep.subr.mxu0 0.0
    %4528 = vmatpush1.msra.mxu0 0.0
    %4529 = vmatprep.subr.mxu0 0.0
    %4530 = vmatpush1.msra.mxu0 0.0
    %4531 = vmatprep.subr.mxu0 0.0
    %4532 = vmatpush1.msra.mxu0 0.0
    %4533 = vmatprep.subr.mxu0 0.0
    %4534 = vmatpush1.msra.mxu0 0.0
    %4535 = vmatprep.subr.mxu0 0.0
    %4536 = vmatpush1.msra.mxu0 0.0
    %4537 = vmatprep.subr.mxu0 0.0
    %4538 = vmatpush1.msra.mxu0 0.0
    %4539 = vmatprep.subr.mxu0 0.0
    %4540 = vmatpush1.msra.mxu0 0.0
    %4541 = vmatprep.subr.mxu0 0.0
    %4542 = vmatpush1.msra.mxu0 0.0
    %4543 = vmatprep.subr.mxu0 0.0
    %4544 = vmatpush1.msra.mxu0 0.0
    %4545 = vmatprep.subr.mxu0 0.0
    %4546 = vmatpush1.msra.mxu0 0.0
    %4547 = vmatprep.subr.mxu0 0.0
    %4548 = vmatpush1.msra.mxu0 0.0
    %4549 = vmatprep.subr.mxu0 0.0
    %4550 = vmatpush1.msra.mxu0 0.0
    %4551 = vmatprep.subr.mxu0 0.0
    %4552 = vmatpush1.msra.mxu0 0.0
    %4553 = vmatprep.subr.mxu0 0.0
    %4554 = vmatpush1.msra.mxu0 0.0
    %4555 = vmatprep.subr.mxu0 0.0
    %4556 = vmatpush1.msra.mxu0 0.0
    %4557 = vmatprep.subr.mxu0 0.0
    %4558 = vmatpush1.msra.mxu0 0.0
    %4559 = vmatprep.subr.mxu0 0.0
    %4560 = vmatpush1.msra.mxu0 0.0
    %4561 = vmatprep.subr.mxu0 0.0
    %4562 = vmatpush1.msra.mxu0 0.0
    %4563 = vmatprep.mubr.f32.mxu0 0.0
    %4564 = vmatmul.mubr.f32.gmra.mrb[0].mxu0 %v4488
    %v4565 = vpop.f32.mrb[0].mxu0
    %v4566 = vadd.f32 0.0, %v4565
    %v4567 = vpop.f32.mrb[0].mxu0
    %4568 = vmatprep.mubr.f32.mxu0 0.0
    %4569 = vmatmul.mubr.f32.gmra.mrb[0].mxu0 %v4491
    %v4570 = vpop.f32.mrb[0].mxu0
    %v4571 = vadd.f32 0.0, %v4570
    %v4572 = vpop.f32.mrb[0].mxu0
    %4573 = vmatprep.mubr.f32.mxu0 0.0
    %4574 = vmatmul.mubr.f32.gmra.mrb[0].mxu0 %v4494
    %v4575 = vpop.f32.mrb[0].mxu0
    %v4576 = vadd.f32 0.0, %v4575
    %v4577 = vpop.f32.mrb[0].mxu0
    %4578 = vmatprep.mubr.f32.mxu0 0.0
    %4579 = vmatmul.mubr.f32.gmra.mrb[0].mxu0 %v4497
    %v4580 = vpop.f32.mrb[0].mxu0
    %v4581 = vadd.f32 0.0, %v4580
    %v4582 = vpop.f32.mrb[0].mxu0
    %4583 = vdwg.mxu0
    %v4584 = vadd.f32 %v2628, %v4566
    %v4585 = vadd.f32 %v2629, %v4571
    %v4586 = vadd.f32 %v2630, %v4576
    %v4587 = vadd.f32 %v2631, %v4581
    %s4588 = scalar_lea.vmem %s11, 1
    %v4589 = vld [vmem:[%s4588] sm:$0x1]
    %v4591 = vlaneseq
    %v4592 = vshrl.u32 %v4591, 7
    %v4593 = vsub.s32 0, %v4592
    %v4594 = vrot.slane %v4589, %v4593
    %v4596 = vadd.f32 %v4584, %v4594
    %v4597 = vadd.f32 %v4585, %v4594
    %v4598 = vadd.f32 %v4586, %v4594
    %v4599 = vadd.f32 %v4587, %v4594
    %s4600 = scalar_lea.vmem %s12, 1
    %v4601 = vld [vmem:[%s4600] sm:$0x1]
    %s4602 = scalar_lea.vmem %s13, 1
    %v4603 = vld [vmem:[%s4602] sm:$0x1]
    %v4604 = vsel %vm277, %v4596, 0.0
    %4605 = vadd.xlane.f32.xlu0 %v4604
    %v4606 = vpop.xlane.xlu0 %4605
    %v4607 = vsel %vm277, %v4597, 0.0
    %4608 = vadd.xlane.f32.xlu0 %v4607
    %v4609 = vpop.xlane.xlu0 %4608
    %v4610 = vsel %vm277, %v4598, 0.0
    %4611 = vadd.xlane.f32.xlu0 %v4610
    %v4612 = vpop.xlane.xlu0 %4611
    %v4613 = vsel %vm277, %v4599, 0.0
    %4614 = vadd.xlane.f32.xlu0 %v4613
    %v4615 = vpop.xlane.xlu0 %4614
    %v4616 = vmul.f32 %v4606, %v287
    %v4617 = vmul.f32 %v4609, %v287
    %v4618 = vmul.f32 %v4612, %v287
    %v4619 = vmul.f32 %v4615, %v287
    %v4620 = vsub.f32 %v4596, %v4616
    %v4621 = vsub.f32 %v4597, %v4617
    %v4622 = vsub.f32 %v4598, %v4618
    %v4623 = vsub.f32 %v4599, %v4619
    %v4624 = vmul.f32 %v4620, %v4620
    %v4625 = vmul.f32 %v4621, %v4621
    %v4626 = vmul.f32 %v4622, %v4622
    %v4627 = vmul.f32 %v4623, %v4623
    %v4628 = vsel %vm277, %v4624, 0.0
    %4629 = vadd.xlane.f32.xlu0 %v4628
    %v4630 = vpop.xlane.xlu0 %4629
    %v4631 = vsel %vm277, %v4625, 0.0
    %4632 = vadd.xlane.f32.xlu0 %v4631
    %v4633 = vpop.xlane.xlu0 %4632
    %v4634 = vsel %vm277, %v4626, 0.0
    %4635 = vadd.xlane.f32.xlu0 %v4634
    %v4636 = vpop.xlane.xlu0 %4635
    %v4637 = vsel %vm277, %v4627, 0.0
    %4638 = vadd.xlane.f32.xlu0 %v4637
    %v4639 = vpop.xlane.xlu0 %4638
    %v4640 = vmul.f32 %v4630, %v287
    %v4641 = vmul.f32 %v4633, %v287
    %v4642 = vmul.f32 %v4636, %v287
    %v4643 = vmul.f32 %v4639, %v287
    %v4644 = vadd.f32 %v4640, 1e-05
    %v4645 = vadd.f32 %v4641, 1e-05
    %v4646 = vadd.f32 %v4642, 1e-05
    %v4647 = vadd.f32 %v4643, 1e-05
    %v4648 = vrsqrt.pop %v4644
    %v4649 = vrsqrt.pop %v4645
    %v4650 = vrsqrt.pop %v4646
    %v4651 = vrsqrt.pop %v4647
    %v4652 = vmul.f32 %v4620, %v4648
    %v4653 = vmul.f32 %v4621, %v4649
    %v4654 = vmul.f32 %v4622, %v4650
    %v4655 = vmul.f32 %v4623, %v4651
    %v4657 = vlaneseq
    %v4658 = vshrl.u32 %v4657, 7
    %v4659 = vsub.s32 0, %v4658
    %v4660 = vrot.slane %v4601, %v4659
    %v4662 = vmul.f32 %v4652, %v4660
    %v4663 = vmul.f32 %v4653, %v4660
    %v4664 = vmul.f32 %v4654, %v4660
    %v4665 = vmul.f32 %v4655, %v4660
    %v4667 = vlaneseq
    %v4668 = vshrl.u32 %v4667, 7
    %v4669 = vsub.s32 0, %v4668
    %v4670 = vrot.slane %v4603, %v4669
    %v4672 = vadd.f32 %v4662, %v4670
    %v4673 = vadd.f32 %v4663, %v4670
    %v4674 = vadd.f32 %v4664, %v4670
    %v4675 = vadd.f32 %v4665, %v4670
    %s4676 = scalar_lea.vmem %s14, 32
    %v4677 = vld [vmem:[%s4676] sm:$0xff]
    %v4678 = vld [vmem:[%s4676 + $0x8] sm:$0xff]
    %v4679 = vld [vmem:[%s4676 + $0x10] sm:$0xff]
    %v4680 = vld [vmem:[%s4676 + $0x18] sm:$0xff]
    %s4681 = scalar_lea.vmem %s15, 1
    %v4682 = vld [vmem:[%s4681] sm:$0x1]
    %v4684 = vlaneseq
    %v4685 = vshrl.u32 %v4684, 7
    %v4686 = vsub.s32 0, %v4685
    %v4687 = vrot.slane %v4682, %v4686
    %v4690 = vsel %vm277, %v4672, 0
    %v4693 = vsel %vm277, %v4673, 0
    %v4696 = vsel %vm277, %v4674, 0
    %v4699 = vsel %vm277, %v4675, 0
    %4701 = vmatprep.subr.mxu0 0.0
    %4702 = vmatpush1.msra.mxu0 %v4677
    %4703 = vmatprep.subr.mxu0 0.0
    %4704 = vmatpush1.msra.mxu0 %v4678
    %4705 = vmatprep.subr.mxu0 0.0
    %4706 = vmatpush1.msra.mxu0 %v4679
    %4707 = vmatprep.subr.mxu0 0.0
    %4708 = vmatpush1.msra.mxu0 %v4680
    %4709 = vmatprep.subr.mxu0 0.0
    %4710 = vmatpush1.msra.mxu0 0.0
    %4711 = vmatprep.subr.mxu0 0.0
    %4712 = vmatpush1.msra.mxu0 0.0
    %4713 = vmatprep.subr.mxu0 0.0
    %4714 = vmatpush1.msra.mxu0 0.0
    %4715 = vmatprep.subr.mxu0 0.0
    %4716 = vmatpush1.msra.mxu0 0.0
    %4717 = vmatprep.subr.mxu0 0.0
    %4718 = vmatpush1.msra.mxu0 0.0
    %4719 = vmatprep.subr.mxu0 0.0
    %4720 = vmatpush1.msra.mxu0 0.0
    %4721 = vmatprep.subr.mxu0 0.0
    %4722 = vmatpush1.msra.mxu0 0.0
    %4723 = vmatprep.subr.mxu0 0.0
    %4724 = vmatpush1.msra.mxu0 0.0
    %4725 = vmatprep.subr.mxu0 0.0
    %4726 = vmatpush1.msra.mxu0 0.0
    %4727 = vmatprep.subr.mxu0 0.0
    %4728 = vmatpush1.msra.mxu0 0.0
    %4729 = vmatprep.subr.mxu0 0.0
    %4730 = vmatpush1.msra.mxu0 0.0
    %4731 = vmatprep.subr.mxu0 0.0
    %4732 = vmatpush1.msra.mxu0 0.0
    %4733 = vmatprep.subr.mxu0 0.0
    %4734 = vmatpush1.msra.mxu0 0.0
    %4735 = vmatprep.subr.mxu0 0.0
    %4736 = vmatpush1.msra.mxu0 0.0
    %4737 = vmatprep.subr.mxu0 0.0
    %4738 = vmatpush1.msra.mxu0 0.0
    %4739 = vmatprep.subr.mxu0 0.0
    %4740 = vmatpush1.msra.mxu0 0.0
    %4741 = vmatprep.subr.mxu0 0.0
    %4742 = vmatpush1.msra.mxu0 0.0
    %4743 = vmatprep.subr.mxu0 0.0
    %4744 = vmatpush1.msra.mxu0 0.0
    %4745 = vmatprep.subr.mxu0 0.0
    %4746 = vmatpush1.msra.mxu0 0.0
    %4747 = vmatprep.subr.mxu0 0.0
    %4748 = vmatpush1.msra.mxu0 0.0
    %4749 = vmatprep.subr.mxu0 0.0
    %4750 = vmatpush1.msra.mxu0 0.0
    %4751 = vmatprep.subr.mxu0 0.0
    %4752 = vmatpush1.msra.mxu0 0.0
    %4753 = vmatprep.subr.mxu0 0.0
    %4754 = vmatpush1.msra.mxu0 0.0
    %4755 = vmatprep.subr.mxu0 0.0
    %4756 = vmatpush1.msra.mxu0 0.0
    %4757 = vmatprep.subr.mxu0 0.0
    %4758 = vmatpush1.msra.mxu0 0.0
    %4759 = vmatprep.subr.mxu0 0.0
    %4760 = vmatpush1.msra.mxu0 0.0
    %4761 = vmatprep.subr.mxu0 0.0
    %4762 = vmatpush1.msra.mxu0 0.0
    %4763 = vmatprep.subr.mxu0 0.0
    %4764 = vmatpush1.msra.mxu0 0.0
    %4765 = vmatprep.mubr.f32.mxu0 0.0
    %4766 = vmatmul.mubr.f32.gmra.mrb[0].mxu0 %v4690
    %v4767 = vpop.f32.mrb[0].mxu0
    %v4768 = vadd.f32 %v4687, %v4767
    %v4769 = vpop.f32.mrb[0].mxu0
    %4770 = vmatprep.mubr.f32.mxu0 0.0
    %4771 = vmatmul.mubr.f32.gmra.mrb[0].mxu0 %v4693
    %v4772 = vpop.f32.mrb[0].mxu0
    %v4773 = vadd.f32 %v4687, %v4772
    %v4774 = vpop.f32.mrb[0].mxu0
    %4775 = vmatprep.mubr.f32.mxu0 0.0
    %4776 = vmatmul.mubr.f32.gmra.mrb[0].mxu0 %v4696
    %v4777 = vpop.f32.mrb[0].mxu0
    %v4778 = vadd.f32 %v4687, %v4777
    %v4779 = vpop.f32.mrb[0].mxu0
    %4780 = vmatprep.mubr.f32.mxu0 0.0
    %4781 = vmatmul.mubr.f32.gmra.mrb[0].mxu0 %v4699
    %v4782 = vpop.f32.mrb[0].mxu0
    %v4783 = vadd.f32 %v4687, %v4782
    %v4784 = vpop.f32.mrb[0].mxu0
    %4785 = vdwg.mxu0
    %v4786 = vmul.f32 %v4768, 0.5
    %v4787 = vmul.f32 %v4773, 0.5
    %v4788 = vmul.f32 %v4778, 0.5
    %v4789 = vmul.f32 %v4783, 0.5
    %v4790 = vmul.f32 %v4768, 0.70710677
    %v4791 = vmul.f32 %v4773, 0.70710677
    %v4792 = vmul.f32 %v4778, 0.70710677
    %v4793 = vmul.f32 %v4783, 0.70710677
    %vm4794 = vcmp.ge.f32.partialorder %v4790, 0.0
    %vm4795 = vcmp.ge.f32.partialorder %v4791, 0.0
    %vm4796 = vcmp.ge.f32.partialorder %v4792, 0.0
    %vm4797 = vcmp.ge.f32.partialorder %v4793, 0.0
    %v4798 = vsel %vm4794, 1.0, -1.0
    %v4799 = vsel %vm4795, 1.0, -1.0
    %v4800 = vsel %vm4796, 1.0, -1.0
    %v4801 = vsel %vm4797, 1.0, -1.0
    %v4802 = vand.u32 2147483647, %v4790
    %v4803 = vand.u32 2147483647, %v4791
    %v4804 = vand.u32 2147483647, %v4792
    %v4805 = vand.u32 2147483647, %v4793
    %v4806 = vmul.f32 %v4802, 0.3275911
    %v4807 = vmul.f32 %v4803, 0.3275911
    %v4808 = vmul.f32 %v4804, 0.3275911
    %v4809 = vmul.f32 %v4805, 0.3275911
    %v4810 = vadd.f32 %v4806, 1.0
    %v4811 = vadd.f32 %v4807, 1.0
    %v4812 = vadd.f32 %v4808, 1.0
    %v4813 = vadd.f32 %v4809, 1.0
    %v4814 = vrcp.pop %v4810
    %v4815 = vrcp.pop %v4811
    %v4816 = vrcp.pop %v4812
    %v4817 = vrcp.pop %v4813
    %v4818 = vmul.f32 %v4814, 1.0614054
    %v4819 = vmul.f32 %v4815, 1.0614054
    %v4820 = vmul.f32 %v4816, 1.0614054
    %v4821 = vmul.f32 %v4817, 1.0614054
    %v4822 = vadd.f32 %v4818, -1.4531521
    %v4823 = vadd.f32 %v4819, -1.4531521
    %v4824 = vadd.f32 %v4820, -1.4531521
    %v4825 = vadd.f32 %v4821, -1.4531521
    %v4826 = vmul.f32 %v4822, %v4814
    %v4827 = vmul.f32 %v4823, %v4815
    %v4828 = vmul.f32 %v4824, %v4816
    %v4829 = vmul.f32 %v4825, %v4817
    %v4830 = vadd.f32 %v4826, 1.4214138
    %v4831 = vadd.f32 %v4827, 1.4214138
    %v4832 = vadd.f32 %v4828, 1.4214138
    %v4833 = vadd.f32 %v4829, 1.4214138
    %v4834 = vmul.f32 %v4830, %v4814
    %v4835 = vmul.f32 %v4831, %v4815
    %v4836 = vmul.f32 %v4832, %v4816
    %v4837 = vmul.f32 %v4833, %v4817
    %v4838 = vadd.f32 %v4834, -0.28449672
    %v4839 = vadd.f32 %v4835, -0.28449672
    %v4840 = vadd.f32 %v4836, -0.28449672
    %v4841 = vadd.f32 %v4837, -0.28449672
    %v4842 = vmul.f32 %v4838, %v4814
    %v4843 = vmul.f32 %v4839, %v4815
    %v4844 = vmul.f32 %v4840, %v4816
    %v4845 = vmul.f32 %v4841, %v4817
    %v4846 = vadd.f32 %v4842, 0.2548296
    %v4847 = vadd.f32 %v4843, 0.2548296
    %v4848 = vadd.f32 %v4844, 0.2548296
    %v4849 = vadd.f32 %v4845, 0.2548296
    %v4850 = vmul.f32 %v4846, %v4814
    %v4851 = vmul.f32 %v4847, %v4815
    %v4852 = vmul.f32 %v4848, %v4816
    %v4853 = vmul.f32 %v4849, %v4817
    %v4854 = vsub.f32 0.0, %v4802
    %v4855 = vsub.f32 0.0, %v4803
    %v4856 = vsub.f32 0.0, %v4804
    %v4857 = vsub.f32 0.0, %v4805
    %v4858 = vmul.f32 %v4854, %v4802
    %v4859 = vmul.f32 %v4855, %v4803
    %v4860 = vmul.f32 %v4856, %v4804
    %v4861 = vmul.f32 %v4857, %v4805
    %v4862 = vmul.f32 %v4858, 1.442695
    %v4863 = vpow.pop %v4862
    %v4864 = vmul.f32 %v4859, 1.442695
    %v4865 = vpow.pop %v4864
    %v4866 = vmul.f32 %v4860, 1.442695
    %v4867 = vpow.pop %v4866
    %v4868 = vmul.f32 %v4861, 1.442695
    %v4869 = vpow.pop %v4868
    %v4870 = vmul.f32 %v4850, %v4863
    %v4871 = vmul.f32 %v4851, %v4865
    %v4872 = vmul.f32 %v4852, %v4867
    %v4873 = vmul.f32 %v4853, %v4869
    %v4874 = vsub.f32 1.0, %v4870
    %v4875 = vsub.f32 1.0, %v4871
    %v4876 = vsub.f32 1.0, %v4872
    %v4877 = vsub.f32 1.0, %v4873
    %v4878 = vmul.f32 %v4798, %v4874
    %v4879 = vmul.f32 %v4799, %v4875
    %v4880 = vmul.f32 %v4800, %v4876
    %v4881 = vmul.f32 %v4801, %v4877
    %v4882 = vadd.f32 %v4878, 1.0
    %v4883 = vadd.f32 %v4879, 1.0
    %v4884 = vadd.f32 %v4880, 1.0
    %v4885 = vadd.f32 %v4881, 1.0
    %v4886 = vmul.f32 %v4786, %v4882
    %v4887 = vmul.f32 %v4787, %v4883
    %v4888 = vmul.f32 %v4788, %v4884
    %v4889 = vmul.f32 %v4789, %v4885
    %s4890 = scalar_lea.vmem %s16, 64
    %v4891 = vld [vmem:[%s4890] sm:$0xff]
    %v4892 = vld [vmem:[%s4890 + $0x8] sm:$0xff]
    %v4893 = vld [vmem:[%s4890 + $0x10] sm:$0xff]
    %v4894 = vld [vmem:[%s4890 + $0x18] sm:$0xff]
    %v4895 = vld [vmem:[%s4890 + $0x20] sm:$0xff]
    %v4896 = vld [vmem:[%s4890 + $0x28] sm:$0xff]
    %v4897 = vld [vmem:[%s4890 + $0x30] sm:$0xff]
    %v4898 = vld [vmem:[%s4890 + $0x38] sm:$0xff]
    %v4900 = vsel %vm2519, %v4886, 0
    %v4903 = vsel %vm2519, %v4887, 0
    %v4906 = vsel %vm2519, %v4888, 0
    %v4909 = vsel %vm2519, %v4889, 0
    %4911 = vmatprep.subr.mxu0 0.0
    %4912 = vmatpush1.msra.mxu0 %v4891
    %4913 = vmatprep.subr.mxu0 0.0
    %4914 = vmatpush1.msra.mxu0 %v4892
    %4915 = vmatprep.subr.mxu0 0.0
    %4916 = vmatpush1.msra.mxu0 %v4893
    %4917 = vmatprep.subr.mxu0 0.0
    %4918 = vmatpush1.msra.mxu0 %v4894
    %4919 = vmatprep.subr.mxu0 0.0
    %4920 = vmatpush1.msra.mxu0 %v4895
    %4921 = vmatprep.subr.mxu0 0.0
    %4922 = vmatpush1.msra.mxu0 %v4896
    %4923 = vmatprep.subr.mxu0 0.0
    %4924 = vmatpush1.msra.mxu0 %v4897
    %4925 = vmatprep.subr.mxu0 0.0
    %4926 = vmatpush1.msra.mxu0 %v4898
    %4927 = vmatprep.subr.mxu0 0.0
    %4928 = vmatpush1.msra.mxu0 0.0
    %4929 = vmatprep.subr.mxu0 0.0
    %4930 = vmatpush1.msra.mxu0 0.0
    %4931 = vmatprep.subr.mxu0 0.0
    %4932 = vmatpush1.msra.mxu0 0.0
    %4933 = vmatprep.subr.mxu0 0.0
    %4934 = vmatpush1.msra.mxu0 0.0
    %4935 = vmatprep.subr.mxu0 0.0
    %4936 = vmatpush1.msra.mxu0 0.0
    %4937 = vmatprep.subr.mxu0 0.0
    %4938 = vmatpush1.msra.mxu0 0.0
    %4939 = vmatprep.subr.mxu0 0.0
    %4940 = vmatpush1.msra.mxu0 0.0
    %4941 = vmatprep.subr.mxu0 0.0
    %4942 = vmatpush1.msra.mxu0 0.0
    %4943 = vmatprep.subr.mxu0 0.0
    %4944 = vmatpush1.msra.mxu0 0.0
    %4945 = vmatprep.subr.mxu0 0.0
    %4946 = vmatpush1.msra.mxu0 0.0
    %4947 = vmatprep.subr.mxu0 0.0
    %4948 = vmatpush1.msra.mxu0 0.0
    %4949 = vmatprep.subr.mxu0 0.0
    %4950 = vmatpush1.msra.mxu0 0.0
    %4951 = vmatprep.subr.mxu0 0.0
    %4952 = vmatpush1.msra.mxu0 0.0
    %4953 = vmatprep.subr.mxu0 0.0
    %4954 = vmatpush1.msra.mxu0 0.0
    %4955 = vmatprep.subr.mxu0 0.0
    %4956 = vmatpush1.msra.mxu0 0.0
    %4957 = vmatprep.subr.mxu0 0.0
    %4958 = vmatpush1.msra.mxu0 0.0
    %4959 = vmatprep.subr.mxu0 0.0
    %4960 = vmatpush1.msra.mxu0 0.0
    %4961 = vmatprep.subr.mxu0 0.0
    %4962 = vmatpush1.msra.mxu0 0.0
    %4963 = vmatprep.subr.mxu0 0.0
    %4964 = vmatpush1.msra.mxu0 0.0
    %4965 = vmatprep.subr.mxu0 0.0
    %4966 = vmatpush1.msra.mxu0 0.0
    %4967 = vmatprep.subr.mxu0 0.0
    %4968 = vmatpush1.msra.mxu0 0.0
    %4969 = vmatprep.subr.mxu0 0.0
    %4970 = vmatpush1.msra.mxu0 0.0
    %4971 = vmatprep.subr.mxu0 0.0
    %4972 = vmatpush1.msra.mxu0 0.0
    %4973 = vmatprep.subr.mxu0 0.0
    %4974 = vmatpush1.msra.mxu0 0.0
    %4975 = vmatprep.mubr.f32.mxu0 0.0
    %4976 = vmatmul.mubr.f32.gmra.mrb[0].mxu0 %v4900
    %v4977 = vpop.f32.mrb[0].mxu0
    %v4978 = vadd.f32 0.0, %v4977
    %v4979 = vpop.f32.mrb[0].mxu0
    %4980 = vmatprep.mubr.f32.mxu0 0.0
    %4981 = vmatmul.mubr.f32.gmra.mrb[0].mxu0 %v4903
    %v4982 = vpop.f32.mrb[0].mxu0
    %v4983 = vadd.f32 0.0, %v4982
    %v4984 = vpop.f32.mrb[0].mxu0
    %4985 = vmatprep.mubr.f32.mxu0 0.0
    %4986 = vmatmul.mubr.f32.gmra.mrb[0].mxu0 %v4906
    %v4987 = vpop.f32.mrb[0].mxu0
    %v4988 = vadd.f32 0.0, %v4987
    %v4989 = vpop.f32.mrb[0].mxu0
    %4990 = vmatprep.mubr.f32.mxu0 0.0
    %4991 = vmatmul.mubr.f32.gmra.mrb[0].mxu0 %v4909
    %v4992 = vpop.f32.mrb[0].mxu0
    %v4993 = vadd.f32 0.0, %v4992
    %v4994 = vpop.f32.mrb[0].mxu0
    %4995 = vdwg.mxu0
    %v4996 = vadd.f32 %v4596, %v4978
    %v4997 = vadd.f32 %v4597, %v4983
    %v4998 = vadd.f32 %v4598, %v4988
    %v4999 = vadd.f32 %v4599, %v4993
    %s5000 = scalar_lea.vmem %s17, 1
    %v5001 = vld [vmem:[%s5000] sm:$0x1]
    %v5003 = vlaneseq
    %v5004 = vshrl.u32 %v5003, 7
    %v5005 = vsub.s32 0, %v5004
    %v5006 = vrot.slane %v5001, %v5005
    %v5008 = vadd.f32 %v4996, %v5006
    %v5009 = vadd.f32 %v4997, %v5006
    %v5010 = vadd.f32 %v4998, %v5006
    %v5011 = vadd.f32 %v4999, %v5006
    %v5012 = vld [vmem:[%s22] sm:$0x3]
    %v5014 = vsel %vm277, %v5012, 0
    %5016 = vmatprep.subr.mxu0 0.0
    %5017 = vmatpush1.msra.mxu0 %v5008
    %5018 = vmatprep.subr.mxu0 0.0
    %5019 = vmatpush1.msra.mxu0 %v5009
    %5020 = vmatprep.subr.mxu0 0.0
    %5021 = vmatpush1.msra.mxu0 %v5010
    %5022 = vmatprep.subr.mxu0 0.0
    %5023 = vmatpush1.msra.mxu0 %v5011
    %5024 = vmatprep.subr.mxu0 0.0
    %5025 = vmatpush1.msra.mxu0 0.0
    %5026 = vmatprep.subr.mxu0 0.0
    %5027 = vmatpush1.msra.mxu0 0.0
    %5028 = vmatprep.subr.mxu0 0.0
    %5029 = vmatpush1.msra.mxu0 0.0
    %5030 = vmatprep.subr.mxu0 0.0
    %5031 = vmatpush1.msra.mxu0 0.0
    %5032 = vmatprep.subr.mxu0 0.0
    %5033 = vmatpush1.msra.mxu0 0.0
    %5034 = vmatprep.subr.mxu0 0.0
    %5035 = vmatpush1.msra.mxu0 0.0
    %5036 = vmatprep.subr.mxu0 0.0
    %5037 = vmatpush1.msra.mxu0 0.0
    %5038 = vmatprep.subr.mxu0 0.0
    %5039 = vmatpush1.msra.mxu0 0.0
    %5040 = vmatprep.subr.mxu0 0.0
    %5041 = vmatpush1.msra.mxu0 0.0
    %5042 = vmatprep.subr.mxu0 0.0
    %5043 = vmatpush1.msra.mxu0 0.0
    %5044 = vmatprep.subr.mxu0 0.0
    %5045 = vmatpush1.msra.mxu0 0.0
    %5046 = vmatprep.subr.mxu0 0.0
    %5047 = vmatpush1.msra.mxu0 0.0
    %5048 = vmatprep.subr.mxu0 0.0
    %5049 = vmatpush1.msra.mxu0 0.0
    %5050 = vmatprep.subr.mxu0 0.0
    %5051 = vmatpush1.msra.mxu0 0.0
    %5052 = vmatprep.subr.mxu0 0.0
    %5053 = vmatpush1.msra.mxu0 0.0
    %5054 = vmatprep.subr.mxu0 0.0
    %5055 = vmatpush1.msra.mxu0 0.0
    %5056 = vmatprep.subr.mxu0 0.0
    %5057 = vmatpush1.msra.mxu0 0.0
    %5058 = vmatprep.subr.mxu0 0.0
    %5059 = vmatpush1.msra.mxu0 0.0
    %5060 = vmatprep.subr.mxu0 0.0
    %5061 = vmatpush1.msra.mxu0 0.0
    %5062 = vmatprep.subr.mxu0 0.0
    %5063 = vmatpush1.msra.mxu0 0.0
    %5064 = vmatprep.subr.mxu0 0.0
    %5065 = vmatpush1.msra.mxu0 0.0
    %5066 = vmatprep.subr.mxu0 0.0
    %5067 = vmatpush1.msra.mxu0 0.0
    %5068 = vmatprep.subr.mxu0 0.0
    %5069 = vmatpush1.msra.mxu0 0.0
    %5070 = vmatprep.subr.mxu0 0.0
    %5071 = vmatpush1.msra.mxu0 0.0
    %5072 = vmatprep.subr.mxu0 0.0
    %5073 = vmatpush1.msra.mxu0 0.0
    %5074 = vmatprep.subr.mxu0 0.0
    %5075 = vmatpush1.msra.mxu0 0.0
    %5076 = vmatprep.subr.mxu0 0.0
    %5077 = vmatpush1.msra.mxu0 0.0
    %5078 = vmatprep.subr.mxu0 0.0
    %5079 = vmatpush1.msra.mxu0 0.0
    %5080 = vmatprep.mubr.f32.mxu0 0.0
    %5081 = vmatmul.mubr.f32.gmra.mrb[0].mxu0 %v5014
    %v5082 = vpop.f32.mrb[0].mxu0
    %v5083 = vadd.f32 0.0, %v5082
    %v5084 = vpop.f32.mrb[0].mxu0
    %5085 = vdwg.mxu0
    %v5086 = vld [vmem:[%s18] sm:$0x1]
    %v5087 = vld [vmem:[%s19] sm:$0x1]
    %vm5088 = vcmask 254976
    %v5089 = vsel %vm5088, %v5083, 0.0
    %5090 = vadd.xlane.f32.xlu0 %v5089
    %v5091 = vpop.xlane.xlu0 %5090
    %v5092 = vmul.f32 %v5091, %v287
    %v5093 = vsub.f32 %v5083, %v5092
    %v5094 = vmul.f32 %v5093, %v5093
    %v5095 = vsel %vm5088, %v5094, 0.0
    %5096 = vadd.xlane.f32.xlu0 %v5095
    %v5097 = vpop.xlane.xlu0 %5096
    %v5098 = vmul.f32 %v5097, %v287
    %v5099 = vadd.f32 %v5098, 1e-05
    %v5100 = vrsqrt.pop %v5099
    %v5101 = vmul.f32 %v5093, %v5100
    %v5103 = vlaneseq
    %v5104 = vshrl.u32 %v5103, 7
    %v5105 = vsub.s32 0, %v5104
    %v5106 = vrot.slane %v5086, %v5105
    %v5108 = vmul.f32 %v5101, %v5106
    %v5110 = vlaneseq
    %v5111 = vshrl.u32 %v5110, 7
    %v5112 = vsub.s32 0, %v5111
    %v5113 = vrot.slane %v5087, %v5112
    %v5115 = vadd.f32 %v5108, %v5113
    %v5116 = vld [vmem:[%s20] sm:$0xff]
    %v5117 = vld [vmem:[%s20 + $0x8] sm:$0xff]
    %v5118 = vld [vmem:[%s20 + $0x10] sm:$0xff]
    %v5119 = vld [vmem:[%s20 + $0x18] sm:$0xff]
    %v5120 = vld [vmem:[%s21] sm:$0x1]
    %v5122 = vlaneseq
    %v5123 = vshrl.u32 %v5122, 7
    %v5124 = vsub.s32 0, %v5123
    %v5125 = vrot.slane %v5120, %v5124
    %v5128 = vsel %vm277, %v5115, 0
    %5130 = vmatprep.subr.mxu0 0.0
    %5131 = vmatpush1.msra.mxu0 %v5116
    %5132 = vmatprep.subr.mxu0 0.0
    %5133 = vmatpush1.msra.mxu0 %v5117
    %5134 = vmatprep.subr.mxu0 0.0
    %5135 = vmatpush1.msra.mxu0 %v5118
    %5136 = vmatprep.subr.mxu0 0.0
    %5137 = vmatpush1.msra.mxu0 %v5119
    %5138 = vmatprep.subr.mxu0 0.0
    %5139 = vmatpush1.msra.mxu0 0.0
    %5140 = vmatprep.subr.mxu0 0.0
    %5141 = vmatpush1.msra.mxu0 0.0
    %5142 = vmatprep.subr.mxu0 0.0
    %5143 = vmatpush1.msra.mxu0 0.0
    %5144 = vmatprep.subr.mxu0 0.0
    %5145 = vmatpush1.msra.mxu0 0.0
    %5146 = vmatprep.subr.mxu0 0.0
    %5147 = vmatpush1.msra.mxu0 0.0
    %5148 = vmatprep.subr.mxu0 0.0
    %5149 = vmatpush1.msra.mxu0 0.0
    %5150 = vmatprep.subr.mxu0 0.0
    %5151 = vmatpush1.msra.mxu0 0.0
    %5152 = vmatprep.subr.mxu0 0.0
    %5153 = vmatpush1.msra.mxu0 0.0
    %5154 = vmatprep.subr.mxu0 0.0
    %5155 = vmatpush1.msra.mxu0 0.0
    %5156 = vmatprep.subr.mxu0 0.0
    %5157 = vmatpush1.msra.mxu0 0.0
    %5158 = vmatprep.subr.mxu0 0.0
    %5159 = vmatpush1.msra.mxu0 0.0
    %5160 = vmatprep.subr.mxu0 0.0
    %5161 = vmatpush1.msra.mxu0 0.0
    %5162 = vmatprep.subr.mxu0 0.0
    %5163 = vmatpush1.msra.mxu0 0.0
    %5164 = vmatprep.subr.mxu0 0.0
    %5165 = vmatpush1.msra.mxu0 0.0
    %5166 = vmatprep.subr.mxu0 0.0
    %5167 = vmatpush1.msra.mxu0 0.0
    %5168 = vmatprep.subr.mxu0 0.0
    %5169 = vmatpush1.msra.mxu0 0.0
    %5170 = vmatprep.subr.mxu0 0.0
    %5171 = vmatpush1.msra.mxu0 0.0
    %5172 = vmatprep.subr.mxu0 0.0
    %5173 = vmatpush1.msra.mxu0 0.0
    %5174 = vmatprep.subr.mxu0 0.0
    %5175 = vmatpush1.msra.mxu0 0.0
    %5176 = vmatprep.subr.mxu0 0.0
    %5177 = vmatpush1.msra.mxu0 0.0
    %5178 = vmatprep.subr.mxu0 0.0
    %5179 = vmatpush1.msra.mxu0 0.0
    %5180 = vmatprep.subr.mxu0 0.0
    %5181 = vmatpush1.msra.mxu0 0.0
    %5182 = vmatprep.subr.mxu0 0.0
    %5183 = vmatpush1.msra.mxu0 0.0
    %5184 = vmatprep.subr.mxu0 0.0
    %5185 = vmatpush1.msra.mxu0 0.0
    %5186 = vmatprep.subr.mxu0 0.0
    %5187 = vmatpush1.msra.mxu0 0.0
    %5188 = vmatprep.subr.mxu0 0.0
    %5189 = vmatpush1.msra.mxu0 0.0
    %5190 = vmatprep.subr.mxu0 0.0
    %5191 = vmatpush1.msra.mxu0 0.0
    %5192 = vmatprep.subr.mxu0 0.0
    %5193 = vmatpush1.msra.mxu0 0.0
    %5194 = vmatprep.mubr.f32.mxu0 0.0
    %5195 = vmatmul.mubr.f32.gmra.mrb[0].mxu0 %v5128
    %v5196 = vpop.f32.mrb[0].mxu0
    %v5197 = vadd.f32 %v5125, %v5196
    %v5198 = vpop.f32.mrb[0].mxu0
    %5199 = vdwg.mxu0
    %vm5200 = vcmask 123904
    %5201 = vst.msk [vmem:[#allocation2] sm:$0x3] %vm5200, %v5197
    // Predicated region
    $region94: #{fvit_forward.1} parent=1 // pred_check
      _
    $region95: #{fvit_forward.1} parent=1 // pred_check_branch
      %5203 = sbr.rel (0) target = $region97
    $region96: #{fvit_forward.1} parent=1 // pred_region
      %s5205 = ssub.s32 32, 32
      %5206 = vsyncadd [#allocation3], %s5205
      %s5208 = sshll.u32 [#allocation2], 4
      %s5209 = int_to_ptr.vmem [resolvable:$true] %s5208
      %5211 = dma.vmem_to_hbm [thread:$0]  %s5209, 32, %s23, [#allocation3]
    $region97: #{fvit_forward.1} parent=1 // pred_fallthru
      _
    // Predicated region
    $region98: #{fvit_forward.1} parent=1 // pred_check
      _
    $region99: #{fvit_forward.1} parent=1 // pred_check_branch
      %5213 = sbr.rel (0) target = $region101
    $region100: #{fvit_forward.1} parent=1 // pred_region
      %5214 = dma.done [#allocation3], 32
    $region101: #{fvit_forward.1} parent=1 // pred_fallthru
      _
    %5215 = vsyncpa [#allocation3], 1

</llo_original>
